<compile_context>
chip_gen: v7x
topology: tpu7x:2x2x1
jax: 0.10.0
libtpu: 0.0.40
codegen_flags: <defaults>
</compile_context>

<pallas_src>
import functools

import jax
import jax.numpy as jnp
from jax import lax
from jax.experimental import pallas as pl
from jax.experimental.pallas import tpu as pltpu

# ---- small, self-consistent hyperparameters (mirroring the module structure) ----
VOCAB = 65           # vocab_size (synthetic)
N_EMBD = 32          # n_embd
N_HEAD = 4           # n_head
HEAD_SIZE = N_EMBD // N_HEAD
CTX = 16             # context_length
N_LAYER = 2          # n_layer
LN_EPS = 1e-5
LM_PAD = 128         # lm_head lane padding (65 -> 128) for lane-dense stores


# ----------------------------- in-kernel helpers -----------------------------
def _layernorm(x, g, b):
    """nn.LayerNorm over the last axis (biased variance, eps inside rsqrt), f32."""
    mu = jnp.mean(x, axis=-1, keepdims=True)
    var = jnp.mean((x - mu) ** 2, axis=-1, keepdims=True)
    return (x - mu) * lax.rsqrt(var + LN_EPS) * g + b


def _mxu(a, b):
    """Weight matmul: bf16 operands, f32 accumulation."""
    return jnp.dot(a.astype(jnp.bfloat16), b.astype(jnp.bfloat16),
                   preferred_element_type=jnp.float32)


# --------------------------------- the kernel --------------------------------
def fused_forward_kernel(x_ref,
                         ln1g_ref, ln1b_ref, wqkv_ref, wproj_ref, bproj_ref,
                         ln2g_ref, ln2b_ref, w1_ref, b1_ref, w2_ref, b2_ref,
                         wlm_ref, blm_ref,
                         out_ref, *, batch, seq):
    x = x_ref[...]                                   # (B*T, C) f32, tok+pos already added

    # causal mask built (and broadcast) once, reused by every layer / head
    row = lax.broadcasted_iota(jnp.int32, (seq, seq), 0)
    col = lax.broadcasted_iota(jnp.int32, (seq, seq), 1)
    causal = jnp.broadcast_to((col <= row)[None], (batch, seq, seq))
    neg_big = jnp.float32(-1e30)     # finite stand-in for -inf (robust)

    for l in range(N_LAYER):         # static unroll; x stays resident in VMEM/vregs
        # ---------------- multi-head self-attention sublayer ----------------
        xn = _layernorm(x, ln1g_ref[l], ln1b_ref[l])
        qkv = _mxu(xn, wqkv_ref[l])              # (B*T, 3C); Wq pre-scaled by n_embd**-0.5
        wproj_l = wproj_ref[l]                   # (H, hs, C) bf16
        attn = jnp.zeros((batch * seq, N_EMBD), jnp.float32)
        for h in range(N_HEAD):                  # static unroll over heads only; batched over B
            c0 = h * HEAD_SIZE
            # per-head lane slices; leading-dim reshape (B*T -> B, T) is free
            qh = qkv[:, c0:c0 + HEAD_SIZE].reshape(batch, seq, HEAD_SIZE)
            kh = qkv[:, N_EMBD + c0:N_EMBD + c0 + HEAD_SIZE].reshape(batch, seq, HEAD_SIZE)
            vh = qkv[:, 2 * N_EMBD + c0:2 * N_EMBD + c0 + HEAD_SIZE].reshape(batch, seq, HEAD_SIZE)
            # attention-internal dots stay f32 (MXU idle at these shapes; avoids pack work)
            wei = jnp.einsum('bqd,bkd->bqk', qh, kh,
                             preferred_element_type=jnp.float32)        # (B, T, T)
            wei = jnp.where(causal, wei, neg_big)
            wei = wei - jnp.max(wei, axis=-1, keepdims=True)
            p = jnp.exp(wei)
            p = p * pl.reciprocal(jnp.sum(p, axis=-1, keepdims=True), approx=True)
            oh = jnp.einsum('bqk,bkd->bqd', p, vh,
                            preferred_element_type=jnp.float32)         # (B, T, hs)
            # accumulate through this head's (hs, C) slab of the output projection:
            # no lane-axis head concat is ever materialized.
            attn = attn + _mxu(oh.reshape(batch * seq, HEAD_SIZE), wproj_l[h])
        x = x + attn + bproj_ref[l]

        # ------------------------ feed-forward sublayer ----------------------
        xn2 = _layernorm(x, ln2g_ref[l], ln2b_ref[l])
        h1 = jnp.maximum(_mxu(xn2, w1_ref[l]) + b1_ref[l], 0.0)
        x = x + _mxu(h1, w2_ref[l]) + b2_ref[l]

    # ---- lm_head (reference forward applies NO final LayerNorm) ----
    out_ref[...] = _mxu(x, wlm_ref[...]) + blm_ref[...]    # (B*T, 128) lane-dense store


# ------------------------------ params & wrapper ------------------------------
def init_params(key):
    """Deterministic synthetic parameters; linear weights stored as (in, out)."""
    def nrm(k, shape, scale=0.02):
        return (scale * jax.random.normal(k, shape)).astype(jnp.float32)

    keys = iter(jax.random.split(key, 3 + 6 * N_LAYER))
    tok_emb = nrm(next(keys), (VOCAB, N_EMBD))
    pos_emb = nrm(next(keys), (CTX, N_EMBD))

    ln1_g, ln1_b, ln2_g, ln2_b = [], [], [], []
    wqkv, wproj, bproj = [], [], []
    w1, b1, w2, b2 = [], [], [], []
    scale = N_EMBD ** (-0.5)   # reference scales scores by C**-0.5 with C = n_embd
    for _ in range(N_LAYER):
        wq = nrm(next(keys), (N_EMBD, N_EMBD)) * scale     # fold scale into Wq
        wk = nrm(next(keys), (N_EMBD, N_EMBD))
        wv = nrm(next(keys), (N_EMBD, N_EMBD))
        wqkv.append(jnp.concatenate([wq, wk, wv], axis=1))                     # (C, 3C)
        wproj.append(nrm(next(keys), (N_EMBD, N_EMBD))
                     .reshape(N_HEAD, HEAD_SIZE, N_EMBD))                      # (H, hs, C)
        bproj.append(jnp.zeros((1, N_EMBD), jnp.float32))
        ln1_g.append(jnp.ones((1, N_EMBD), jnp.float32))
        ln1_b.append(jnp.zeros((1, N_EMBD), jnp.float32))
        ln2_g.append(jnp.ones((1, N_EMBD), jnp.float32))
        ln2_b.append(jnp.zeros((1, N_EMBD), jnp.float32))
        w1.append(nrm(next(keys), (N_EMBD, 4 * N_EMBD)))
        b1.append(jnp.zeros((1, 4 * N_EMBD), jnp.float32))
        w2.append(nrm(next(keys), (4 * N_EMBD, N_EMBD)))
        b2.append(jnp.zeros((1, N_EMBD), jnp.float32))

    w_lm = nrm(next(keys), (N_EMBD, VOCAB))
    b_lm = jnp.zeros((VOCAB,), jnp.float32)
    # lane-pad lm_head 65 -> 128 so the kernel's output stores are unmasked
    w_lm_pad = jnp.zeros((N_EMBD, LM_PAD), jnp.float32).at[:, :VOCAB].set(w_lm)
    b_lm_pad = jnp.zeros((1, LM_PAD), jnp.float32).at[0, :VOCAB].set(b_lm)

    bf16 = jnp.bfloat16
    return {
        "tok_emb": tok_emb, "pos_emb": pos_emb,
        "ln1_g": jnp.stack(ln1_g), "ln1_b": jnp.stack(ln1_b),
        "ln2_g": jnp.stack(ln2_g), "ln2_b": jnp.stack(ln2_b),
        "wqkv": jnp.stack(wqkv).astype(bf16),
        "wproj": jnp.stack(wproj).astype(bf16),
        "bproj": jnp.stack(bproj),
        "w1": jnp.stack(w1).astype(bf16), "b1": jnp.stack(b1),
        "w2": jnp.stack(w2).astype(bf16), "b2": jnp.stack(b2),
        "w_lm": w_lm_pad.astype(bf16), "b_lm": b_lm_pad,
    }


_N_KERNEL_INPUTS = 14


def _bigram_lm_forward(idx, params):
    """idx: (B, T) int32 token ids.  Returns logits (B, T, VOCAB).
    (targets=None path of the reference -> loss is None; logits only here.)"""
    B, T = idx.shape
    # token-embedding gather + positional add stay in the wrapper: the add
    # fuses into the gather HLO for free and removes an in-kernel copy.
    tok = params["tok_emb"][idx]                       # (B, T, C)
    x0 = (tok + params["pos_emb"][:T]).reshape(B * T, N_EMBD)

    kernel = functools.partial(fused_forward_kernel, batch=B, seq=T)
    vmem = lambda: pl.BlockSpec(memory_space=pltpu.MemorySpace.VMEM)
    logits_pad = pl.pallas_call(
        kernel,
        out_shape=jax.ShapeDtypeStruct((B * T, LM_PAD), jnp.float32),
        in_specs=[vmem() for _ in range(_N_KERNEL_INPUTS)],
        out_specs=vmem(),
    )(x0,
      params["ln1_g"], params["ln1_b"], params["wqkv"], params["wproj"], params["bproj"],
      params["ln2_g"], params["ln2_b"], params["w1"], params["b1"],
      params["w2"], params["b2"], params["w_lm"], params["b_lm"])
    return logits_pad[:, :VOCAB].reshape(B, T, VOCAB)


bigram_lm_forward = jax.jit(_bigram_lm_forward)


if __name__ == "__main__":
    key = jax.random.PRNGKey(0)
    pkey, ikey = jax.random.split(key)
    params = init_params(pkey)

    B, T = 2, CTX
    idx = jax.random.randint(ikey, (B, T), 0, VOCAB, dtype=jnp.int32)

    logits = bigram_lm_forward(idx, params)
    jax.block_until_ready(logits)
    assert logits.shape == (B, T, VOCAB)
    assert bool(jnp.all(jnp.isfinite(logits)))
    print("KERNEL_OK")
</pallas_src>

<mosaic_0001>
module attributes {stable_mosaic.version = 11 : i64} {
  func.func @fused_forward_kernel(%arg0: memref<32x32xf32, #tpu.memory_space<vmem>>, %arg1: memref<2x1x32xf32, #tpu.memory_space<vmem>>, %arg2: memref<2x1x32xf32, #tpu.memory_space<vmem>>, %arg3: memref<2x32x96xbf16, #tpu.memory_space<vmem>>, %arg4: memref<2x4x8x32xbf16, #tpu.memory_space<vmem>>, %arg5: memref<2x1x32xf32, #tpu.memory_space<vmem>>, %arg6: memref<2x1x32xf32, #tpu.memory_space<vmem>>, %arg7: memref<2x1x32xf32, #tpu.memory_space<vmem>>, %arg8: memref<2x32x128xbf16, #tpu.memory_space<vmem>>, %arg9: memref<2x1x128xf32, #tpu.memory_space<vmem>>, %arg10: memref<2x128x32xbf16, #tpu.memory_space<vmem>>, %arg11: memref<2x1x32xf32, #tpu.memory_space<vmem>>, %arg12: memref<32x128xbf16, #tpu.memory_space<vmem>>, %arg13: memref<1x128xf32, #tpu.memory_space<vmem>>, %arg14: memref<32x128xf32, #tpu.memory_space<vmem>>) attributes {dimension_semantics = [], scalar_prefetch = 0 : i64, scratch_operands = 0 : i64, tpu.core_type = #tpu.core_type<tc>} {
    %c0 = arith.constant 0 : index
    %c0_0 = arith.constant 0 : index
    %0 = vector.load %arg0[%c0, %c0_0] : memref<32x32xf32, #tpu.memory_space<vmem>>, vector<32x32xf32>
    %1 = tpu.iota {dimensions = array<i32: 0>} : vector<16x16xi32>
    %2 = tpu.iota {dimensions = array<i32: 1>} : vector<16x16xi32>
    %3 = arith.cmpi sle, %2, %1 : vector<16x16xi32>
    %4 = vector.shape_cast %3 : vector<16x16xi1> to vector<1x16x16xi1>
    %5 = vector.shape_cast %4 : vector<1x16x16xi1> to vector<1x16x16xi1>
    %6 = vector.broadcast %5 : vector<1x16x16xi1> to vector<2x16x16xi1>
    %c0_1 = arith.constant 0 : index
    %c0_2 = arith.constant 0 : index
    %c0_3 = arith.constant 0 : index
    %7 = vector.load %arg1[%c0_1, %c0_2, %c0_3] : memref<2x1x32xf32, #tpu.memory_space<vmem>>, vector<1x1x32xf32>
    %8 = vector.shape_cast %7 : vector<1x1x32xf32> to vector<1x32xf32>
    %c0_4 = arith.constant 0 : index
    %c0_5 = arith.constant 0 : index
    %c0_6 = arith.constant 0 : index
    %9 = vector.load %arg2[%c0_4, %c0_5, %c0_6] : memref<2x1x32xf32, #tpu.memory_space<vmem>>, vector<1x1x32xf32>
    %10 = vector.shape_cast %9 : vector<1x1x32xf32> to vector<1x32xf32>
    %cst = arith.constant dense<0.000000e+00> : vector<32xf32>
    %11 = vector.multi_reduction <add>, %0, %cst [1] : vector<32x32xf32> to vector<32xf32>
    %12 = vector.shape_cast %11 : vector<32xf32> to vector<32x1xf32>
    %cst_7 = arith.constant 3.200000e+01 : f32
    %13 = vector.broadcast %cst_7 : f32 to vector<32x1xf32>
    %14 = arith.divf %12, %13 : vector<32x1xf32>
    %15 = vector.broadcast %14 : vector<32x1xf32> to vector<32x32xf32>
    %16 = arith.subf %0, %15 : vector<32x32xf32>
    %17 = arith.mulf %16, %16 : vector<32x32xf32>
    %cst_8 = arith.constant dense<0.000000e+00> : vector<32xf32>
    %18 = vector.multi_reduction <add>, %17, %cst_8 [1] : vector<32x32xf32> to vector<32xf32>
    %19 = vector.shape_cast %18 : vector<32xf32> to vector<32x1xf32>
    %cst_9 = arith.constant 3.200000e+01 : f32
    %20 = vector.broadcast %cst_9 : f32 to vector<32x1xf32>
    %21 = arith.divf %19, %20 : vector<32x1xf32>
    %22 = vector.broadcast %14 : vector<32x1xf32> to vector<32x32xf32>
    %23 = arith.subf %0, %22 : vector<32x32xf32>
    %cst_10 = arith.constant 9.99999974E-6 : f32
    %24 = vector.broadcast %cst_10 : f32 to vector<32x1xf32>
    %25 = arith.addf %21, %24 : vector<32x1xf32>
    %26 = math.rsqrt %25 : vector<32x1xf32>
    %27 = vector.broadcast %26 : vector<32x1xf32> to vector<32x32xf32>
    %28 = arith.mulf %23, %27 : vector<32x32xf32>
    %29 = vector.broadcast %8 : vector<1x32xf32> to vector<32x32xf32>
    %30 = arith.mulf %28, %29 : vector<32x32xf32>
    %31 = vector.broadcast %10 : vector<1x32xf32> to vector<32x32xf32>
    %32 = arith.addf %30, %31 : vector<32x32xf32>
    %c0_11 = arith.constant 0 : index
    %c0_12 = arith.constant 0 : index
    %c0_13 = arith.constant 0 : index
    %33 = vector.load %arg3[%c0_11, %c0_12, %c0_13] : memref<2x32x96xbf16, #tpu.memory_space<vmem>>, vector<1x32x96xbf16>
    %34 = vector.shape_cast %33 : vector<1x32x96xbf16> to vector<32x96xbf16>
    %35 = arith.truncf %32 : vector<32x32xf32> to vector<32x32xbf16>
    %cst_14 = arith.constant dense<0.000000e+00> : vector<32x96xf32>
    %36 = tpu.matmul %35, %34, %cst_14 {dimension_numbers = #tpu.dot_dimension_numbers<[1], [0], [0], [1], [0, 0, 1, 1], [], []>} : vector<32x32xbf16>, vector<32x96xbf16>, vector<32x96xf32> -> vector<32x96xf32>
    %c0_15 = arith.constant 0 : index
    %c0_16 = arith.constant 0 : index
    %c0_17 = arith.constant 0 : index
    %c0_18 = arith.constant 0 : index
    %37 = vector.load %arg4[%c0_15, %c0_16, %c0_17, %c0_18] : memref<2x4x8x32xbf16, #tpu.memory_space<vmem>>, vector<1x4x8x32xbf16>
    %38 = vector.shape_cast %37 : vector<1x4x8x32xbf16> to vector<4x8x32xbf16>
    %cst_19 = arith.constant 0.000000e+00 : f32
    %39 = vector.broadcast %cst_19 : f32 to vector<32x32xf32>
    %40 = vector.extract_strided_slice %36 {offsets = [0, 0], sizes = [32, 8], strides = [1, 1]} : vector<32x96xf32> to vector<32x8xf32>
    %41 = vector.shape_cast %40 : vector<32x8xf32> to vector<2x16x8xf32>
    %42 = vector.extract_strided_slice %36 {offsets = [0, 32], sizes = [32, 8], strides = [1, 1]} : vector<32x96xf32> to vector<32x8xf32>
    %43 = vector.shape_cast %42 : vector<32x8xf32> to vector<2x16x8xf32>
    %44 = vector.extract_strided_slice %36 {offsets = [0, 64], sizes = [32, 8], strides = [1, 1]} : vector<32x96xf32> to vector<32x8xf32>
    %45 = vector.shape_cast %44 : vector<32x8xf32> to vector<2x16x8xf32>
    "tpu.trace_start"() <{level = 10 : i32, message = "bqd,bkd->bqk"}> : () -> ()
    %cst_20 = arith.constant dense<0.000000e+00> : vector<2x16x16xf32>
    %46 = tpu.matmul %41, %43, %cst_20 {dimension_numbers = #tpu.dot_dimension_numbers<[2], [2], [1], [1], [0, 0, 0, 1, 1, 1], [0], [0]>} : vector<2x16x8xf32>, vector<2x16x8xf32>, vector<2x16x16xf32> -> vector<2x16x16xf32>
    %cst_21 = arith.constant -1.000000e+30 : f32
    "tpu.trace_stop"() : () -> ()
    %47 = vector.broadcast %cst_21 : f32 to vector<2x16x16xf32>
    %48 = arith.select %6, %46, %47 : vector<2x16x16xi1>, vector<2x16x16xf32>
    %cst_22 = arith.constant dense<0xFF800000> : vector<2x16xf32>
    %49 = vector.multi_reduction <maximumf>, %48, %cst_22 [2] : vector<2x16x16xf32> to vector<2x16xf32>
    %50 = vector.shape_cast %49 : vector<2x16xf32> to vector<2x16x1xf32>
    %51 = vector.broadcast %50 : vector<2x16x1xf32> to vector<2x16x16xf32>
    %52 = arith.subf %48, %51 : vector<2x16x16xf32>
    %53 = math.exp %52 : vector<2x16x16xf32>
    %cst_23 = arith.constant dense<0.000000e+00> : vector<2x16xf32>
    %54 = vector.multi_reduction <add>, %53, %cst_23 [2] : vector<2x16x16xf32> to vector<2x16xf32>
    %55 = vector.shape_cast %54 : vector<2x16xf32> to vector<2x16x1xf32>
    %56 = tpu.reciprocal %55 {approx = true} : vector<2x16x1xf32> -> vector<2x16x1xf32>
    %57 = vector.broadcast %56 : vector<2x16x1xf32> to vector<2x16x16xf32>
    %58 = arith.mulf %53, %57 : vector<2x16x16xf32>
    "tpu.trace_start"() <{level = 10 : i32, message = "bqk,bkd->bqd"}> : () -> ()
    %cst_24 = arith.constant dense<0.000000e+00> : vector<2x16x8xf32>
    %59 = tpu.matmul %58, %45, %cst_24 {dimension_numbers = #tpu.dot_dimension_numbers<[2], [1], [1], [2], [0, 0, 0, 1, 1, 2], [0], [0]>} : vector<2x16x16xf32>, vector<2x16x8xf32>, vector<2x16x8xf32> -> vector<2x16x8xf32>
    "tpu.trace_stop"() : () -> ()
    %60 = vector.shape_cast %59 : vector<2x16x8xf32> to vector<32x8xf32>
    %61 = vector.extract_strided_slice %38 {offsets = [0, 0, 0], sizes = [1, 8, 32], strides = [1, 1, 1]} : vector<4x8x32xbf16> to vector<1x8x32xbf16>
    %62 = vector.shape_cast %61 : vector<1x8x32xbf16> to vector<8x32xbf16>
    %63 = arith.truncf %60 : vector<32x8xf32> to vector<32x8xbf16>
    %cst_25 = arith.constant dense<0.000000e+00> : vector<32x32xf32>
    %64 = tpu.matmul %63, %62, %cst_25 {dimension_numbers = #tpu.dot_dimension_numbers<[1], [0], [0], [1], [0, 0, 1, 1], [], []>} : vector<32x8xbf16>, vector<8x32xbf16>, vector<32x32xf32> -> vector<32x32xf32>
    %65 = arith.addf %39, %64 : vector<32x32xf32>
    %66 = vector.extract_strided_slice %36 {offsets = [0, 8], sizes = [32, 8], strides = [1, 1]} : vector<32x96xf32> to vector<32x8xf32>
    %67 = vector.shape_cast %66 : vector<32x8xf32> to vector<2x16x8xf32>
    %68 = vector.extract_strided_slice %36 {offsets = [0, 40], sizes = [32, 8], strides = [1, 1]} : vector<32x96xf32> to vector<32x8xf32>
    %69 = vector.shape_cast %68 : vector<32x8xf32> to vector<2x16x8xf32>
    %70 = vector.extract_strided_slice %36 {offsets = [0, 72], sizes = [32, 8], strides = [1, 1]} : vector<32x96xf32> to vector<32x8xf32>
    %71 = vector.shape_cast %70 : vector<32x8xf32> to vector<2x16x8xf32>
    "tpu.trace_start"() <{level = 10 : i32, message = "bqd,bkd->bqk"}> : () -> ()
    %cst_26 = arith.constant dense<0.000000e+00> : vector<2x16x16xf32>
    %72 = tpu.matmul %67, %69, %cst_26 {dimension_numbers = #tpu.dot_dimension_numbers<[2], [2], [1], [1], [0, 0, 0, 1, 1, 1], [0], [0]>} : vector<2x16x8xf32>, vector<2x16x8xf32>, vector<2x16x16xf32> -> vector<2x16x16xf32>
    %cst_27 = arith.constant -1.000000e+30 : f32
    "tpu.trace_stop"() : () -> ()
    %73 = vector.broadcast %cst_27 : f32 to vector<2x16x16xf32>
    %74 = arith.select %6, %72, %73 : vector<2x16x16xi1>, vector<2x16x16xf32>
    %cst_28 = arith.constant dense<0xFF800000> : vector<2x16xf32>
    %75 = vector.multi_reduction <maximumf>, %74, %cst_28 [2] : vector<2x16x16xf32> to vector<2x16xf32>
    %76 = vector.shape_cast %75 : vector<2x16xf32> to vector<2x16x1xf32>
    %77 = vector.broadcast %76 : vector<2x16x1xf32> to vector<2x16x16xf32>
    %78 = arith.subf %74, %77 : vector<2x16x16xf32>
    %79 = math.exp %78 : vector<2x16x16xf32>
    %cst_29 = arith.constant dense<0.000000e+00> : vector<2x16xf32>
    %80 = vector.multi_reduction <add>, %79, %cst_29 [2] : vector<2x16x16xf32> to vector<2x16xf32>
    %81 = vector.shape_cast %80 : vector<2x16xf32> to vector<2x16x1xf32>
    %82 = tpu.reciprocal %81 {approx = true} : vector<2x16x1xf32> -> vector<2x16x1xf32>
    %83 = vector.broadcast %82 : vector<2x16x1xf32> to vector<2x16x16xf32>
    %84 = arith.mulf %79, %83 : vector<2x16x16xf32>
    "tpu.trace_start"() <{level = 10 : i32, message = "bqk,bkd->bqd"}> : () -> ()
    %cst_30 = arith.constant dense<0.000000e+00> : vector<2x16x8xf32>
    %85 = tpu.matmul %84, %71, %cst_30 {dimension_numbers = #tpu.dot_dimension_numbers<[2], [1], [1], [2], [0, 0, 0, 1, 1, 2], [0], [0]>} : vector<2x16x16xf32>, vector<2x16x8xf32>, vector<2x16x8xf32> -> vector<2x16x8xf32>
    "tpu.trace_stop"() : () -> ()
    %86 = vector.shape_cast %85 : vector<2x16x8xf32> to vector<32x8xf32>
    %87 = vector.extract_strided_slice %38 {offsets = [1, 0, 0], sizes = [1, 8, 32], strides = [1, 1, 1]} : vector<4x8x32xbf16> to vector<1x8x32xbf16>
    %88 = vector.shape_cast %87 : vector<1x8x32xbf16> to vector<8x32xbf16>
    %89 = arith.truncf %86 : vector<32x8xf32> to vector<32x8xbf16>
    %cst_31 = arith.constant dense<0.000000e+00> : vector<32x32xf32>
    %90 = tpu.matmul %89, %88, %cst_31 {dimension_numbers = #tpu.dot_dimension_numbers<[1], [0], [0], [1], [0, 0, 1, 1], [], []>} : vector<32x8xbf16>, vector<8x32xbf16>, vector<32x32xf32> -> vector<32x32xf32>
    %91 = arith.addf %65, %90 : vector<32x32xf32>
    %92 = vector.extract_strided_slice %36 {offsets = [0, 16], sizes = [32, 8], strides = [1, 1]} : vector<32x96xf32> to vector<32x8xf32>
    %93 = vector.shape_cast %92 : vector<32x8xf32> to vector<2x16x8xf32>
    %94 = vector.extract_strided_slice %36 {offsets = [0, 48], sizes = [32, 8], strides = [1, 1]} : vector<32x96xf32> to vector<32x8xf32>
    %95 = vector.shape_cast %94 : vector<32x8xf32> to vector<2x16x8xf32>
    %96 = vector.extract_strided_slice %36 {offsets = [0, 80], sizes = [32, 8], strides = [1, 1]} : vector<32x96xf32> to vector<32x8xf32>
    %97 = vector.shape_cast %96 : vector<32x8xf32> to vector<2x16x8xf32>
    "tpu.trace_start"() <{level = 10 : i32, message = "bqd,bkd->bqk"}> : () -> ()
    %cst_32 = arith.constant dense<0.000000e+00> : vector<2x16x16xf32>
    %98 = tpu.matmul %93, %95, %cst_32 {dimension_numbers = #tpu.dot_dimension_numbers<[2], [2], [1], [1], [0, 0, 0, 1, 1, 1], [0], [0]>} : vector<2x16x8xf32>, vector<2x16x8xf32>, vector<2x16x16xf32> -> vector<2x16x16xf32>
    %cst_33 = arith.constant -1.000000e+30 : f32
    "tpu.trace_stop"() : () -> ()
    %99 = vector.broadcast %cst_33 : f32 to vector<2x16x16xf32>
    %100 = arith.select %6, %98, %99 : vector<2x16x16xi1>, vector<2x16x16xf32>
    %cst_34 = arith.constant dense<0xFF800000> : vector<2x16xf32>
    %101 = vector.multi_reduction <maximumf>, %100, %cst_34 [2] : vector<2x16x16xf32> to vector<2x16xf32>
    %102 = vector.shape_cast %101 : vector<2x16xf32> to vector<2x16x1xf32>
    %103 = vector.broadcast %102 : vector<2x16x1xf32> to vector<2x16x16xf32>
    %104 = arith.subf %100, %103 : vector<2x16x16xf32>
    %105 = math.exp %104 : vector<2x16x16xf32>
    %cst_35 = arith.constant dense<0.000000e+00> : vector<2x16xf32>
    %106 = vector.multi_reduction <add>, %105, %cst_35 [2] : vector<2x16x16xf32> to vector<2x16xf32>
    %107 = vector.shape_cast %106 : vector<2x16xf32> to vector<2x16x1xf32>
    %108 = tpu.reciprocal %107 {approx = true} : vector<2x16x1xf32> -> vector<2x16x1xf32>
    %109 = vector.broadcast %108 : vector<2x16x1xf32> to vector<2x16x16xf32>
    %110 = arith.mulf %105, %109 : vector<2x16x16xf32>
    "tpu.trace_start"() <{level = 10 : i32, message = "bqk,bkd->bqd"}> : () -> ()
    %cst_36 = arith.constant dense<0.000000e+00> : vector<2x16x8xf32>
    %111 = tpu.matmul %110, %97, %cst_36 {dimension_numbers = #tpu.dot_dimension_numbers<[2], [1], [1], [2], [0, 0, 0, 1, 1, 2], [0], [0]>} : vector<2x16x16xf32>, vector<2x16x8xf32>, vector<2x16x8xf32> -> vector<2x16x8xf32>
    "tpu.trace_stop"() : () -> ()
    %112 = vector.shape_cast %111 : vector<2x16x8xf32> to vector<32x8xf32>
    %113 = vector.extract_strided_slice %38 {offsets = [2, 0, 0], sizes = [1, 8, 32], strides = [1, 1, 1]} : vector<4x8x32xbf16> to vector<1x8x32xbf16>
    %114 = vector.shape_cast %113 : vector<1x8x32xbf16> to vector<8x32xbf16>
    %115 = arith.truncf %112 : vector<32x8xf32> to vector<32x8xbf16>
    %cst_37 = arith.constant dense<0.000000e+00> : vector<32x32xf32>
    %116 = tpu.matmul %115, %114, %cst_37 {dimension_numbers = #tpu.dot_dimension_numbers<[1], [0], [0], [1], [0, 0, 1, 1], [], []>} : vector<32x8xbf16>, vector<8x32xbf16>, vector<32x32xf32> -> vector<32x32xf32>
    %117 = arith.addf %91, %116 : vector<32x32xf32>
    %118 = vector.extract_strided_slice %36 {offsets = [0, 24], sizes = [32, 8], strides = [1, 1]} : vector<32x96xf32> to vector<32x8xf32>
    %119 = vector.shape_cast %118 : vector<32x8xf32> to vector<2x16x8xf32>
    %120 = vector.extract_strided_slice %36 {offsets = [0, 56], sizes = [32, 8], strides = [1, 1]} : vector<32x96xf32> to vector<32x8xf32>
    %121 = vector.shape_cast %120 : vector<32x8xf32> to vector<2x16x8xf32>
    %122 = vector.extract_strided_slice %36 {offsets = [0, 88], sizes = [32, 8], strides = [1, 1]} : vector<32x96xf32> to vector<32x8xf32>
    %123 = vector.shape_cast %122 : vector<32x8xf32> to vector<2x16x8xf32>
    "tpu.trace_start"() <{level = 10 : i32, message = "bqd,bkd->bqk"}> : () -> ()
    %cst_38 = arith.constant dense<0.000000e+00> : vector<2x16x16xf32>
    %124 = tpu.matmul %119, %121, %cst_38 {dimension_numbers = #tpu.dot_dimension_numbers<[2], [2], [1], [1], [0, 0, 0, 1, 1, 1], [0], [0]>} : vector<2x16x8xf32>, vector<2x16x8xf32>, vector<2x16x16xf32> -> vector<2x16x16xf32>
    %cst_39 = arith.constant -1.000000e+30 : f32
    "tpu.trace_stop"() : () -> ()
    %125 = vector.broadcast %cst_39 : f32 to vector<2x16x16xf32>
    %126 = arith.select %6, %124, %125 : vector<2x16x16xi1>, vector<2x16x16xf32>
    %cst_40 = arith.constant dense<0xFF800000> : vector<2x16xf32>
    %127 = vector.multi_reduction <maximumf>, %126, %cst_40 [2] : vector<2x16x16xf32> to vector<2x16xf32>
    %128 = vector.shape_cast %127 : vector<2x16xf32> to vector<2x16x1xf32>
    %129 = vector.broadcast %128 : vector<2x16x1xf32> to vector<2x16x16xf32>
    %130 = arith.subf %126, %129 : vector<2x16x16xf32>
    %131 = math.exp %130 : vector<2x16x16xf32>
    %cst_41 = arith.constant dense<0.000000e+00> : vector<2x16xf32>
    %132 = vector.multi_reduction <add>, %131, %cst_41 [2] : vector<2x16x16xf32> to vector<2x16xf32>
    %133 = vector.shape_cast %132 : vector<2x16xf32> to vector<2x16x1xf32>
    %134 = tpu.reciprocal %133 {approx = true} : vector<2x16x1xf32> -> vector<2x16x1xf32>
    %135 = vector.broadcast %134 : vector<2x16x1xf32> to vector<2x16x16xf32>
    %136 = arith.mulf %131, %135 : vector<2x16x16xf32>
    "tpu.trace_start"() <{level = 10 : i32, message = "bqk,bkd->bqd"}> : () -> ()
    %cst_42 = arith.constant dense<0.000000e+00> : vector<2x16x8xf32>
    %137 = tpu.matmul %136, %123, %cst_42 {dimension_numbers = #tpu.dot_dimension_numbers<[2], [1], [1], [2], [0, 0, 0, 1, 1, 2], [0], [0]>} : vector<2x16x16xf32>, vector<2x16x8xf32>, vector<2x16x8xf32> -> vector<2x16x8xf32>
    "tpu.trace_stop"() : () -> ()
    %138 = vector.shape_cast %137 : vector<2x16x8xf32> to vector<32x8xf32>
    %139 = vector.extract_strided_slice %38 {offsets = [3, 0, 0], sizes = [1, 8, 32], strides = [1, 1, 1]} : vector<4x8x32xbf16> to vector<1x8x32xbf16>
    %140 = vector.shape_cast %139 : vector<1x8x32xbf16> to vector<8x32xbf16>
    %141 = arith.truncf %138 : vector<32x8xf32> to vector<32x8xbf16>
    %cst_43 = arith.constant dense<0.000000e+00> : vector<32x32xf32>
    %142 = tpu.matmul %141, %140, %cst_43 {dimension_numbers = #tpu.dot_dimension_numbers<[1], [0], [0], [1], [0, 0, 1, 1], [], []>} : vector<32x8xbf16>, vector<8x32xbf16>, vector<32x32xf32> -> vector<32x32xf32>
    %143 = arith.addf %117, %142 : vector<32x32xf32>
    %144 = arith.addf %0, %143 : vector<32x32xf32>
    %c0_44 = arith.constant 0 : index
    %c0_45 = arith.constant 0 : index
    %c0_46 = arith.constant 0 : index
    %145 = vector.load %arg5[%c0_44, %c0_45, %c0_46] : memref<2x1x32xf32, #tpu.memory_space<vmem>>, vector<1x1x32xf32>
    %146 = vector.shape_cast %145 : vector<1x1x32xf32> to vector<1x32xf32>
    %147 = vector.broadcast %146 : vector<1x32xf32> to vector<32x32xf32>
    %148 = arith.addf %144, %147 : vector<32x32xf32>
    %c0_47 = arith.constant 0 : index
    %c0_48 = arith.constant 0 : index
    %c0_49 = arith.constant 0 : index
    %149 = vector.load %arg6[%c0_47, %c0_48, %c0_49] : memref<2x1x32xf32, #tpu.memory_space<vmem>>, vector<1x1x32xf32>
    %150 = vector.shape_cast %149 : vector<1x1x32xf32> to vector<1x32xf32>
    %c0_50 = arith.constant 0 : index
    %c0_51 = arith.constant 0 : index
    %c0_52 = arith.constant 0 : index
    %151 = vector.load %arg7[%c0_50, %c0_51, %c0_52] : memref<2x1x32xf32, #tpu.memory_space<vmem>>, vector<1x1x32xf32>
    %152 = vector.shape_cast %151 : vector<1x1x32xf32> to vector<1x32xf32>
    %cst_53 = arith.constant dense<0.000000e+00> : vector<32xf32>
    %153 = vector.multi_reduction <add>, %148, %cst_53 [1] : vector<32x32xf32> to vector<32xf32>
    %154 = vector.shape_cast %153 : vector<32xf32> to vector<32x1xf32>
    %cst_54 = arith.constant 3.200000e+01 : f32
    %155 = vector.broadcast %cst_54 : f32 to vector<32x1xf32>
    %156 = arith.divf %154, %155 : vector<32x1xf32>
    %157 = vector.broadcast %156 : vector<32x1xf32> to vector<32x32xf32>
    %158 = arith.subf %148, %157 : vector<32x32xf32>
    %159 = arith.mulf %158, %158 : vector<32x32xf32>
    %cst_55 = arith.constant dense<0.000000e+00> : vector<32xf32>
    %160 = vector.multi_reduction <add>, %159, %cst_55 [1] : vector<32x32xf32> to vector<32xf32>
    %161 = vector.shape_cast %160 : vector<32xf32> to vector<32x1xf32>
    %cst_56 = arith.constant 3.200000e+01 : f32
    %162 = vector.broadcast %cst_56 : f32 to vector<32x1xf32>
    %163 = arith.divf %161, %162 : vector<32x1xf32>
    %164 = vector.broadcast %156 : vector<32x1xf32> to vector<32x32xf32>
    %165 = arith.subf %148, %164 : vector<32x32xf32>
    %cst_57 = arith.constant 9.99999974E-6 : f32
    %166 = vector.broadcast %cst_57 : f32 to vector<32x1xf32>
    %167 = arith.addf %163, %166 : vector<32x1xf32>
    %168 = math.rsqrt %167 : vector<32x1xf32>
    %169 = vector.broadcast %168 : vector<32x1xf32> to vector<32x32xf32>
    %170 = arith.mulf %165, %169 : vector<32x32xf32>
    %171 = vector.broadcast %150 : vector<1x32xf32> to vector<32x32xf32>
    %172 = arith.mulf %170, %171 : vector<32x32xf32>
    %173 = vector.broadcast %152 : vector<1x32xf32> to vector<32x32xf32>
    %174 = arith.addf %172, %173 : vector<32x32xf32>
    %c0_58 = arith.constant 0 : index
    %c0_59 = arith.constant 0 : index
    %c0_60 = arith.constant 0 : index
    %175 = vector.load %arg8[%c0_58, %c0_59, %c0_60] : memref<2x32x128xbf16, #tpu.memory_space<vmem>>, vector<1x32x128xbf16>
    %176 = vector.shape_cast %175 : vector<1x32x128xbf16> to vector<32x128xbf16>
    %177 = arith.truncf %174 : vector<32x32xf32> to vector<32x32xbf16>
    %cst_61 = arith.constant dense<0.000000e+00> : vector<32x128xf32>
    %178 = tpu.matmul %177, %176, %cst_61 {dimension_numbers = #tpu.dot_dimension_numbers<[1], [0], [0], [1], [0, 0, 1, 1], [], []>} : vector<32x32xbf16>, vector<32x128xbf16>, vector<32x128xf32> -> vector<32x128xf32>
    %c0_62 = arith.constant 0 : index
    %c0_63 = arith.constant 0 : index
    %c0_64 = arith.constant 0 : index
    %179 = vector.load %arg9[%c0_62, %c0_63, %c0_64] : memref<2x1x128xf32, #tpu.memory_space<vmem>>, vector<1x1x128xf32>
    %180 = vector.shape_cast %179 : vector<1x1x128xf32> to vector<1x128xf32>
    %181 = vector.broadcast %180 : vector<1x128xf32> to vector<32x128xf32>
    %182 = arith.addf %178, %181 : vector<32x128xf32>
    %cst_65 = arith.constant 0.000000e+00 : f32
    %183 = vector.broadcast %cst_65 : f32 to vector<32x128xf32>
    %184 = arith.maximumf %182, %183 : vector<32x128xf32>
    %c0_66 = arith.constant 0 : index
    %c0_67 = arith.constant 0 : index
    %c0_68 = arith.constant 0 : index
    %185 = vector.load %arg10[%c0_66, %c0_67, %c0_68] : memref<2x128x32xbf16, #tpu.memory_space<vmem>>, vector<1x128x32xbf16>
    %186 = vector.shape_cast %185 : vector<1x128x32xbf16> to vector<128x32xbf16>
    %187 = arith.truncf %184 : vector<32x128xf32> to vector<32x128xbf16>
    %cst_69 = arith.constant dense<0.000000e+00> : vector<32x32xf32>
    %188 = tpu.matmul %187, %186, %cst_69 {dimension_numbers = #tpu.dot_dimension_numbers<[1], [0], [0], [1], [0, 0, 1, 1], [], []>} : vector<32x128xbf16>, vector<128x32xbf16>, vector<32x32xf32> -> vector<32x32xf32>
    %189 = arith.addf %148, %188 : vector<32x32xf32>
    %c0_70 = arith.constant 0 : index
    %c0_71 = arith.constant 0 : index
    %c0_72 = arith.constant 0 : index
    %190 = vector.load %arg11[%c0_70, %c0_71, %c0_72] : memref<2x1x32xf32, #tpu.memory_space<vmem>>, vector<1x1x32xf32>
    %191 = vector.shape_cast %190 : vector<1x1x32xf32> to vector<1x32xf32>
    %192 = vector.broadcast %191 : vector<1x32xf32> to vector<32x32xf32>
    %193 = arith.addf %189, %192 : vector<32x32xf32>
    %c1 = arith.constant 1 : index
    %c0_73 = arith.constant 0 : index
    %c0_74 = arith.constant 0 : index
    %194 = vector.load %arg1[%c1, %c0_73, %c0_74] : memref<2x1x32xf32, #tpu.memory_space<vmem>>, vector<1x1x32xf32>
    %195 = vector.shape_cast %194 : vector<1x1x32xf32> to vector<1x32xf32>
    %c1_75 = arith.constant 1 : index
    %c0_76 = arith.constant 0 : index
    %c0_77 = arith.constant 0 : index
    %196 = vector.load %arg2[%c1_75, %c0_76, %c0_77] : memref<2x1x32xf32, #tpu.memory_space<vmem>>, vector<1x1x32xf32>
    %197 = vector.shape_cast %196 : vector<1x1x32xf32> to vector<1x32xf32>
    %cst_78 = arith.constant dense<0.000000e+00> : vector<32xf32>
    %198 = vector.multi_reduction <add>, %193, %cst_78 [1] : vector<32x32xf32> to vector<32xf32>
    %199 = vector.shape_cast %198 : vector<32xf32> to vector<32x1xf32>
    %cst_79 = arith.constant 3.200000e+01 : f32
    %200 = vector.broadcast %cst_79 : f32 to vector<32x1xf32>
    %201 = arith.divf %199, %200 : vector<32x1xf32>
    %202 = vector.broadcast %201 : vector<32x1xf32> to vector<32x32xf32>
    %203 = arith.subf %193, %202 : vector<32x32xf32>
    %204 = arith.mulf %203, %203 : vector<32x32xf32>
    %cst_80 = arith.constant dense<0.000000e+00> : vector<32xf32>
    %205 = vector.multi_reduction <add>, %204, %cst_80 [1] : vector<32x32xf32> to vector<32xf32>
    %206 = vector.shape_cast %205 : vector<32xf32> to vector<32x1xf32>
    %cst_81 = arith.constant 3.200000e+01 : f32
    %207 = vector.broadcast %cst_81 : f32 to vector<32x1xf32>
    %208 = arith.divf %206, %207 : vector<32x1xf32>
    %209 = vector.broadcast %201 : vector<32x1xf32> to vector<32x32xf32>
    %210 = arith.subf %193, %209 : vector<32x32xf32>
    %cst_82 = arith.constant 9.99999974E-6 : f32
    %211 = vector.broadcast %cst_82 : f32 to vector<32x1xf32>
    %212 = arith.addf %208, %211 : vector<32x1xf32>
    %213 = math.rsqrt %212 : vector<32x1xf32>
    %214 = vector.broadcast %213 : vector<32x1xf32> to vector<32x32xf32>
    %215 = arith.mulf %210, %214 : vector<32x32xf32>
    %216 = vector.broadcast %195 : vector<1x32xf32> to vector<32x32xf32>
    %217 = arith.mulf %215, %216 : vector<32x32xf32>
    %218 = vector.broadcast %197 : vector<1x32xf32> to vector<32x32xf32>
    %219 = arith.addf %217, %218 : vector<32x32xf32>
    %c1_83 = arith.constant 1 : index
    %c0_84 = arith.constant 0 : index
    %c0_85 = arith.constant 0 : index
    %220 = vector.load %arg3[%c1_83, %c0_84, %c0_85] : memref<2x32x96xbf16, #tpu.memory_space<vmem>>, vector<1x32x96xbf16>
    %221 = vector.shape_cast %220 : vector<1x32x96xbf16> to vector<32x96xbf16>
    %222 = arith.truncf %219 : vector<32x32xf32> to vector<32x32xbf16>
    %cst_86 = arith.constant dense<0.000000e+00> : vector<32x96xf32>
    %223 = tpu.matmul %222, %221, %cst_86 {dimension_numbers = #tpu.dot_dimension_numbers<[1], [0], [0], [1], [0, 0, 1, 1], [], []>} : vector<32x32xbf16>, vector<32x96xbf16>, vector<32x96xf32> -> vector<32x96xf32>
    %c1_87 = arith.constant 1 : index
    %c0_88 = arith.constant 0 : index
    %c0_89 = arith.constant 0 : index
    %c0_90 = arith.constant 0 : index
    %224 = vector.load %arg4[%c1_87, %c0_88, %c0_89, %c0_90] : memref<2x4x8x32xbf16, #tpu.memory_space<vmem>>, vector<1x4x8x32xbf16>
    %225 = vector.shape_cast %224 : vector<1x4x8x32xbf16> to vector<4x8x32xbf16>
    %cst_91 = arith.constant 0.000000e+00 : f32
    %226 = vector.broadcast %cst_91 : f32 to vector<32x32xf32>
    %227 = vector.extract_strided_slice %223 {offsets = [0, 0], sizes = [32, 8], strides = [1, 1]} : vector<32x96xf32> to vector<32x8xf32>
    %228 = vector.shape_cast %227 : vector<32x8xf32> to vector<2x16x8xf32>
    %229 = vector.extract_strided_slice %223 {offsets = [0, 32], sizes = [32, 8], strides = [1, 1]} : vector<32x96xf32> to vector<32x8xf32>
    %230 = vector.shape_cast %229 : vector<32x8xf32> to vector<2x16x8xf32>
    %231 = vector.extract_strided_slice %223 {offsets = [0, 64], sizes = [32, 8], strides = [1, 1]} : vector<32x96xf32> to vector<32x8xf32>
    %232 = vector.shape_cast %231 : vector<32x8xf32> to vector<2x16x8xf32>
    "tpu.trace_start"() <{level = 10 : i32, message = "bqd,bkd->bqk"}> : () -> ()
    %cst_92 = arith.constant dense<0.000000e+00> : vector<2x16x16xf32>
    %233 = tpu.matmul %228, %230, %cst_92 {dimension_numbers = #tpu.dot_dimension_numbers<[2], [2], [1], [1], [0, 0, 0, 1, 1, 1], [0], [0]>} : vector<2x16x8xf32>, vector<2x16x8xf32>, vector<2x16x16xf32> -> vector<2x16x16xf32>
    %cst_93 = arith.constant -1.000000e+30 : f32
    "tpu.trace_stop"() : () -> ()
    %234 = vector.broadcast %cst_93 : f32 to vector<2x16x16xf32>
    %235 = arith.select %6, %233, %234 : vector<2x16x16xi1>, vector<2x16x16xf32>
    %cst_94 = arith.constant dense<0xFF800000> : vector<2x16xf32>
    %236 = vector.multi_reduction <maximumf>, %235, %cst_94 [2] : vector<2x16x16xf32> to vector<2x16xf32>
    %237 = vector.shape_cast %236 : vector<2x16xf32> to vector<2x16x1xf32>
    %238 = vector.broadcast %237 : vector<2x16x1xf32> to vector<2x16x16xf32>
    %239 = arith.subf %235, %238 : vector<2x16x16xf32>
    %240 = math.exp %239 : vector<2x16x16xf32>
    %cst_95 = arith.constant dense<0.000000e+00> : vector<2x16xf32>
    %241 = vector.multi_reduction <add>, %240, %cst_95 [2] : vector<2x16x16xf32> to vector<2x16xf32>
    %242 = vector.shape_cast %241 : vector<2x16xf32> to vector<2x16x1xf32>
    %243 = tpu.reciprocal %242 {approx = true} : vector<2x16x1xf32> -> vector<2x16x1xf32>
    %244 = vector.broadcast %243 : vector<2x16x1xf32> to vector<2x16x16xf32>
    %245 = arith.mulf %240, %244 : vector<2x16x16xf32>
    "tpu.trace_start"() <{level = 10 : i32, message = "bqk,bkd->bqd"}> : () -> ()
    %cst_96 = arith.constant dense<0.000000e+00> : vector<2x16x8xf32>
    %246 = tpu.matmul %245, %232, %cst_96 {dimension_numbers = #tpu.dot_dimension_numbers<[2], [1], [1], [2], [0, 0, 0, 1, 1, 2], [0], [0]>} : vector<2x16x16xf32>, vector<2x16x8xf32>, vector<2x16x8xf32> -> vector<2x16x8xf32>
    "tpu.trace_stop"() : () -> ()
    %247 = vector.shape_cast %246 : vector<2x16x8xf32> to vector<32x8xf32>
    %248 = vector.extract_strided_slice %225 {offsets = [0, 0, 0], sizes = [1, 8, 32], strides = [1, 1, 1]} : vector<4x8x32xbf16> to vector<1x8x32xbf16>
    %249 = vector.shape_cast %248 : vector<1x8x32xbf16> to vector<8x32xbf16>
    %250 = arith.truncf %247 : vector<32x8xf32> to vector<32x8xbf16>
    %cst_97 = arith.constant dense<0.000000e+00> : vector<32x32xf32>
    %251 = tpu.matmul %250, %249, %cst_97 {dimension_numbers = #tpu.dot_dimension_numbers<[1], [0], [0], [1], [0, 0, 1, 1], [], []>} : vector<32x8xbf16>, vector<8x32xbf16>, vector<32x32xf32> -> vector<32x32xf32>
    %252 = arith.addf %226, %251 : vector<32x32xf32>
    %253 = vector.extract_strided_slice %223 {offsets = [0, 8], sizes = [32, 8], strides = [1, 1]} : vector<32x96xf32> to vector<32x8xf32>
    %254 = vector.shape_cast %253 : vector<32x8xf32> to vector<2x16x8xf32>
    %255 = vector.extract_strided_slice %223 {offsets = [0, 40], sizes = [32, 8], strides = [1, 1]} : vector<32x96xf32> to vector<32x8xf32>
    %256 = vector.shape_cast %255 : vector<32x8xf32> to vector<2x16x8xf32>
    %257 = vector.extract_strided_slice %223 {offsets = [0, 72], sizes = [32, 8], strides = [1, 1]} : vector<32x96xf32> to vector<32x8xf32>
    %258 = vector.shape_cast %257 : vector<32x8xf32> to vector<2x16x8xf32>
    "tpu.trace_start"() <{level = 10 : i32, message = "bqd,bkd->bqk"}> : () -> ()
    %cst_98 = arith.constant dense<0.000000e+00> : vector<2x16x16xf32>
    %259 = tpu.matmul %254, %256, %cst_98 {dimension_numbers = #tpu.dot_dimension_numbers<[2], [2], [1], [1], [0, 0, 0, 1, 1, 1], [0], [0]>} : vector<2x16x8xf32>, vector<2x16x8xf32>, vector<2x16x16xf32> -> vector<2x16x16xf32>
    %cst_99 = arith.constant -1.000000e+30 : f32
    "tpu.trace_stop"() : () -> ()
    %260 = vector.broadcast %cst_99 : f32 to vector<2x16x16xf32>
    %261 = arith.select %6, %259, %260 : vector<2x16x16xi1>, vector<2x16x16xf32>
    %cst_100 = arith.constant dense<0xFF800000> : vector<2x16xf32>
    %262 = vector.multi_reduction <maximumf>, %261, %cst_100 [2] : vector<2x16x16xf32> to vector<2x16xf32>
    %263 = vector.shape_cast %262 : vector<2x16xf32> to vector<2x16x1xf32>
    %264 = vector.broadcast %263 : vector<2x16x1xf32> to vector<2x16x16xf32>
    %265 = arith.subf %261, %264 : vector<2x16x16xf32>
    %266 = math.exp %265 : vector<2x16x16xf32>
    %cst_101 = arith.constant dense<0.000000e+00> : vector<2x16xf32>
    %267 = vector.multi_reduction <add>, %266, %cst_101 [2] : vector<2x16x16xf32> to vector<2x16xf32>
    %268 = vector.shape_cast %267 : vector<2x16xf32> to vector<2x16x1xf32>
    %269 = tpu.reciprocal %268 {approx = true} : vector<2x16x1xf32> -> vector<2x16x1xf32>
    %270 = vector.broadcast %269 : vector<2x16x1xf32> to vector<2x16x16xf32>
    %271 = arith.mulf %266, %270 : vector<2x16x16xf32>
    "tpu.trace_start"() <{level = 10 : i32, message = "bqk,bkd->bqd"}> : () -> ()
    %cst_102 = arith.constant dense<0.000000e+00> : vector<2x16x8xf32>
    %272 = tpu.matmul %271, %258, %cst_102 {dimension_numbers = #tpu.dot_dimension_numbers<[2], [1], [1], [2], [0, 0, 0, 1, 1, 2], [0], [0]>} : vector<2x16x16xf32>, vector<2x16x8xf32>, vector<2x16x8xf32> -> vector<2x16x8xf32>
    "tpu.trace_stop"() : () -> ()
    %273 = vector.shape_cast %272 : vector<2x16x8xf32> to vector<32x8xf32>
    %274 = vector.extract_strided_slice %225 {offsets = [1, 0, 0], sizes = [1, 8, 32], strides = [1, 1, 1]} : vector<4x8x32xbf16> to vector<1x8x32xbf16>
    %275 = vector.shape_cast %274 : vector<1x8x32xbf16> to vector<8x32xbf16>
    %276 = arith.truncf %273 : vector<32x8xf32> to vector<32x8xbf16>
    %cst_103 = arith.constant dense<0.000000e+00> : vector<32x32xf32>
    %277 = tpu.matmul %276, %275, %cst_103 {dimension_numbers = #tpu.dot_dimension_numbers<[1], [0], [0], [1], [0, 0, 1, 1], [], []>} : vector<32x8xbf16>, vector<8x32xbf16>, vector<32x32xf32> -> vector<32x32xf32>
    %278 = arith.addf %252, %277 : vector<32x32xf32>
    %279 = vector.extract_strided_slice %223 {offsets = [0, 16], sizes = [32, 8], strides = [1, 1]} : vector<32x96xf32> to vector<32x8xf32>
    %280 = vector.shape_cast %279 : vector<32x8xf32> to vector<2x16x8xf32>
    %281 = vector.extract_strided_slice %223 {offsets = [0, 48], sizes = [32, 8], strides = [1, 1]} : vector<32x96xf32> to vector<32x8xf32>
    %282 = vector.shape_cast %281 : vector<32x8xf32> to vector<2x16x8xf32>
    %283 = vector.extract_strided_slice %223 {offsets = [0, 80], sizes = [32, 8], strides = [1, 1]} : vector<32x96xf32> to vector<32x8xf32>
    %284 = vector.shape_cast %283 : vector<32x8xf32> to vector<2x16x8xf32>
    "tpu.trace_start"() <{level = 10 : i32, message = "bqd,bkd->bqk"}> : () -> ()
    %cst_104 = arith.constant dense<0.000000e+00> : vector<2x16x16xf32>
    %285 = tpu.matmul %280, %282, %cst_104 {dimension_numbers = #tpu.dot_dimension_numbers<[2], [2], [1], [1], [0, 0, 0, 1, 1, 1], [0], [0]>} : vector<2x16x8xf32>, vector<2x16x8xf32>, vector<2x16x16xf32> -> vector<2x16x16xf32>
    %cst_105 = arith.constant -1.000000e+30 : f32
    "tpu.trace_stop"() : () -> ()
    %286 = vector.broadcast %cst_105 : f32 to vector<2x16x16xf32>
    %287 = arith.select %6, %285, %286 : vector<2x16x16xi1>, vector<2x16x16xf32>
    %cst_106 = arith.constant dense<0xFF800000> : vector<2x16xf32>
    %288 = vector.multi_reduction <maximumf>, %287, %cst_106 [2] : vector<2x16x16xf32> to vector<2x16xf32>
    %289 = vector.shape_cast %288 : vector<2x16xf32> to vector<2x16x1xf32>
    %290 = vector.broadcast %289 : vector<2x16x1xf32> to vector<2x16x16xf32>
    %291 = arith.subf %287, %290 : vector<2x16x16xf32>
    %292 = math.exp %291 : vector<2x16x16xf32>
    %cst_107 = arith.constant dense<0.000000e+00> : vector<2x16xf32>
    %293 = vector.multi_reduction <add>, %292, %cst_107 [2] : vector<2x16x16xf32> to vector<2x16xf32>
    %294 = vector.shape_cast %293 : vector<2x16xf32> to vector<2x16x1xf32>
    %295 = tpu.reciprocal %294 {approx = true} : vector<2x16x1xf32> -> vector<2x16x1xf32>
    %296 = vector.broadcast %295 : vector<2x16x1xf32> to vector<2x16x16xf32>
    %297 = arith.mulf %292, %296 : vector<2x16x16xf32>
    "tpu.trace_start"() <{level = 10 : i32, message = "bqk,bkd->bqd"}> : () -> ()
    %cst_108 = arith.constant dense<0.000000e+00> : vector<2x16x8xf32>
    %298 = tpu.matmul %297, %284, %cst_108 {dimension_numbers = #tpu.dot_dimension_numbers<[2], [1], [1], [2], [0, 0, 0, 1, 1, 2], [0], [0]>} : vector<2x16x16xf32>, vector<2x16x8xf32>, vector<2x16x8xf32> -> vector<2x16x8xf32>
    "tpu.trace_stop"() : () -> ()
    %299 = vector.shape_cast %298 : vector<2x16x8xf32> to vector<32x8xf32>
    %300 = vector.extract_strided_slice %225 {offsets = [2, 0, 0], sizes = [1, 8, 32], strides = [1, 1, 1]} : vector<4x8x32xbf16> to vector<1x8x32xbf16>
    %301 = vector.shape_cast %300 : vector<1x8x32xbf16> to vector<8x32xbf16>
    %302 = arith.truncf %299 : vector<32x8xf32> to vector<32x8xbf16>
    %cst_109 = arith.constant dense<0.000000e+00> : vector<32x32xf32>
    %303 = tpu.matmul %302, %301, %cst_109 {dimension_numbers = #tpu.dot_dimension_numbers<[1], [0], [0], [1], [0, 0, 1, 1], [], []>} : vector<32x8xbf16>, vector<8x32xbf16>, vector<32x32xf32> -> vector<32x32xf32>
    %304 = arith.addf %278, %303 : vector<32x32xf32>
    %305 = vector.extract_strided_slice %223 {offsets = [0, 24], sizes = [32, 8], strides = [1, 1]} : vector<32x96xf32> to vector<32x8xf32>
    %306 = vector.shape_cast %305 : vector<32x8xf32> to vector<2x16x8xf32>
    %307 = vector.extract_strided_slice %223 {offsets = [0, 56], sizes = [32, 8], strides = [1, 1]} : vector<32x96xf32> to vector<32x8xf32>
    %308 = vector.shape_cast %307 : vector<32x8xf32> to vector<2x16x8xf32>
    %309 = vector.extract_strided_slice %223 {offsets = [0, 88], sizes = [32, 8], strides = [1, 1]} : vector<32x96xf32> to vector<32x8xf32>
    %310 = vector.shape_cast %309 : vector<32x8xf32> to vector<2x16x8xf32>
    "tpu.trace_start"() <{level = 10 : i32, message = "bqd,bkd->bqk"}> : () -> ()
    %cst_110 = arith.constant dense<0.000000e+00> : vector<2x16x16xf32>
    %311 = tpu.matmul %306, %308, %cst_110 {dimension_numbers = #tpu.dot_dimension_numbers<[2], [2], [1], [1], [0, 0, 0, 1, 1, 1], [0], [0]>} : vector<2x16x8xf32>, vector<2x16x8xf32>, vector<2x16x16xf32> -> vector<2x16x16xf32>
    %cst_111 = arith.constant -1.000000e+30 : f32
    "tpu.trace_stop"() : () -> ()
    %312 = vector.broadcast %cst_111 : f32 to vector<2x16x16xf32>
    %313 = arith.select %6, %311, %312 : vector<2x16x16xi1>, vector<2x16x16xf32>
    %cst_112 = arith.constant dense<0xFF800000> : vector<2x16xf32>
    %314 = vector.multi_reduction <maximumf>, %313, %cst_112 [2] : vector<2x16x16xf32> to vector<2x16xf32>
    %315 = vector.shape_cast %314 : vector<2x16xf32> to vector<2x16x1xf32>
    %316 = vector.broadcast %315 : vector<2x16x1xf32> to vector<2x16x16xf32>
    %317 = arith.subf %313, %316 : vector<2x16x16xf32>
    %318 = math.exp %317 : vector<2x16x16xf32>
    %cst_113 = arith.constant dense<0.000000e+00> : vector<2x16xf32>
    %319 = vector.multi_reduction <add>, %318, %cst_113 [2] : vector<2x16x16xf32> to vector<2x16xf32>
    %320 = vector.shape_cast %319 : vector<2x16xf32> to vector<2x16x1xf32>
    %321 = tpu.reciprocal %320 {approx = true} : vector<2x16x1xf32> -> vector<2x16x1xf32>
    %322 = vector.broadcast %321 : vector<2x16x1xf32> to vector<2x16x16xf32>
    %323 = arith.mulf %318, %322 : vector<2x16x16xf32>
    "tpu.trace_start"() <{level = 10 : i32, message = "bqk,bkd->bqd"}> : () -> ()
    %cst_114 = arith.constant dense<0.000000e+00> : vector<2x16x8xf32>
    %324 = tpu.matmul %323, %310, %cst_114 {dimension_numbers = #tpu.dot_dimension_numbers<[2], [1], [1], [2], [0, 0, 0, 1, 1, 2], [0], [0]>} : vector<2x16x16xf32>, vector<2x16x8xf32>, vector<2x16x8xf32> -> vector<2x16x8xf32>
    "tpu.trace_stop"() : () -> ()
    %325 = vector.shape_cast %324 : vector<2x16x8xf32> to vector<32x8xf32>
    %326 = vector.extract_strided_slice %225 {offsets = [3, 0, 0], sizes = [1, 8, 32], strides = [1, 1, 1]} : vector<4x8x32xbf16> to vector<1x8x32xbf16>
    %327 = vector.shape_cast %326 : vector<1x8x32xbf16> to vector<8x32xbf16>
    %328 = arith.truncf %325 : vector<32x8xf32> to vector<32x8xbf16>
    %cst_115 = arith.constant dense<0.000000e+00> : vector<32x32xf32>
    %329 = tpu.matmul %328, %327, %cst_115 {dimension_numbers = #tpu.dot_dimension_numbers<[1], [0], [0], [1], [0, 0, 1, 1], [], []>} : vector<32x8xbf16>, vector<8x32xbf16>, vector<32x32xf32> -> vector<32x32xf32>
    %330 = arith.addf %304, %329 : vector<32x32xf32>
    %331 = arith.addf %193, %330 : vector<32x32xf32>
    %c1_116 = arith.constant 1 : index
    %c0_117 = arith.constant 0 : index
    %c0_118 = arith.constant 0 : index
    %332 = vector.load %arg5[%c1_116, %c0_117, %c0_118] : memref<2x1x32xf32, #tpu.memory_space<vmem>>, vector<1x1x32xf32>
    %333 = vector.shape_cast %332 : vector<1x1x32xf32> to vector<1x32xf32>
    %334 = vector.broadcast %333 : vector<1x32xf32> to vector<32x32xf32>
    %335 = arith.addf %331, %334 : vector<32x32xf32>
    %c1_119 = arith.constant 1 : index
    %c0_120 = arith.constant 0 : index
    %c0_121 = arith.constant 0 : index
    %336 = vector.load %arg6[%c1_119, %c0_120, %c0_121] : memref<2x1x32xf32, #tpu.memory_space<vmem>>, vector<1x1x32xf32>
    %337 = vector.shape_cast %336 : vector<1x1x32xf32> to vector<1x32xf32>
    %c1_122 = arith.constant 1 : index
    %c0_123 = arith.constant 0 : index
    %c0_124 = arith.constant 0 : index
    %338 = vector.load %arg7[%c1_122, %c0_123, %c0_124] : memref<2x1x32xf32, #tpu.memory_space<vmem>>, vector<1x1x32xf32>
    %339 = vector.shape_cast %338 : vector<1x1x32xf32> to vector<1x32xf32>
    %cst_125 = arith.constant dense<0.000000e+00> : vector<32xf32>
    %340 = vector.multi_reduction <add>, %335, %cst_125 [1] : vector<32x32xf32> to vector<32xf32>
    %341 = vector.shape_cast %340 : vector<32xf32> to vector<32x1xf32>
    %cst_126 = arith.constant 3.200000e+01 : f32
    %342 = vector.broadcast %cst_126 : f32 to vector<32x1xf32>
    %343 = arith.divf %341, %342 : vector<32x1xf32>
    %344 = vector.broadcast %343 : vector<32x1xf32> to vector<32x32xf32>
    %345 = arith.subf %335, %344 : vector<32x32xf32>
    %346 = arith.mulf %345, %345 : vector<32x32xf32>
    %cst_127 = arith.constant dense<0.000000e+00> : vector<32xf32>
    %347 = vector.multi_reduction <add>, %346, %cst_127 [1] : vector<32x32xf32> to vector<32xf32>
    %348 = vector.shape_cast %347 : vector<32xf32> to vector<32x1xf32>
    %cst_128 = arith.constant 3.200000e+01 : f32
    %349 = vector.broadcast %cst_128 : f32 to vector<32x1xf32>
    %350 = arith.divf %348, %349 : vector<32x1xf32>
    %351 = vector.broadcast %343 : vector<32x1xf32> to vector<32x32xf32>
    %352 = arith.subf %335, %351 : vector<32x32xf32>
    %cst_129 = arith.constant 9.99999974E-6 : f32
    %353 = vector.broadcast %cst_129 : f32 to vector<32x1xf32>
    %354 = arith.addf %350, %353 : vector<32x1xf32>
    %355 = math.rsqrt %354 : vector<32x1xf32>
    %356 = vector.broadcast %355 : vector<32x1xf32> to vector<32x32xf32>
    %357 = arith.mulf %352, %356 : vector<32x32xf32>
    %358 = vector.broadcast %337 : vector<1x32xf32> to vector<32x32xf32>
    %359 = arith.mulf %357, %358 : vector<32x32xf32>
    %360 = vector.broadcast %339 : vector<1x32xf32> to vector<32x32xf32>
    %361 = arith.addf %359, %360 : vector<32x32xf32>
    %c1_130 = arith.constant 1 : index
    %c0_131 = arith.constant 0 : index
    %c0_132 = arith.constant 0 : index
    %362 = vector.load %arg8[%c1_130, %c0_131, %c0_132] : memref<2x32x128xbf16, #tpu.memory_space<vmem>>, vector<1x32x128xbf16>
    %363 = vector.shape_cast %362 : vector<1x32x128xbf16> to vector<32x128xbf16>
    %364 = arith.truncf %361 : vector<32x32xf32> to vector<32x32xbf16>
    %cst_133 = arith.constant dense<0.000000e+00> : vector<32x128xf32>
    %365 = tpu.matmul %364, %363, %cst_133 {dimension_numbers = #tpu.dot_dimension_numbers<[1], [0], [0], [1], [0, 0, 1, 1], [], []>} : vector<32x32xbf16>, vector<32x128xbf16>, vector<32x128xf32> -> vector<32x128xf32>
    %c1_134 = arith.constant 1 : index
    %c0_135 = arith.constant 0 : index
    %c0_136 = arith.constant 0 : index
    %366 = vector.load %arg9[%c1_134, %c0_135, %c0_136] : memref<2x1x128xf32, #tpu.memory_space<vmem>>, vector<1x1x128xf32>
    %367 = vector.shape_cast %366 : vector<1x1x128xf32> to vector<1x128xf32>
    %368 = vector.broadcast %367 : vector<1x128xf32> to vector<32x128xf32>
    %369 = arith.addf %365, %368 : vector<32x128xf32>
    %cst_137 = arith.constant 0.000000e+00 : f32
    %370 = vector.broadcast %cst_137 : f32 to vector<32x128xf32>
    %371 = arith.maximumf %369, %370 : vector<32x128xf32>
    %c1_138 = arith.constant 1 : index
    %c0_139 = arith.constant 0 : index
    %c0_140 = arith.constant 0 : index
    %372 = vector.load %arg10[%c1_138, %c0_139, %c0_140] : memref<2x128x32xbf16, #tpu.memory_space<vmem>>, vector<1x128x32xbf16>
    %373 = vector.shape_cast %372 : vector<1x128x32xbf16> to vector<128x32xbf16>
    %374 = arith.truncf %371 : vector<32x128xf32> to vector<32x128xbf16>
    %cst_141 = arith.constant dense<0.000000e+00> : vector<32x32xf32>
    %375 = tpu.matmul %374, %373, %cst_141 {dimension_numbers = #tpu.dot_dimension_numbers<[1], [0], [0], [1], [0, 0, 1, 1], [], []>} : vector<32x128xbf16>, vector<128x32xbf16>, vector<32x32xf32> -> vector<32x32xf32>
    %376 = arith.addf %335, %375 : vector<32x32xf32>
    %c1_142 = arith.constant 1 : index
    %c0_143 = arith.constant 0 : index
    %c0_144 = arith.constant 0 : index
    %377 = vector.load %arg11[%c1_142, %c0_143, %c0_144] : memref<2x1x32xf32, #tpu.memory_space<vmem>>, vector<1x1x32xf32>
    %378 = vector.shape_cast %377 : vector<1x1x32xf32> to vector<1x32xf32>
    %379 = vector.broadcast %378 : vector<1x32xf32> to vector<32x32xf32>
    %380 = arith.addf %376, %379 : vector<32x32xf32>
    %c0_145 = arith.constant 0 : index
    %c0_146 = arith.constant 0 : index
    %381 = vector.load %arg12[%c0_145, %c0_146] : memref<32x128xbf16, #tpu.memory_space<vmem>>, vector<32x128xbf16>
    %382 = arith.truncf %380 : vector<32x32xf32> to vector<32x32xbf16>
    %cst_147 = arith.constant dense<0.000000e+00> : vector<32x128xf32>
    %383 = tpu.matmul %382, %381, %cst_147 {dimension_numbers = #tpu.dot_dimension_numbers<[1], [0], [0], [1], [0, 0, 1, 1], [], []>} : vector<32x32xbf16>, vector<32x128xbf16>, vector<32x128xf32> -> vector<32x128xf32>
    %c0_148 = arith.constant 0 : index
    %c0_149 = arith.constant 0 : index
    %384 = vector.load %arg13[%c0_148, %c0_149] : memref<1x128xf32, #tpu.memory_space<vmem>>, vector<1x128xf32>
    %385 = vector.broadcast %384 : vector<1x128xf32> to vector<32x128xf32>
    %386 = arith.addf %383, %385 : vector<32x128xf32>
    %c0_150 = arith.constant 0 : index
    %c0_151 = arith.constant 0 : index
    %387 = vector.load %arg14[%c0_150, %c0_151] : memref<32x128xf32, #tpu.memory_space<vmem>>, vector<32x128xf32>
    tpu.vector_store %arg14[%c0_150, %c0_151], %386 {strides = array<i32>} : memref<32x128xf32, #tpu.memory_space<vmem>>, vector<32x128xf32>,
    return
  }
}

</mosaic_0001>

<llo_original>
// kernel: _bigram_lm_forward.1
$region0: #{_bigram_lm_forward.1}
  #allocation0 [shape = 'u32[]', space=smem, size = 0x4, offset = 0x4, fixed_abs, tag = 'smem constant byte address 0x4 - core index']
  #allocation1 [shape = 'u32[144,128]{1,0:T(1,128)}', space=vmem, size = 0x12000, scoped, tag = 'internal scratch']
  %s0 = inlined_call_operand.vmem [shape: f32[32,32], index: 0, kind: input, shape index: {}]
  %s1 = inlined_call_operand.vmem [shape: f32[2,1,32], index: 1, kind: input, shape index: {}]
  %s2 = inlined_call_operand.vmem [shape: f32[2,1,32], index: 2, kind: input, shape index: {}]
  %s3 = inlined_call_operand.vmem [shape: bf16[2,32,96], index: 3, kind: input, shape index: {}]
  %s4 = inlined_call_operand.vmem [shape: bf16[2,4,8,32], index: 4, kind: input, shape index: {}]
  %s5 = inlined_call_operand.vmem [shape: f32[2,1,32], index: 5, kind: input, shape index: {}]
  %s6 = inlined_call_operand.vmem [shape: f32[2,1,32], index: 6, kind: input, shape index: {}]
  %s7 = inlined_call_operand.vmem [shape: f32[2,1,32], index: 7, kind: input, shape index: {}]
  %s8 = inlined_call_operand.vmem [shape: bf16[2,32,128], index: 8, kind: input, shape index: {}]
  %s9 = inlined_call_operand.vmem [shape: f32[2,1,128], index: 9, kind: input, shape index: {}]
  %s10 = inlined_call_operand.vmem [shape: bf16[2,128,32], index: 10, kind: input, shape index: {}]
  %s11 = inlined_call_operand.vmem [shape: f32[2,1,32], index: 11, kind: input, shape index: {}]
  %s12 = inlined_call_operand.vmem [shape: bf16[32,128], index: 12, kind: input, shape index: {}]
  %s13 = inlined_call_operand.vmem [shape: f32[1,128], index: 13, kind: input, shape index: {}]
  %s14 = inlined_call_operand.hbm [shape: f32[32,128], index: 14, kind: output, shape index: {}]
  %s15 = sld [smem:[#allocation0]]
  $region66: #{_bigram_lm_forward.1} parent=0
    _
  %s17 = ssub.s32 1, %s15
  %s18 = scalar_select 0, %s17, %s15
  $region1: #{_bigram_lm_forward.1} parent=0
    #allocation2 [shape = 'u8[16384]{0}', space=vmem, size = 0x4000, scoped, tag = 'output window, operand 0, single buffered']
    #allocation3 [shape = 's32[1]{0}', space=sflag, size = 0x4, scoped, tag = 'scoped memory for _bigram_lm_forward.1']
    %19 = vsyncpa [#allocation3], 0
    // Predicated region
    $region2: #{_bigram_lm_forward.1} parent=1 // pred_check
      _
    $region3: #{_bigram_lm_forward.1} parent=1 // pred_check_branch
      %21 = sbr.rel (0) target = $region5
    $region4: #{_bigram_lm_forward.1} parent=1 // pred_region
      _
    $region5: #{_bigram_lm_forward.1} parent=1 // pred_fallthru
      _
    // Predicated region
    $region6: #{_bigram_lm_forward.1} parent=1 // pred_check
      _
    $region7: #{_bigram_lm_forward.1} parent=1 // pred_check_branch
      %23 = sbr.rel (0) target = $region9
    $region8: #{_bigram_lm_forward.1} parent=1 // pred_region
      _
    $region9: #{_bigram_lm_forward.1} parent=1 // pred_fallthru
      _
    // Predicated region
    $region10: #{_bigram_lm_forward.1} parent=1 // pred_check
      _
    $region11: #{_bigram_lm_forward.1} parent=1 // pred_check_branch
      %25 = sbr.rel (0) target = $region13
    $region12: #{_bigram_lm_forward.1} parent=1 // pred_region
      _
    $region13: #{_bigram_lm_forward.1} parent=1 // pred_fallthru
      _
    // Predicated region
    $region14: #{_bigram_lm_forward.1} parent=1 // pred_check
      _
    $region15: #{_bigram_lm_forward.1} parent=1 // pred_check_branch
      %27 = sbr.rel (0) target = $region17
    $region16: #{_bigram_lm_forward.1} parent=1 // pred_region
      _
    $region17: #{_bigram_lm_forward.1} parent=1 // pred_fallthru
      _
    // Predicated region
    $region18: #{_bigram_lm_forward.1} parent=1 // pred_check
      _
    $region19: #{_bigram_lm_forward.1} parent=1 // pred_check_branch
      %29 = sbr.rel (0) target = $region21
    $region20: #{_bigram_lm_forward.1} parent=1 // pred_region
      _
    $region21: #{_bigram_lm_forward.1} parent=1 // pred_fallthru
      _
    // Predicated region
    $region22: #{_bigram_lm_forward.1} parent=1 // pred_check
      _
    $region23: #{_bigram_lm_forward.1} parent=1 // pred_check_branch
      %31 = sbr.rel (0) target = $region25
    $region24: #{_bigram_lm_forward.1} parent=1 // pred_region
      _
    $region25: #{_bigram_lm_forward.1} parent=1 // pred_fallthru
      _
    // Predicated region
    $region26: #{_bigram_lm_forward.1} parent=1 // pred_check
      _
    $region27: #{_bigram_lm_forward.1} parent=1 // pred_check_branch
      %33 = sbr.rel (0) target = $region29
    $region28: #{_bigram_lm_forward.1} parent=1 // pred_region
      _
    $region29: #{_bigram_lm_forward.1} parent=1 // pred_fallthru
      _
    // Predicated region
    $region30: #{_bigram_lm_forward.1} parent=1 // pred_check
      _
    $region31: #{_bigram_lm_forward.1} parent=1 // pred_check_branch
      %35 = sbr.rel (0) target = $region33
    $region32: #{_bigram_lm_forward.1} parent=1 // pred_region
      _
    $region33: #{_bigram_lm_forward.1} parent=1 // pred_fallthru
      _
    // Predicated region
    $region34: #{_bigram_lm_forward.1} parent=1 // pred_check
      _
    $region35: #{_bigram_lm_forward.1} parent=1 // pred_check_branch
      %37 = sbr.rel (0) target = $region37
    $region36: #{_bigram_lm_forward.1} parent=1 // pred_region
      _
    $region37: #{_bigram_lm_forward.1} parent=1 // pred_fallthru
      _
    // Predicated region
    $region38: #{_bigram_lm_forward.1} parent=1 // pred_check
      _
    $region39: #{_bigram_lm_forward.1} parent=1 // pred_check_branch
      %39 = sbr.rel (0) target = $region41
    $region40: #{_bigram_lm_forward.1} parent=1 // pred_region
      _
    $region41: #{_bigram_lm_forward.1} parent=1 // pred_fallthru
      _
    // Predicated region
    $region42: #{_bigram_lm_forward.1} parent=1 // pred_check
      _
    $region43: #{_bigram_lm_forward.1} parent=1 // pred_check_branch
      %41 = sbr.rel (0) target = $region45
    $region44: #{_bigram_lm_forward.1} parent=1 // pred_region
      _
    $region45: #{_bigram_lm_forward.1} parent=1 // pred_fallthru
      _
    // Predicated region
    $region46: #{_bigram_lm_forward.1} parent=1 // pred_check
      _
    $region47: #{_bigram_lm_forward.1} parent=1 // pred_check_branch
      %43 = sbr.rel (0) target = $region49
    $region48: #{_bigram_lm_forward.1} parent=1 // pred_region
      _
    $region49: #{_bigram_lm_forward.1} parent=1 // pred_fallthru
      _
    // Predicated region
    $region50: #{_bigram_lm_forward.1} parent=1 // pred_check
      _
    $region51: #{_bigram_lm_forward.1} parent=1 // pred_check_branch
      %45 = sbr.rel (0) target = $region53
    $region52: #{_bigram_lm_forward.1} parent=1 // pred_region
      _
    $region53: #{_bigram_lm_forward.1} parent=1 // pred_fallthru
      _
    // Predicated region
    $region54: #{_bigram_lm_forward.1} parent=1 // pred_check
      _
    $region55: #{_bigram_lm_forward.1} parent=1 // pred_check_branch
      %47 = sbr.rel (0) target = $region57
    $region56: #{_bigram_lm_forward.1} parent=1 // pred_region
      _
    $region57: #{_bigram_lm_forward.1} parent=1 // pred_fallthru
      _
    %v49 = vld [vmem:[%s0] sm:$0xff]
    %v50 = vld [vmem:[%s0 + $0x8] sm:$0xff]
    %v51 = vld [vmem:[%s0 + $0x10] sm:$0xff]
    %v52 = vld [vmem:[%s0 + $0x18] sm:$0xff]
    %v53 = vlaneseq
    %v54 = vshrl.u32 %v53, 7
    %v55 = vadd.s32 %v54, 8
    %v56 = vlaneseq
    %v57 = vand.u32 %v56, 127
    %vm58 = vcmp.le.s32.totalorder %v57, %v54
    %vm59 = vcmp.le.s32.totalorder %v57, %v55
    %v60 = vsel %vm58, 1, 0
    %v61 = vsel %vm59, 1, 0
    %vm62 = vcmp.eq.s32.totalorder %v60, 1
    %vm63 = vcmp.eq.s32.totalorder %v61, 1
    %v64 = vld [vmem:[%s1] sm:$0x1]
    %v65 = vld [vmem:[%s2] sm:$0x1]
    %vm66 = vcmask 261120
    %v67 = vsel %vm66, %v49, 0.0
    %68 = vadd.xlane.f32.xlu0 %v67
    %v69 = vpop.xlane.xlu0 %68
    %v70 = vsel %vm66, %v50, 0.0
    %71 = vadd.xlane.f32.xlu0 %v70
    %v72 = vpop.xlane.xlu0 %71
    %v73 = vsel %vm66, %v51, 0.0
    %74 = vadd.xlane.f32.xlu0 %v73
    %v75 = vpop.xlane.xlu0 %74
    %v76 = vsel %vm66, %v52, 0.0
    %77 = vadd.xlane.f32.xlu0 %v76
    %v78 = vpop.xlane.xlu0 %77
    %v79 = vrcp.pop 32.0
    %v80 = vmul.f32 %v69, %v79
    %v81 = vmul.f32 %v72, %v79
    %v82 = vmul.f32 %v75, %v79
    %v83 = vmul.f32 %v78, %v79
    %v84 = vsub.f32 %v49, %v80
    %v85 = vsub.f32 %v50, %v81
    %v86 = vsub.f32 %v51, %v82
    %v87 = vsub.f32 %v52, %v83
    %v88 = vmul.f32 %v84, %v84
    %v89 = vmul.f32 %v85, %v85
    %v90 = vmul.f32 %v86, %v86
    %v91 = vmul.f32 %v87, %v87
    %v92 = vsel %vm66, %v88, 0.0
    %93 = vadd.xlane.f32.xlu0 %v92
    %v94 = vpop.xlane.xlu0 %93
    %v95 = vsel %vm66, %v89, 0.0
    %96 = vadd.xlane.f32.xlu0 %v95
    %v97 = vpop.xlane.xlu0 %96
    %v98 = vsel %vm66, %v90, 0.0
    %99 = vadd.xlane.f32.xlu0 %v98
    %v100 = vpop.xlane.xlu0 %99
    %v101 = vsel %vm66, %v91, 0.0
    %102 = vadd.xlane.f32.xlu0 %v101
    %v103 = vpop.xlane.xlu0 %102
    %v104 = vmul.f32 %v94, %v79
    %v105 = vmul.f32 %v97, %v79
    %v106 = vmul.f32 %v100, %v79
    %v107 = vmul.f32 %v103, %v79
    %v108 = vadd.f32 %v104, 1e-05
    %v109 = vadd.f32 %v105, 1e-05
    %v110 = vadd.f32 %v106, 1e-05
    %v111 = vadd.f32 %v107, 1e-05
    %v112 = vrsqrt.pop %v108
    %v113 = vrsqrt.pop %v109
    %v114 = vrsqrt.pop %v110
    %v115 = vrsqrt.pop %v111
    %v116 = vmul.f32 %v84, %v112
    %v117 = vmul.f32 %v85, %v113
    %v118 = vmul.f32 %v86, %v114
    %v119 = vmul.f32 %v87, %v115
    %v121 = vlaneseq
    %v122 = vshrl.u32 %v121, 7
    %v123 = vsub.s32 0, %v122
    %v124 = vrot.slane %v64, %v123
    %v126 = vmul.f32 %v116, %v124
    %v127 = vmul.f32 %v117, %v124
    %v128 = vmul.f32 %v118, %v124
    %v129 = vmul.f32 %v119, %v124
    %v131 = vlaneseq
    %v132 = vshrl.u32 %v131, 7
    %v133 = vsub.s32 0, %v132
    %v134 = vrot.slane %v65, %v133
    %v136 = vadd.f32 %v126, %v134
    %v137 = vadd.f32 %v127, %v134
    %v138 = vadd.f32 %v128, %v134
    %v139 = vadd.f32 %v129, %v134
    %v140 = vld [vmem:[%s3] sm:$0xf]
    %v141 = vld [vmem:[%s3 + $0x4] sm:$0xf]
    %v142 = vld [vmem:[%s3 + $0x8] sm:$0xf]
    %v143 = vld [vmem:[%s3 + $0xc] sm:$0xf]
    %v144 = vpack.c.bf16 %v137, %v136
    %v145 = vpack.c.bf16 %v139, %v138
    %v150 = vunpack.c.l.b16 %v140
    %v151 = vunpack.c.l.b16 %v141
    %v152 = vunpack.c.l.b16 %v142
    %v153 = vunpack.c.l.b16 %v143
    %v154 = vpack.c.b16 %v151, %v150
    %v155 = vpack.c.b16 %v153, %v152
    %v159 = vsel %vm66, %v144, 0
    %v162 = vsel %vm66, %v145, 0
    %164 = vmatprep.subr.bf16.mxu0 0
    %165 = vmatpush1.bf16.msra.mxu0 %v154
    %166 = vmatprep.subr.bf16.mxu0 0
    %167 = vmatpush1.bf16.msra.mxu0 %v155
    %168 = vmatprep.subr.bf16.mxu0 0
    %169 = vmatpush1.bf16.msra.mxu0 0
    %170 = vmatprep.subr.bf16.mxu0 0
    %171 = vmatpush1.bf16.msra.mxu0 0
    %172 = vmatprep.subr.bf16.mxu0 0
    %173 = vmatpush1.bf16.msra.mxu0 0
    %174 = vmatprep.subr.bf16.mxu0 0
    %175 = vmatpush1.bf16.msra.mxu0 0
    %176 = vmatprep.subr.bf16.mxu0 0
    %177 = vmatpush1.bf16.msra.mxu0 0
    %178 = vmatprep.subr.bf16.mxu0 0
    %179 = vmatpush1.bf16.msra.mxu0 0
    %180 = vmatprep.subr.bf16.mxu0 0
    %181 = vmatpush1.bf16.msra.mxu0 0
    %182 = vmatprep.subr.bf16.mxu0 0
    %183 = vmatpush1.bf16.msra.mxu0 0
    %184 = vmatprep.subr.bf16.mxu0 0
    %185 = vmatpush1.bf16.msra.mxu0 0
    %186 = vmatprep.subr.bf16.mxu0 0
    %187 = vmatpush1.bf16.msra.mxu0 0
    %188 = vmatprep.subr.bf16.mxu0 0
    %189 = vmatpush1.bf16.msra.mxu0 0
    %190 = vmatprep.subr.bf16.mxu0 0
    %191 = vmatpush1.bf16.msra.mxu0 0
    %192 = vmatprep.subr.bf16.mxu0 0
    %193 = vmatpush1.bf16.msra.mxu0 0
    %194 = vmatprep.subr.bf16.mxu0 0
    %195 = vmatpush1.bf16.msra.mxu0 0
    %196 = vmatprep.mubr.bf16.mxu0 0
    %197 = vmatmul.mubr.bf16.gmra.mrb[0].mxu0 %v159
    %v198 = vpop.f32.mrb[0].mxu0
    %v199 = vadd.f32 0.0, %v198
    %v200 = vpop.f32.mrb[0].mxu0
    %v201 = vpop.f32.mrb[0].mxu0
    %v202 = vadd.f32 0.0, %v201
    %v203 = vpop.f32.mrb[0].mxu0
    %204 = vmatprep.mubr.bf16.mxu0 0
    %205 = vmatmul.mubr.bf16.gmra.mrb[0].mxu0 %v162
    %v206 = vpop.f32.mrb[0].mxu0
    %v207 = vadd.f32 0.0, %v206
    %v208 = vpop.f32.mrb[0].mxu0
    %v209 = vpop.f32.mrb[0].mxu0
    %v210 = vadd.f32 0.0, %v209
    %v211 = vpop.f32.mrb[0].mxu0
    %212 = vdwg.mxu0
    %v213 = vld [vmem:[%s4] sm:$0xf]
    %v214 = vld [vmem:[%s4 + $0x4] sm:$0xf]
    %v215 = vld [vmem:[%s4 + $0x8] sm:$0xf]
    %v216 = vld [vmem:[%s4 + $0xc] sm:$0xf]
    %219 = vrot.lane.b32.xlu0 %v199, 96
    %v220 = vpop.permute.xlu0 %219
    %221 = vrot.lane.b32.xlu0 %v202, 96
    %v222 = vpop.permute.xlu0 %221
    %vm223 = vcmask 64512
    %v224 = vsel %vm223, %v199, 0
    %v226 = vsel %vm223, %v202, 0
    %v228 = vsel %vm223, %v220, 0
    %v230 = vsel %vm223, %v222, 0
    %232 = vmatprep.subr.mxu0 0.0
    %233 = vmatpush1.xpose.msra.mxu0 %v228
    %234 = vmatprep.subr.mxu0 0.0
    %235 = vmatpush1.xpose.msra.mxu0 %v230
    %236 = vmatprep.subr.mxu0 0.0
    %237 = vmatpush1.xpose.msra.mxu0 0.0
    %238 = vmatprep.subr.mxu0 0.0
    %239 = vmatpush1.xpose.msra.mxu0 0.0
    %240 = vmatprep.subr.mxu0 0.0
    %241 = vmatpush1.xpose.msra.mxu0 0.0
    %242 = vmatprep.subr.mxu0 0.0
    %243 = vmatpush1.xpose.msra.mxu0 0.0
    %244 = vmatprep.subr.mxu0 0.0
    %245 = vmatpush1.xpose.msra.mxu0 0.0
    %246 = vmatprep.subr.mxu0 0.0
    %247 = vmatpush1.xpose.msra.mxu0 0.0
    %248 = vmatprep.subr.mxu0 0.0
    %249 = vmatpush1.xpose.msra.mxu0 0.0
    %250 = vmatprep.subr.mxu0 0.0
    %251 = vmatpush1.xpose.msra.mxu0 0.0
    %252 = vmatprep.subr.mxu0 0.0
    %253 = vmatpush1.xpose.msra.mxu0 0.0
    %254 = vmatprep.subr.mxu0 0.0
    %255 = vmatpush1.xpose.msra.mxu0 0.0
    %256 = vmatprep.subr.mxu0 0.0
    %257 = vmatpush1.xpose.msra.mxu0 0.0
    %258 = vmatprep.subr.mxu0 0.0
    %259 = vmatpush1.xpose.msra.mxu0 0.0
    %260 = vmatprep.subr.mxu0 0.0
    %261 = vmatpush1.xpose.msra.mxu0 0.0
    %262 = vmatprep.subr.mxu0 0.0
    %263 = vmatpush1.xpose.msra.mxu0 0.0
    %264 = vmatprep.subr.mxu0 0.0
    %265 = vmatpush1.xpose.msra.mxu0 0.0
    %266 = vmatprep.subr.mxu0 0.0
    %267 = vmatpush1.xpose.msra.mxu0 0.0
    %268 = vmatprep.subr.mxu0 0.0
    %269 = vmatpush1.xpose.msra.mxu0 0.0
    %270 = vmatprep.subr.mxu0 0.0
    %271 = vmatpush1.xpose.msra.mxu0 0.0
    %272 = vmatprep.subr.mxu0 0.0
    %273 = vmatpush1.xpose.msra.mxu0 0.0
    %274 = vmatprep.subr.mxu0 0.0
    %275 = vmatpush1.xpose.msra.mxu0 0.0
    %276 = vmatprep.subr.mxu0 0.0
    %277 = vmatpush1.xpose.msra.mxu0 0.0
    %278 = vmatprep.subr.mxu0 0.0
    %279 = vmatpush1.xpose.msra.mxu0 0.0
    %280 = vmatprep.subr.mxu0 0.0
    %281 = vmatpush1.xpose.msra.mxu0 0.0
    %282 = vmatprep.subr.mxu0 0.0
    %283 = vmatpush1.xpose.msra.mxu0 0.0
    %284 = vmatprep.subr.mxu0 0.0
    %285 = vmatpush1.xpose.msra.mxu0 0.0
    %286 = vmatprep.subr.mxu0 0.0
    %287 = vmatpush1.xpose.msra.mxu0 0.0
    %288 = vmatprep.subr.mxu0 0.0
    %289 = vmatpush1.xpose.msra.mxu0 0.0
    %290 = vmatprep.subr.mxu0 0.0
    %291 = vmatpush1.xpose.msra.mxu0 0.0
    %292 = vmatprep.subr.mxu0 0.0
    %293 = vmatpush1.xpose.msra.mxu0 0.0
    %294 = vmatprep.subr.mxu0 0.0
    %295 = vmatpush1.xpose.msra.mxu0 0.0
    %296 = vmatprep.mubr.f32.mxu0 0.0
    %297 = vmatmul.mubr.f32.gmra.mrb[0].mxu0 %v224
    %v298 = vpop.f32.mrb[0].mxu0
    %v299 = vadd.f32 0.0, %v298
    %v300 = vpop.f32.mrb[0].mxu0
    %301 = vmatprep.mubr.f32.mxu0 0.0
    %302 = vmatmul.mubr.f32.gmra.mrb[0].mxu0 %v226
    %v303 = vpop.f32.mrb[0].mxu0
    %v304 = vadd.f32 0.0, %v303
    %v305 = vpop.f32.mrb[0].mxu0
    %306 = vdwg.mxu0
    %309 = vrot.lane.b32.xlu0 %v207, 96
    %v310 = vpop.permute.xlu0 %309
    %311 = vrot.lane.b32.xlu0 %v210, 96
    %v312 = vpop.permute.xlu0 %311
    %v313 = vsel %vm223, %v207, 0
    %v315 = vsel %vm223, %v210, 0
    %v317 = vsel %vm223, %v310, 0
    %v319 = vsel %vm223, %v312, 0
    %321 = vmatprep.subr.mxu0 0.0
    %322 = vmatpush1.xpose.msra.mxu0 %v317
    %323 = vmatprep.subr.mxu0 0.0
    %324 = vmatpush1.xpose.msra.mxu0 %v319
    %325 = vmatprep.subr.mxu0 0.0
    %326 = vmatpush1.xpose.msra.mxu0 0.0
    %327 = vmatprep.subr.mxu0 0.0
    %328 = vmatpush1.xpose.msra.mxu0 0.0
    %329 = vmatprep.subr.mxu0 0.0
    %330 = vmatpush1.xpose.msra.mxu0 0.0
    %331 = vmatprep.subr.mxu0 0.0
    %332 = vmatpush1.xpose.msra.mxu0 0.0
    %333 = vmatprep.subr.mxu0 0.0
    %334 = vmatpush1.xpose.msra.mxu0 0.0
    %335 = vmatprep.subr.mxu0 0.0
    %336 = vmatpush1.xpose.msra.mxu0 0.0
    %337 = vmatprep.subr.mxu0 0.0
    %338 = vmatpush1.xpose.msra.mxu0 0.0
    %339 = vmatprep.subr.mxu0 0.0
    %340 = vmatpush1.xpose.msra.mxu0 0.0
    %341 = vmatprep.subr.mxu0 0.0
    %342 = vmatpush1.xpose.msra.mxu0 0.0
    %343 = vmatprep.subr.mxu0 0.0
    %344 = vmatpush1.xpose.msra.mxu0 0.0
    %345 = vmatprep.subr.mxu0 0.0
    %346 = vmatpush1.xpose.msra.mxu0 0.0
    %347 = vmatprep.subr.mxu0 0.0
    %348 = vmatpush1.xpose.msra.mxu0 0.0
    %349 = vmatprep.subr.mxu0 0.0
    %350 = vmatpush1.xpose.msra.mxu0 0.0
    %351 = vmatprep.subr.mxu0 0.0
    %352 = vmatpush1.xpose.msra.mxu0 0.0
    %353 = vmatprep.subr.mxu0 0.0
    %354 = vmatpush1.xpose.msra.mxu0 0.0
    %355 = vmatprep.subr.mxu0 0.0
    %356 = vmatpush1.xpose.msra.mxu0 0.0
    %357 = vmatprep.subr.mxu0 0.0
    %358 = vmatpush1.xpose.msra.mxu0 0.0
    %359 = vmatprep.subr.mxu0 0.0
    %360 = vmatpush1.xpose.msra.mxu0 0.0
    %361 = vmatprep.subr.mxu0 0.0
    %362 = vmatpush1.xpose.msra.mxu0 0.0
    %363 = vmatprep.subr.mxu0 0.0
    %364 = vmatpush1.xpose.msra.mxu0 0.0
    %365 = vmatprep.subr.mxu0 0.0
    %366 = vmatpush1.xpose.msra.mxu0 0.0
    %367 = vmatprep.subr.mxu0 0.0
    %368 = vmatpush1.xpose.msra.mxu0 0.0
    %369 = vmatprep.subr.mxu0 0.0
    %370 = vmatpush1.xpose.msra.mxu0 0.0
    %371 = vmatprep.subr.mxu0 0.0
    %372 = vmatpush1.xpose.msra.mxu0 0.0
    %373 = vmatprep.subr.mxu0 0.0
    %374 = vmatpush1.xpose.msra.mxu0 0.0
    %375 = vmatprep.subr.mxu0 0.0
    %376 = vmatpush1.xpose.msra.mxu0 0.0
    %377 = vmatprep.subr.mxu0 0.0
    %378 = vmatpush1.xpose.msra.mxu0 0.0
    %379 = vmatprep.subr.mxu0 0.0
    %380 = vmatpush1.xpose.msra.mxu0 0.0
    %381 = vmatprep.subr.mxu0 0.0
    %382 = vmatpush1.xpose.msra.mxu0 0.0
    %383 = vmatprep.subr.mxu0 0.0
    %384 = vmatpush1.xpose.msra.mxu0 0.0
    %385 = vmatprep.mubr.f32.mxu0 0.0
    %386 = vmatmul.mubr.f32.gmra.mrb[0].mxu0 %v313
    %v387 = vpop.f32.mrb[0].mxu0
    %v388 = vadd.f32 0.0, %v387
    %v389 = vpop.f32.mrb[0].mxu0
    %390 = vmatprep.mubr.f32.mxu0 0.0
    %391 = vmatmul.mubr.f32.gmra.mrb[0].mxu0 %v315
    %v392 = vpop.f32.mrb[0].mxu0
    %v393 = vadd.f32 0.0, %v392
    %v394 = vpop.f32.mrb[0].mxu0
    %395 = vdwg.mxu0
    %v396 = vsel %vm62, %v299, -1e+30
    %v397 = vsel %vm63, %v304, -1e+30
    %v398 = vsel %vm62, %v388, -1e+30
    %v399 = vsel %vm63, %v393, -1e+30
    %vm400 = vcmask 130048
    %v401 = vsel %vm400, %v396, -inf
    %402 = vmax.xlane.f32.xlu0 %v401
    %v403 = vpop.xlane.xlu0 %402
    %v404 = vsel %vm400, %v397, -inf
    %405 = vmax.xlane.f32.xlu0 %v404
    %v406 = vpop.xlane.xlu0 %405
    %v407 = vsel %vm400, %v398, -inf
    %408 = vmax.xlane.f32.xlu0 %v407
    %v409 = vpop.xlane.xlu0 %408
    %v410 = vsel %vm400, %v399, -inf
    %411 = vmax.xlane.f32.xlu0 %v410
    %v412 = vpop.xlane.xlu0 %411
    %v413 = vsub.f32 %v396, %v403
    %v414 = vsub.f32 %v397, %v406
    %v415 = vsub.f32 %v398, %v409
    %v416 = vsub.f32 %v399, %v412
    %v417 = vmul.f32 %v413, 1.442695
    %v418 = vpow.pop %v417
    %v419 = vmul.f32 %v414, 1.442695
    %v420 = vpow.pop %v419
    %v421 = vmul.f32 %v415, 1.442695
    %v422 = vpow.pop %v421
    %v423 = vmul.f32 %v416, 1.442695
    %v424 = vpow.pop %v423
    %v425 = vsel %vm400, %v418, 0.0
    %426 = vadd.xlane.f32.xlu0 %v425
    %v427 = vpop.xlane.xlu0 %426
    %v428 = vsel %vm400, %v420, 0.0
    %429 = vadd.xlane.f32.xlu0 %v428
    %v430 = vpop.xlane.xlu0 %429
    %v431 = vsel %vm400, %v422, 0.0
    %432 = vadd.xlane.f32.xlu0 %v431
    %v433 = vpop.xlane.xlu0 %432
    %v434 = vsel %vm400, %v424, 0.0
    %435 = vadd.xlane.f32.xlu0 %v434
    %v436 = vpop.xlane.xlu0 %435
    %v437 = vrcp.pop %v427
    %v438 = vrcp.pop %v430
    %v439 = vrcp.pop %v433
    %v440 = vrcp.pop %v436
    %v441 = vmul.f32 %v418, %v437
    %v442 = vmul.f32 %v420, %v438
    %v443 = vmul.f32 %v422, %v439
    %v444 = vmul.f32 %v424, %v440
    %445 = vrot.lane.b32.xlu0 %v199, 64
    %v446 = vpop.permute.xlu0 %445
    %447 = vrot.lane.b32.xlu0 %v202, 64
    %v448 = vpop.permute.xlu0 %447
    %v452 = vsel %vm400, %v441, 0
    %v455 = vsel %vm400, %v442, 0
    %457 = vmatprep.subr.mxu0 0.0
    %458 = vmatpush1.msra.mxu0 %v446
    %459 = vmatprep.subr.mxu0 0.0
    %460 = vmatpush1.msra.mxu0 %v448
    %461 = vmatprep.subr.mxu0 0.0
    %462 = vmatpush1.msra.mxu0 0.0
    %463 = vmatprep.subr.mxu0 0.0
    %464 = vmatpush1.msra.mxu0 0.0
    %465 = vmatprep.subr.mxu0 0.0
    %466 = vmatpush1.msra.mxu0 0.0
    %467 = vmatprep.subr.mxu0 0.0
    %468 = vmatpush1.msra.mxu0 0.0
    %469 = vmatprep.subr.mxu0 0.0
    %470 = vmatpush1.msra.mxu0 0.0
    %471 = vmatprep.subr.mxu0 0.0
    %472 = vmatpush1.msra.mxu0 0.0
    %473 = vmatprep.subr.mxu0 0.0
    %474 = vmatpush1.msra.mxu0 0.0
    %475 = vmatprep.subr.mxu0 0.0
    %476 = vmatpush1.msra.mxu0 0.0
    %477 = vmatprep.subr.mxu0 0.0
    %478 = vmatpush1.msra.mxu0 0.0
    %479 = vmatprep.subr.mxu0 0.0
    %480 = vmatpush1.msra.mxu0 0.0
    %481 = vmatprep.subr.mxu0 0.0
    %482 = vmatpush1.msra.mxu0 0.0
    %483 = vmatprep.subr.mxu0 0.0
    %484 = vmatpush1.msra.mxu0 0.0
    %485 = vmatprep.subr.mxu0 0.0
    %486 = vmatpush1.msra.mxu0 0.0
    %487 = vmatprep.subr.mxu0 0.0
    %488 = vmatpush1.msra.mxu0 0.0
    %489 = vmatprep.subr.mxu0 0.0
    %490 = vmatpush1.msra.mxu0 0.0
    %491 = vmatprep.subr.mxu0 0.0
    %492 = vmatpush1.msra.mxu0 0.0
    %493 = vmatprep.subr.mxu0 0.0
    %494 = vmatpush1.msra.mxu0 0.0
    %495 = vmatprep.subr.mxu0 0.0
    %496 = vmatpush1.msra.mxu0 0.0
    %497 = vmatprep.subr.mxu0 0.0
    %498 = vmatpush1.msra.mxu0 0.0
    %499 = vmatprep.subr.mxu0 0.0
    %500 = vmatpush1.msra.mxu0 0.0
    %501 = vmatprep.subr.mxu0 0.0
    %502 = vmatpush1.msra.mxu0 0.0
    %503 = vmatprep.subr.mxu0 0.0
    %504 = vmatpush1.msra.mxu0 0.0
    %505 = vmatprep.subr.mxu0 0.0
    %506 = vmatpush1.msra.mxu0 0.0
    %507 = vmatprep.subr.mxu0 0.0
    %508 = vmatpush1.msra.mxu0 0.0
    %509 = vmatprep.subr.mxu0 0.0
    %510 = vmatpush1.msra.mxu0 0.0
    %511 = vmatprep.subr.mxu0 0.0
    %512 = vmatpush1.msra.mxu0 0.0
    %513 = vmatprep.subr.mxu0 0.0
    %514 = vmatpush1.msra.mxu0 0.0
    %515 = vmatprep.subr.mxu0 0.0
    %516 = vmatpush1.msra.mxu0 0.0
    %517 = vmatprep.subr.mxu0 0.0
    %518 = vmatpush1.msra.mxu0 0.0
    %519 = vmatprep.subr.mxu0 0.0
    %520 = vmatpush1.msra.mxu0 0.0
    %521 = vmatprep.mubr.f32.mxu0 0.0
    %522 = vmatmul.mubr.f32.gmra.mrb[0].mxu0 %v452
    %v523 = vpop.f32.mrb[0].mxu0
    %v524 = vadd.f32 0.0, %v523
    %v525 = vpop.f32.mrb[0].mxu0
    %526 = vmatprep.mubr.f32.mxu0 0.0
    %527 = vmatmul.mubr.f32.gmra.mrb[0].mxu0 %v455
    %v528 = vpop.f32.mrb[0].mxu0
    %v529 = vadd.f32 0.0, %v528
    %v530 = vpop.f32.mrb[0].mxu0
    %531 = vdwg.mxu0
    %532 = vrot.lane.b32.xlu0 %v207, 64
    %v533 = vpop.permute.xlu0 %532
    %534 = vrot.lane.b32.xlu0 %v210, 64
    %v535 = vpop.permute.xlu0 %534
    %v539 = vsel %vm400, %v443, 0
    %v542 = vsel %vm400, %v444, 0
    %544 = vmatprep.subr.mxu0 0.0
    %545 = vmatpush1.msra.mxu0 %v533
    %546 = vmatprep.subr.mxu0 0.0
    %547 = vmatpush1.msra.mxu0 %v535
    %548 = vmatprep.subr.mxu0 0.0
    %549 = vmatpush1.msra.mxu0 0.0
    %550 = vmatprep.subr.mxu0 0.0
    %551 = vmatpush1.msra.mxu0 0.0
    %552 = vmatprep.subr.mxu0 0.0
    %553 = vmatpush1.msra.mxu0 0.0
    %554 = vmatprep.subr.mxu0 0.0
    %555 = vmatpush1.msra.mxu0 0.0
    %556 = vmatprep.subr.mxu0 0.0
    %557 = vmatpush1.msra.mxu0 0.0
    %558 = vmatprep.subr.mxu0 0.0
    %559 = vmatpush1.msra.mxu0 0.0
    %560 = vmatprep.subr.mxu0 0.0
    %561 = vmatpush1.msra.mxu0 0.0
    %562 = vmatprep.subr.mxu0 0.0
    %563 = vmatpush1.msra.mxu0 0.0
    %564 = vmatprep.subr.mxu0 0.0
    %565 = vmatpush1.msra.mxu0 0.0
    %566 = vmatprep.subr.mxu0 0.0
    %567 = vmatpush1.msra.mxu0 0.0
    %568 = vmatprep.subr.mxu0 0.0
    %569 = vmatpush1.msra.mxu0 0.0
    %570 = vmatprep.subr.mxu0 0.0
    %571 = vmatpush1.msra.mxu0 0.0
    %572 = vmatprep.subr.mxu0 0.0
    %573 = vmatpush1.msra.mxu0 0.0
    %574 = vmatprep.subr.mxu0 0.0
    %575 = vmatpush1.msra.mxu0 0.0
    %576 = vmatprep.subr.mxu0 0.0
    %577 = vmatpush1.msra.mxu0 0.0
    %578 = vmatprep.subr.mxu0 0.0
    %579 = vmatpush1.msra.mxu0 0.0
    %580 = vmatprep.subr.mxu0 0.0
    %581 = vmatpush1.msra.mxu0 0.0
    %582 = vmatprep.subr.mxu0 0.0
    %583 = vmatpush1.msra.mxu0 0.0
    %584 = vmatprep.subr.mxu0 0.0
    %585 = vmatpush1.msra.mxu0 0.0
    %586 = vmatprep.subr.mxu0 0.0
    %587 = vmatpush1.msra.mxu0 0.0
    %588 = vmatprep.subr.mxu0 0.0
    %589 = vmatpush1.msra.mxu0 0.0
    %590 = vmatprep.subr.mxu0 0.0
    %591 = vmatpush1.msra.mxu0 0.0
    %592 = vmatprep.subr.mxu0 0.0
    %593 = vmatpush1.msra.mxu0 0.0
    %594 = vmatprep.subr.mxu0 0.0
    %595 = vmatpush1.msra.mxu0 0.0
    %596 = vmatprep.subr.mxu0 0.0
    %597 = vmatpush1.msra.mxu0 0.0
    %598 = vmatprep.subr.mxu0 0.0
    %599 = vmatpush1.msra.mxu0 0.0
    %600 = vmatprep.subr.mxu0 0.0
    %601 = vmatpush1.msra.mxu0 0.0
    %602 = vmatprep.subr.mxu0 0.0
    %603 = vmatpush1.msra.mxu0 0.0
    %604 = vmatprep.subr.mxu0 0.0
    %605 = vmatpush1.msra.mxu0 0.0
    %606 = vmatprep.subr.mxu0 0.0
    %607 = vmatpush1.msra.mxu0 0.0
    %608 = vmatprep.mubr.f32.mxu0 0.0
    %609 = vmatmul.mubr.f32.gmra.mrb[0].mxu0 %v539
    %v610 = vpop.f32.mrb[0].mxu0
    %v611 = vadd.f32 0.0, %v610
    %v612 = vpop.f32.mrb[0].mxu0
    %613 = vmatprep.mubr.f32.mxu0 0.0
    %614 = vmatmul.mubr.f32.gmra.mrb[0].mxu0 %v542
    %v615 = vpop.f32.mrb[0].mxu0
    %v616 = vadd.f32 0.0, %v615
    %v617 = vpop.f32.mrb[0].mxu0
    %618 = vdwg.mxu0
    %v619 = vpack.c.bf16 %v529, %v524
    %v620 = vpack.c.bf16 %v616, %v611
    %621 = vrot.lane.b32.xlu0 %v199, 120
    %v622 = vpop.permute.xlu0 %621
    %623 = vrot.lane.b32.xlu0 %v202, 120
    %v624 = vpop.permute.xlu0 %623
    %625 = vrot.lane.b32.xlu0 %v199, 88
    %v626 = vpop.permute.xlu0 %625
    %627 = vrot.lane.b32.xlu0 %v202, 88
    %v628 = vpop.permute.xlu0 %627
    %v629 = vsel %vm223, %v622, 0
    %v631 = vsel %vm223, %v624, 0
    %v633 = vsel %vm223, %v626, 0
    %v635 = vsel %vm223, %v628, 0
    %637 = vmatprep.subr.mxu0 0.0
    %638 = vmatpush1.xpose.msra.mxu0 %v633
    %639 = vmatprep.subr.mxu0 0.0
    %640 = vmatpush1.xpose.msra.mxu0 %v635
    %641 = vmatprep.subr.mxu0 0.0
    %642 = vmatpush1.xpose.msra.mxu0 0.0
    %643 = vmatprep.subr.mxu0 0.0
    %644 = vmatpush1.xpose.msra.mxu0 0.0
    %645 = vmatprep.subr.mxu0 0.0
    %646 = vmatpush1.xpose.msra.mxu0 0.0
    %647 = vmatprep.subr.mxu0 0.0
    %648 = vmatpush1.xpose.msra.mxu0 0.0
    %649 = vmatprep.subr.mxu0 0.0
    %650 = vmatpush1.xpose.msra.mxu0 0.0
    %651 = vmatprep.subr.mxu0 0.0
    %652 = vmatpush1.xpose.msra.mxu0 0.0
    %653 = vmatprep.subr.mxu0 0.0
    %654 = vmatpush1.xpose.msra.mxu0 0.0
    %655 = vmatprep.subr.mxu0 0.0
    %656 = vmatpush1.xpose.msra.mxu0 0.0
    %657 = vmatprep.subr.mxu0 0.0
    %658 = vmatpush1.xpose.msra.mxu0 0.0
    %659 = vmatprep.subr.mxu0 0.0
    %660 = vmatpush1.xpose.msra.mxu0 0.0
    %661 = vmatprep.subr.mxu0 0.0
    %662 = vmatpush1.xpose.msra.mxu0 0.0
    %663 = vmatprep.subr.mxu0 0.0
    %664 = vmatpush1.xpose.msra.mxu0 0.0
    %665 = vmatprep.subr.mxu0 0.0
    %666 = vmatpush1.xpose.msra.mxu0 0.0
    %667 = vmatprep.subr.mxu0 0.0
    %668 = vmatpush1.xpose.msra.mxu0 0.0
    %669 = vmatprep.subr.mxu0 0.0
    %670 = vmatpush1.xpose.msra.mxu0 0.0
    %671 = vmatprep.subr.mxu0 0.0
    %672 = vmatpush1.xpose.msra.mxu0 0.0
    %673 = vmatprep.subr.mxu0 0.0
    %674 = vmatpush1.xpose.msra.mxu0 0.0
    %675 = vmatprep.subr.mxu0 0.0
    %676 = vmatpush1.xpose.msra.mxu0 0.0
    %677 = vmatprep.subr.mxu0 0.0
    %678 = vmatpush1.xpose.msra.mxu0 0.0
    %679 = vmatprep.subr.mxu0 0.0
    %680 = vmatpush1.xpose.msra.mxu0 0.0
    %681 = vmatprep.subr.mxu0 0.0
    %682 = vmatpush1.xpose.msra.mxu0 0.0
    %683 = vmatprep.subr.mxu0 0.0
    %684 = vmatpush1.xpose.msra.mxu0 0.0
    %685 = vmatprep.subr.mxu0 0.0
    %686 = vmatpush1.xpose.msra.mxu0 0.0
    %687 = vmatprep.subr.mxu0 0.0
    %688 = vmatpush1.xpose.msra.mxu0 0.0
    %689 = vmatprep.subr.mxu0 0.0
    %690 = vmatpush1.xpose.msra.mxu0 0.0
    %691 = vmatprep.subr.mxu0 0.0
    %692 = vmatpush1.xpose.msra.mxu0 0.0
    %693 = vmatprep.subr.mxu0 0.0
    %694 = vmatpush1.xpose.msra.mxu0 0.0
    %695 = vmatprep.subr.mxu0 0.0
    %696 = vmatpush1.xpose.msra.mxu0 0.0
    %697 = vmatprep.subr.mxu0 0.0
    %698 = vmatpush1.xpose.msra.mxu0 0.0
    %699 = vmatprep.subr.mxu0 0.0
    %700 = vmatpush1.xpose.msra.mxu0 0.0
    %701 = vmatprep.mubr.f32.mxu0 0.0
    %702 = vmatmul.mubr.f32.gmra.mrb[0].mxu0 %v629
    %v703 = vpop.f32.mrb[0].mxu0
    %v704 = vadd.f32 0.0, %v703
    %v705 = vpop.f32.mrb[0].mxu0
    %706 = vmatprep.mubr.f32.mxu0 0.0
    %707 = vmatmul.mubr.f32.gmra.mrb[0].mxu0 %v631
    %v708 = vpop.f32.mrb[0].mxu0
    %v709 = vadd.f32 0.0, %v708
    %v710 = vpop.f32.mrb[0].mxu0
    %711 = vdwg.mxu0
    %712 = vrot.lane.b32.xlu0 %v207, 120
    %v713 = vpop.permute.xlu0 %712
    %714 = vrot.lane.b32.xlu0 %v210, 120
    %v715 = vpop.permute.xlu0 %714
    %716 = vrot.lane.b32.xlu0 %v207, 88
    %v717 = vpop.permute.xlu0 %716
    %718 = vrot.lane.b32.xlu0 %v210, 88
    %v719 = vpop.permute.xlu0 %718
    %v720 = vsel %vm223, %v713, 0
    %v722 = vsel %vm223, %v715, 0
    %v724 = vsel %vm223, %v717, 0
    %v726 = vsel %vm223, %v719, 0
    %728 = vmatprep.subr.mxu0 0.0
    %729 = vmatpush1.xpose.msra.mxu0 %v724
    %730 = vmatprep.subr.mxu0 0.0
    %731 = vmatpush1.xpose.msra.mxu0 %v726
    %732 = vmatprep.subr.mxu0 0.0
    %733 = vmatpush1.xpose.msra.mxu0 0.0
    %734 = vmatprep.subr.mxu0 0.0
    %735 = vmatpush1.xpose.msra.mxu0 0.0
    %736 = vmatprep.subr.mxu0 0.0
    %737 = vmatpush1.xpose.msra.mxu0 0.0
    %738 = vmatprep.subr.mxu0 0.0
    %739 = vmatpush1.xpose.msra.mxu0 0.0
    %740 = vmatprep.subr.mxu0 0.0
    %741 = vmatpush1.xpose.msra.mxu0 0.0
    %742 = vmatprep.subr.mxu0 0.0
    %743 = vmatpush1.xpose.msra.mxu0 0.0
    %744 = vmatprep.subr.mxu0 0.0
    %745 = vmatpush1.xpose.msra.mxu0 0.0
    %746 = vmatprep.subr.mxu0 0.0
    %747 = vmatpush1.xpose.msra.mxu0 0.0
    %748 = vmatprep.subr.mxu0 0.0
    %749 = vmatpush1.xpose.msra.mxu0 0.0
    %750 = vmatprep.subr.mxu0 0.0
    %751 = vmatpush1.xpose.msra.mxu0 0.0
    %752 = vmatprep.subr.mxu0 0.0
    %753 = vmatpush1.xpose.msra.mxu0 0.0
    %754 = vmatprep.subr.mxu0 0.0
    %755 = vmatpush1.xpose.msra.mxu0 0.0
    %756 = vmatprep.subr.mxu0 0.0
    %757 = vmatpush1.xpose.msra.mxu0 0.0
    %758 = vmatprep.subr.mxu0 0.0
    %759 = vmatpush1.xpose.msra.mxu0 0.0
    %760 = vmatprep.subr.mxu0 0.0
    %761 = vmatpush1.xpose.msra.mxu0 0.0
    %762 = vmatprep.subr.mxu0 0.0
    %763 = vmatpush1.xpose.msra.mxu0 0.0
    %764 = vmatprep.subr.mxu0 0.0
    %765 = vmatpush1.xpose.msra.mxu0 0.0
    %766 = vmatprep.subr.mxu0 0.0
    %767 = vmatpush1.xpose.msra.mxu0 0.0
    %768 = vmatprep.subr.mxu0 0.0
    %769 = vmatpush1.xpose.msra.mxu0 0.0
    %770 = vmatprep.subr.mxu0 0.0
    %771 = vmatpush1.xpose.msra.mxu0 0.0
    %772 = vmatprep.subr.mxu0 0.0
    %773 = vmatpush1.xpose.msra.mxu0 0.0
    %774 = vmatprep.subr.mxu0 0.0
    %775 = vmatpush1.xpose.msra.mxu0 0.0
    %776 = vmatprep.subr.mxu0 0.0
    %777 = vmatpush1.xpose.msra.mxu0 0.0
    %778 = vmatprep.subr.mxu0 0.0
    %779 = vmatpush1.xpose.msra.mxu0 0.0
    %780 = vmatprep.subr.mxu0 0.0
    %781 = vmatpush1.xpose.msra.mxu0 0.0
    %782 = vmatprep.subr.mxu0 0.0
    %783 = vmatpush1.xpose.msra.mxu0 0.0
    %784 = vmatprep.subr.mxu0 0.0
    %785 = vmatpush1.xpose.msra.mxu0 0.0
    %786 = vmatprep.subr.mxu0 0.0
    %787 = vmatpush1.xpose.msra.mxu0 0.0
    %788 = vmatprep.subr.mxu0 0.0
    %789 = vmatpush1.xpose.msra.mxu0 0.0
    %790 = vmatprep.subr.mxu0 0.0
    %791 = vmatpush1.xpose.msra.mxu0 0.0
    %792 = vmatprep.mubr.f32.mxu0 0.0
    %793 = vmatmul.mubr.f32.gmra.mrb[0].mxu0 %v720
    %v794 = vpop.f32.mrb[0].mxu0
    %v795 = vadd.f32 0.0, %v794
    %v796 = vpop.f32.mrb[0].mxu0
    %797 = vmatprep.mubr.f32.mxu0 0.0
    %798 = vmatmul.mubr.f32.gmra.mrb[0].mxu0 %v722
    %v799 = vpop.f32.mrb[0].mxu0
    %v800 = vadd.f32 0.0, %v799
    %v801 = vpop.f32.mrb[0].mxu0
    %802 = vdwg.mxu0
    %v803 = vsel %vm62, %v704, -1e+30
    %v804 = vsel %vm63, %v709, -1e+30
    %v805 = vsel %vm62, %v795, -1e+30
    %v806 = vsel %vm63, %v800, -1e+30
    %v807 = vsel %vm400, %v803, -inf
    %808 = vmax.xlane.f32.xlu0 %v807
    %v809 = vpop.xlane.xlu0 %808
    %v810 = vsel %vm400, %v804, -inf
    %811 = vmax.xlane.f32.xlu0 %v810
    %v812 = vpop.xlane.xlu0 %811
    %v813 = vsel %vm400, %v805, -inf
    %814 = vmax.xlane.f32.xlu0 %v813
    %v815 = vpop.xlane.xlu0 %814
    %v816 = vsel %vm400, %v806, -inf
    %817 = vmax.xlane.f32.xlu0 %v816
    %v818 = vpop.xlane.xlu0 %817
    %v819 = vsub.f32 %v803, %v809
    %v820 = vsub.f32 %v804, %v812
    %v821 = vsub.f32 %v805, %v815
    %v822 = vsub.f32 %v806, %v818
    %v823 = vmul.f32 %v819, 1.442695
    %v824 = vpow.pop %v823
    %v825 = vmul.f32 %v820, 1.442695
    %v826 = vpow.pop %v825
    %v827 = vmul.f32 %v821, 1.442695
    %v828 = vpow.pop %v827
    %v829 = vmul.f32 %v822, 1.442695
    %v830 = vpow.pop %v829
    %v831 = vsel %vm400, %v824, 0.0
    %832 = vadd.xlane.f32.xlu0 %v831
    %v833 = vpop.xlane.xlu0 %832
    %v834 = vsel %vm400, %v826, 0.0
    %835 = vadd.xlane.f32.xlu0 %v834
    %v836 = vpop.xlane.xlu0 %835
    %v837 = vsel %vm400, %v828, 0.0
    %838 = vadd.xlane.f32.xlu0 %v837
    %v839 = vpop.xlane.xlu0 %838
    %v840 = vsel %vm400, %v830, 0.0
    %841 = vadd.xlane.f32.xlu0 %v840
    %v842 = vpop.xlane.xlu0 %841
    %v843 = vrcp.pop %v833
    %v844 = vrcp.pop %v836
    %v845 = vrcp.pop %v839
    %v846 = vrcp.pop %v842
    %v847 = vmul.f32 %v824, %v843
    %v848 = vmul.f32 %v826, %v844
    %v849 = vmul.f32 %v828, %v845
    %v850 = vmul.f32 %v830, %v846
    %851 = vrot.lane.b32.xlu0 %v199, 56
    %v852 = vpop.permute.xlu0 %851
    %853 = vrot.lane.b32.xlu0 %v202, 56
    %v854 = vpop.permute.xlu0 %853
    %v858 = vsel %vm400, %v847, 0
    %v861 = vsel %vm400, %v848, 0
    %863 = vmatprep.subr.mxu0 0.0
    %864 = vmatpush1.msra.mxu0 %v852
    %865 = vmatprep.subr.mxu0 0.0
    %866 = vmatpush1.msra.mxu0 %v854
    %867 = vmatprep.subr.mxu0 0.0
    %868 = vmatpush1.msra.mxu0 0.0
    %869 = vmatprep.subr.mxu0 0.0
    %870 = vmatpush1.msra.mxu0 0.0
    %871 = vmatprep.subr.mxu0 0.0
    %872 = vmatpush1.msra.mxu0 0.0
    %873 = vmatprep.subr.mxu0 0.0
    %874 = vmatpush1.msra.mxu0 0.0
    %875 = vmatprep.subr.mxu0 0.0
    %876 = vmatpush1.msra.mxu0 0.0
    %877 = vmatprep.subr.mxu0 0.0
    %878 = vmatpush1.msra.mxu0 0.0
    %879 = vmatprep.subr.mxu0 0.0
    %880 = vmatpush1.msra.mxu0 0.0
    %881 = vmatprep.subr.mxu0 0.0
    %882 = vmatpush1.msra.mxu0 0.0
    %883 = vmatprep.subr.mxu0 0.0
    %884 = vmatpush1.msra.mxu0 0.0
    %885 = vmatprep.subr.mxu0 0.0
    %886 = vmatpush1.msra.mxu0 0.0
    %887 = vmatprep.subr.mxu0 0.0
    %888 = vmatpush1.msra.mxu0 0.0
    %889 = vmatprep.subr.mxu0 0.0
    %890 = vmatpush1.msra.mxu0 0.0
    %891 = vmatprep.subr.mxu0 0.0
    %892 = vmatpush1.msra.mxu0 0.0
    %893 = vmatprep.subr.mxu0 0.0
    %894 = vmatpush1.msra.mxu0 0.0
    %895 = vmatprep.subr.mxu0 0.0
    %896 = vmatpush1.msra.mxu0 0.0
    %897 = vmatprep.subr.mxu0 0.0
    %898 = vmatpush1.msra.mxu0 0.0
    %899 = vmatprep.subr.mxu0 0.0
    %900 = vmatpush1.msra.mxu0 0.0
    %901 = vmatprep.subr.mxu0 0.0
    %902 = vmatpush1.msra.mxu0 0.0
    %903 = vmatprep.subr.mxu0 0.0
    %904 = vmatpush1.msra.mxu0 0.0
    %905 = vmatprep.subr.mxu0 0.0
    %906 = vmatpush1.msra.mxu0 0.0
    %907 = vmatprep.subr.mxu0 0.0
    %908 = vmatpush1.msra.mxu0 0.0
    %909 = vmatprep.subr.mxu0 0.0
    %910 = vmatpush1.msra.mxu0 0.0
    %911 = vmatprep.subr.mxu0 0.0
    %912 = vmatpush1.msra.mxu0 0.0
    %913 = vmatprep.subr.mxu0 0.0
    %914 = vmatpush1.msra.mxu0 0.0
    %915 = vmatprep.subr.mxu0 0.0
    %916 = vmatpush1.msra.mxu0 0.0
    %917 = vmatprep.subr.mxu0 0.0
    %918 = vmatpush1.msra.mxu0 0.0
    %919 = vmatprep.subr.mxu0 0.0
    %920 = vmatpush1.msra.mxu0 0.0
    %921 = vmatprep.subr.mxu0 0.0
    %922 = vmatpush1.msra.mxu0 0.0
    %923 = vmatprep.subr.mxu0 0.0
    %924 = vmatpush1.msra.mxu0 0.0
    %925 = vmatprep.subr.mxu0 0.0
    %926 = vmatpush1.msra.mxu0 0.0
    %927 = vmatprep.mubr.f32.mxu0 0.0
    %928 = vmatmul.mubr.f32.gmra.mrb[0].mxu0 %v858
    %v929 = vpop.f32.mrb[0].mxu0
    %v930 = vadd.f32 0.0, %v929
    %v931 = vpop.f32.mrb[0].mxu0
    %932 = vmatprep.mubr.f32.mxu0 0.0
    %933 = vmatmul.mubr.f32.gmra.mrb[0].mxu0 %v861
    %v934 = vpop.f32.mrb[0].mxu0
    %v935 = vadd.f32 0.0, %v934
    %v936 = vpop.f32.mrb[0].mxu0
    %937 = vdwg.mxu0
    %938 = vrot.lane.b32.xlu0 %v207, 56
    %v939 = vpop.permute.xlu0 %938
    %940 = vrot.lane.b32.xlu0 %v210, 56
    %v941 = vpop.permute.xlu0 %940
    %v945 = vsel %vm400, %v849, 0
    %v948 = vsel %vm400, %v850, 0
    %950 = vmatprep.subr.mxu0 0.0
    %951 = vmatpush1.msra.mxu0 %v939
    %952 = vmatprep.subr.mxu0 0.0
    %953 = vmatpush1.msra.mxu0 %v941
    %954 = vmatprep.subr.mxu0 0.0
    %955 = vmatpush1.msra.mxu0 0.0
    %956 = vmatprep.subr.mxu0 0.0
    %957 = vmatpush1.msra.mxu0 0.0
    %958 = vmatprep.subr.mxu0 0.0
    %959 = vmatpush1.msra.mxu0 0.0
    %960 = vmatprep.subr.mxu0 0.0
    %961 = vmatpush1.msra.mxu0 0.0
    %962 = vmatprep.subr.mxu0 0.0
    %963 = vmatpush1.msra.mxu0 0.0
    %964 = vmatprep.subr.mxu0 0.0
    %965 = vmatpush1.msra.mxu0 0.0
    %966 = vmatprep.subr.mxu0 0.0
    %967 = vmatpush1.msra.mxu0 0.0
    %968 = vmatprep.subr.mxu0 0.0
    %969 = vmatpush1.msra.mxu0 0.0
    %970 = vmatprep.subr.mxu0 0.0
    %971 = vmatpush1.msra.mxu0 0.0
    %972 = vmatprep.subr.mxu0 0.0
    %973 = vmatpush1.msra.mxu0 0.0
    %974 = vmatprep.subr.mxu0 0.0
    %975 = vmatpush1.msra.mxu0 0.0
    %976 = vmatprep.subr.mxu0 0.0
    %977 = vmatpush1.msra.mxu0 0.0
    %978 = vmatprep.subr.mxu0 0.0
    %979 = vmatpush1.msra.mxu0 0.0
    %980 = vmatprep.subr.mxu0 0.0
    %981 = vmatpush1.msra.mxu0 0.0
    %982 = vmatprep.subr.mxu0 0.0
    %983 = vmatpush1.msra.mxu0 0.0
    %984 = vmatprep.subr.mxu0 0.0
    %985 = vmatpush1.msra.mxu0 0.0
    %986 = vmatprep.subr.mxu0 0.0
    %987 = vmatpush1.msra.mxu0 0.0
    %988 = vmatprep.subr.mxu0 0.0
    %989 = vmatpush1.msra.mxu0 0.0
    %990 = vmatprep.subr.mxu0 0.0
    %991 = vmatpush1.msra.mxu0 0.0
    %992 = vmatprep.subr.mxu0 0.0
    %993 = vmatpush1.msra.mxu0 0.0
    %994 = vmatprep.subr.mxu0 0.0
    %995 = vmatpush1.msra.mxu0 0.0
    %996 = vmatprep.subr.mxu0 0.0
    %997 = vmatpush1.msra.mxu0 0.0
    %998 = vmatprep.subr.mxu0 0.0
    %999 = vmatpush1.msra.mxu0 0.0
    %1000 = vmatprep.subr.mxu0 0.0
    %1001 = vmatpush1.msra.mxu0 0.0
    %1002 = vmatprep.subr.mxu0 0.0
    %1003 = vmatpush1.msra.mxu0 0.0
    %1004 = vmatprep.subr.mxu0 0.0
    %1005 = vmatpush1.msra.mxu0 0.0
    %1006 = vmatprep.subr.mxu0 0.0
    %1007 = vmatpush1.msra.mxu0 0.0
    %1008 = vmatprep.subr.mxu0 0.0
    %1009 = vmatpush1.msra.mxu0 0.0
    %1010 = vmatprep.subr.mxu0 0.0
    %1011 = vmatpush1.msra.mxu0 0.0
    %1012 = vmatprep.subr.mxu0 0.0
    %1013 = vmatpush1.msra.mxu0 0.0
    %1014 = vmatprep.mubr.f32.mxu0 0.0
    %1015 = vmatmul.mubr.f32.gmra.mrb[0].mxu0 %v945
    %v1016 = vpop.f32.mrb[0].mxu0
    %v1017 = vadd.f32 0.0, %v1016
    %v1018 = vpop.f32.mrb[0].mxu0
    %1019 = vmatprep.mubr.f32.mxu0 0.0
    %1020 = vmatmul.mubr.f32.gmra.mrb[0].mxu0 %v948
    %v1021 = vpop.f32.mrb[0].mxu0
    %v1022 = vadd.f32 0.0, %v1021
    %v1023 = vpop.f32.mrb[0].mxu0
    %1024 = vdwg.mxu0
    %v1025 = vpack.c.bf16 %v935, %v930
    %v1026 = vpack.c.bf16 %v1022, %v1017
    %v1028 = vsel %vm223, %v1025, 0
    %v1031 = vsel %vm223, %v1026, 0
    %vm1033 = vcmask 1043456
    %v1035 = vsel %vm1033, %v214, 0
    %1037 = vmatprep.subr.bf16.mxu0 0
    %1038 = vmatpush1.bf16.msra.mxu0 %v1035
    %1039 = vmatprep.subr.bf16.mxu0 0
    %1040 = vmatpush1.bf16.msra.mxu0 0
    %1041 = vmatprep.subr.bf16.mxu0 0
    %1042 = vmatpush1.bf16.msra.mxu0 0
    %1043 = vmatprep.subr.bf16.mxu0 0
    %1044 = vmatpush1.bf16.msra.mxu0 0
    %1045 = vmatprep.subr.bf16.mxu0 0
    %1046 = vmatpush1.bf16.msra.mxu0 0
    %1047 = vmatprep.subr.bf16.mxu0 0
    %1048 = vmatpush1.bf16.msra.mxu0 0
    %1049 = vmatprep.subr.bf16.mxu0 0
    %1050 = vmatpush1.bf16.msra.mxu0 0
    %1051 = vmatprep.subr.bf16.mxu0 0
    %1052 = vmatpush1.bf16.msra.mxu0 0
    %1053 = vmatprep.subr.bf16.mxu0 0
    %1054 = vmatpush1.bf16.msra.mxu0 0
    %1055 = vmatprep.subr.bf16.mxu0 0
    %1056 = vmatpush1.bf16.msra.mxu0 0
    %1057 = vmatprep.subr.bf16.mxu0 0
    %1058 = vmatpush1.bf16.msra.mxu0 0
    %1059 = vmatprep.subr.bf16.mxu0 0
    %1060 = vmatpush1.bf16.msra.mxu0 0
    %1061 = vmatprep.subr.bf16.mxu0 0
    %1062 = vmatpush1.bf16.msra.mxu0 0
    %1063 = vmatprep.subr.bf16.mxu0 0
    %1064 = vmatpush1.bf16.msra.mxu0 0
    %1065 = vmatprep.subr.bf16.mxu0 0
    %1066 = vmatpush1.bf16.msra.mxu0 0
    %1067 = vmatprep.subr.bf16.mxu0 0
    %1068 = vmatpush1.bf16.msra.mxu0 0
    %1069 = vmatprep.mubr.bf16.mxu0 0
    %1070 = vmatmul.mubr.bf16.gmra.mrb[0].mxu0 %v1028
    %v1071 = vpop.f32.mrb[0].mxu0
    %v1072 = vadd.f32 0.0, %v1071
    %v1073 = vpop.f32.mrb[0].mxu0
    %v1074 = vpop.f32.mrb[0].mxu0
    %v1075 = vadd.f32 0.0, %v1074
    %v1076 = vpop.f32.mrb[0].mxu0
    %1077 = vmatprep.mubr.bf16.mxu0 0
    %1078 = vmatmul.mubr.bf16.gmra.mrb[0].mxu0 %v1031
    %v1079 = vpop.f32.mrb[0].mxu0
    %v1080 = vadd.f32 0.0, %v1079
    %v1081 = vpop.f32.mrb[0].mxu0
    %v1082 = vpop.f32.mrb[0].mxu0
    %v1083 = vadd.f32 0.0, %v1082
    %v1084 = vpop.f32.mrb[0].mxu0
    %1085 = vdwg.mxu0
    %v1087 = vsel %vm223, %v619, 0
    %v1090 = vsel %vm223, %v620, 0
    %v1093 = vsel %vm1033, %v213, 0
    %1095 = vmatprep.subr.bf16.mxu0 0
    %1096 = vmatpush1.bf16.msra.mxu0 %v1093
    %1097 = vmatprep.subr.bf16.mxu0 0
    %1098 = vmatpush1.bf16.msra.mxu0 0
    %1099 = vmatprep.subr.bf16.mxu0 0
    %1100 = vmatpush1.bf16.msra.mxu0 0
    %1101 = vmatprep.subr.bf16.mxu0 0
    %1102 = vmatpush1.bf16.msra.mxu0 0
    %1103 = vmatprep.subr.bf16.mxu0 0
    %1104 = vmatpush1.bf16.msra.mxu0 0
    %1105 = vmatprep.subr.bf16.mxu0 0
    %1106 = vmatpush1.bf16.msra.mxu0 0
    %1107 = vmatprep.subr.bf16.mxu0 0
    %1108 = vmatpush1.bf16.msra.mxu0 0
    %1109 = vmatprep.subr.bf16.mxu0 0
    %1110 = vmatpush1.bf16.msra.mxu0 0
    %1111 = vmatprep.subr.bf16.mxu0 0
    %1112 = vmatpush1.bf16.msra.mxu0 0
    %1113 = vmatprep.subr.bf16.mxu0 0
    %1114 = vmatpush1.bf16.msra.mxu0 0
    %1115 = vmatprep.subr.bf16.mxu0 0
    %1116 = vmatpush1.bf16.msra.mxu0 0
    %1117 = vmatprep.subr.bf16.mxu0 0
    %1118 = vmatpush1.bf16.msra.mxu0 0
    %1119 = vmatprep.subr.bf16.mxu0 0
    %1120 = vmatpush1.bf16.msra.mxu0 0
    %1121 = vmatprep.subr.bf16.mxu0 0
    %1122 = vmatpush1.bf16.msra.mxu0 0
    %1123 = vmatprep.subr.bf16.mxu0 0
    %1124 = vmatpush1.bf16.msra.mxu0 0
    %1125 = vmatprep.subr.bf16.mxu0 0
    %1126 = vmatpush1.bf16.msra.mxu0 0
    %1127 = vmatprep.mubr.bf16.mxu0 0
    %1128 = vmatmul.mubr.bf16.gmra.mrb[0].mxu0 %v1087
    %v1129 = vpop.f32.mrb[0].mxu0
    %v1130 = vadd.f32 %v1072, %v1129
    %v1131 = vpop.f32.mrb[0].mxu0
    %v1132 = vpop.f32.mrb[0].mxu0
    %v1133 = vadd.f32 %v1075, %v1132
    %v1134 = vpop.f32.mrb[0].mxu0
    %1135 = vmatprep.mubr.bf16.mxu0 0
    %1136 = vmatmul.mubr.bf16.gmra.mrb[0].mxu0 %v1090
    %v1137 = vpop.f32.mrb[0].mxu0
    %v1138 = vadd.f32 %v1080, %v1137
    %v1139 = vpop.f32.mrb[0].mxu0
    %v1140 = vpop.f32.mrb[0].mxu0
    %v1141 = vadd.f32 %v1083, %v1140
    %v1142 = vpop.f32.mrb[0].mxu0
    %1143 = vdwg.mxu0
    %1144 = vrot.lane.b32.xlu0 %v199, 112
    %v1145 = vpop.permute.xlu0 %1144
    %1146 = vrot.lane.b32.xlu0 %v202, 112
    %v1147 = vpop.permute.xlu0 %1146
    %1148 = vrot.lane.b32.xlu0 %v199, 80
    %v1149 = vpop.permute.xlu0 %1148
    %1150 = vrot.lane.b32.xlu0 %v202, 80
    %v1151 = vpop.permute.xlu0 %1150
    %v1152 = vsel %vm223, %v1145, 0
    %v1154 = vsel %vm223, %v1147, 0
    %v1156 = vsel %vm223, %v1149, 0
    %v1158 = vsel %vm223, %v1151, 0
    %1160 = vmatprep.subr.mxu0 0.0
    %1161 = vmatpush1.xpose.msra.mxu0 %v1156
    %1162 = vmatprep.subr.mxu0 0.0
    %1163 = vmatpush1.xpose.msra.mxu0 %v1158
    %1164 = vmatprep.subr.mxu0 0.0
    %1165 = vmatpush1.xpose.msra.mxu0 0.0
    %1166 = vmatprep.subr.mxu0 0.0
    %1167 = vmatpush1.xpose.msra.mxu0 0.0
    %1168 = vmatprep.subr.mxu0 0.0
    %1169 = vmatpush1.xpose.msra.mxu0 0.0
    %1170 = vmatprep.subr.mxu0 0.0
    %1171 = vmatpush1.xpose.msra.mxu0 0.0
    %1172 = vmatprep.subr.mxu0 0.0
    %1173 = vmatpush1.xpose.msra.mxu0 0.0
    %1174 = vmatprep.subr.mxu0 0.0
    %1175 = vmatpush1.xpose.msra.mxu0 0.0
    %1176 = vmatprep.subr.mxu0 0.0
    %1177 = vmatpush1.xpose.msra.mxu0 0.0
    %1178 = vmatprep.subr.mxu0 0.0
    %1179 = vmatpush1.xpose.msra.mxu0 0.0
    %1180 = vmatprep.subr.mxu0 0.0
    %1181 = vmatpush1.xpose.msra.mxu0 0.0
    %1182 = vmatprep.subr.mxu0 0.0
    %1183 = vmatpush1.xpose.msra.mxu0 0.0
    %1184 = vmatprep.subr.mxu0 0.0
    %1185 = vmatpush1.xpose.msra.mxu0 0.0
    %1186 = vmatprep.subr.mxu0 0.0
    %1187 = vmatpush1.xpose.msra.mxu0 0.0
    %1188 = vmatprep.subr.mxu0 0.0
    %1189 = vmatpush1.xpose.msra.mxu0 0.0
    %1190 = vmatprep.subr.mxu0 0.0
    %1191 = vmatpush1.xpose.msra.mxu0 0.0
    %1192 = vmatprep.subr.mxu0 0.0
    %1193 = vmatpush1.xpose.msra.mxu0 0.0
    %1194 = vmatprep.subr.mxu0 0.0
    %1195 = vmatpush1.xpose.msra.mxu0 0.0
    %1196 = vmatprep.subr.mxu0 0.0
    %1197 = vmatpush1.xpose.msra.mxu0 0.0
    %1198 = vmatprep.subr.mxu0 0.0
    %1199 = vmatpush1.xpose.msra.mxu0 0.0
    %1200 = vmatprep.subr.mxu0 0.0
    %1201 = vmatpush1.xpose.msra.mxu0 0.0
    %1202 = vmatprep.subr.mxu0 0.0
    %1203 = vmatpush1.xpose.msra.mxu0 0.0
    %1204 = vmatprep.subr.mxu0 0.0
    %1205 = vmatpush1.xpose.msra.mxu0 0.0
    %1206 = vmatprep.subr.mxu0 0.0
    %1207 = vmatpush1.xpose.msra.mxu0 0.0
    %1208 = vmatprep.subr.mxu0 0.0
    %1209 = vmatpush1.xpose.msra.mxu0 0.0
    %1210 = vmatprep.subr.mxu0 0.0
    %1211 = vmatpush1.xpose.msra.mxu0 0.0
    %1212 = vmatprep.subr.mxu0 0.0
    %1213 = vmatpush1.xpose.msra.mxu0 0.0
    %1214 = vmatprep.subr.mxu0 0.0
    %1215 = vmatpush1.xpose.msra.mxu0 0.0
    %1216 = vmatprep.subr.mxu0 0.0
    %1217 = vmatpush1.xpose.msra.mxu0 0.0
    %1218 = vmatprep.subr.mxu0 0.0
    %1219 = vmatpush1.xpose.msra.mxu0 0.0
    %1220 = vmatprep.subr.mxu0 0.0
    %1221 = vmatpush1.xpose.msra.mxu0 0.0
    %1222 = vmatprep.subr.mxu0 0.0
    %1223 = vmatpush1.xpose.msra.mxu0 0.0
    %1224 = vmatprep.mubr.f32.mxu0 0.0
    %1225 = vmatmul.mubr.f32.gmra.mrb[0].mxu0 %v1152
    %v1226 = vpop.f32.mrb[0].mxu0
    %v1227 = vadd.f32 0.0, %v1226
    %v1228 = vpop.f32.mrb[0].mxu0
    %1229 = vmatprep.mubr.f32.mxu0 0.0
    %1230 = vmatmul.mubr.f32.gmra.mrb[0].mxu0 %v1154
    %v1231 = vpop.f32.mrb[0].mxu0
    %v1232 = vadd.f32 0.0, %v1231
    %v1233 = vpop.f32.mrb[0].mxu0
    %1234 = vdwg.mxu0
    %1235 = vrot.lane.b32.xlu0 %v207, 112
    %v1236 = vpop.permute.xlu0 %1235
    %1237 = vrot.lane.b32.xlu0 %v210, 112
    %v1238 = vpop.permute.xlu0 %1237
    %1239 = vrot.lane.b32.xlu0 %v207, 80
    %v1240 = vpop.permute.xlu0 %1239
    %1241 = vrot.lane.b32.xlu0 %v210, 80
    %v1242 = vpop.permute.xlu0 %1241
    %v1243 = vsel %vm223, %v1236, 0
    %v1245 = vsel %vm223, %v1238, 0
    %v1247 = vsel %vm223, %v1240, 0
    %v1249 = vsel %vm223, %v1242, 0
    %1251 = vmatprep.subr.mxu0 0.0
    %1252 = vmatpush1.xpose.msra.mxu0 %v1247
    %1253 = vmatprep.subr.mxu0 0.0
    %1254 = vmatpush1.xpose.msra.mxu0 %v1249
    %1255 = vmatprep.subr.mxu0 0.0
    %1256 = vmatpush1.xpose.msra.mxu0 0.0
    %1257 = vmatprep.subr.mxu0 0.0
    %1258 = vmatpush1.xpose.msra.mxu0 0.0
    %1259 = vmatprep.subr.mxu0 0.0
    %1260 = vmatpush1.xpose.msra.mxu0 0.0
    %1261 = vmatprep.subr.mxu0 0.0
    %1262 = vmatpush1.xpose.msra.mxu0 0.0
    %1263 = vmatprep.subr.mxu0 0.0
    %1264 = vmatpush1.xpose.msra.mxu0 0.0
    %1265 = vmatprep.subr.mxu0 0.0
    %1266 = vmatpush1.xpose.msra.mxu0 0.0
    %1267 = vmatprep.subr.mxu0 0.0
    %1268 = vmatpush1.xpose.msra.mxu0 0.0
    %1269 = vmatprep.subr.mxu0 0.0
    %1270 = vmatpush1.xpose.msra.mxu0 0.0
    %1271 = vmatprep.subr.mxu0 0.0
    %1272 = vmatpush1.xpose.msra.mxu0 0.0
    %1273 = vmatprep.subr.mxu0 0.0
    %1274 = vmatpush1.xpose.msra.mxu0 0.0
    %1275 = vmatprep.subr.mxu0 0.0
    %1276 = vmatpush1.xpose.msra.mxu0 0.0
    %1277 = vmatprep.subr.mxu0 0.0
    %1278 = vmatpush1.xpose.msra.mxu0 0.0
    %1279 = vmatprep.subr.mxu0 0.0
    %1280 = vmatpush1.xpose.msra.mxu0 0.0
    %1281 = vmatprep.subr.mxu0 0.0
    %1282 = vmatpush1.xpose.msra.mxu0 0.0
    %1283 = vmatprep.subr.mxu0 0.0
    %1284 = vmatpush1.xpose.msra.mxu0 0.0
    %1285 = vmatprep.subr.mxu0 0.0
    %1286 = vmatpush1.xpose.msra.mxu0 0.0
    %1287 = vmatprep.subr.mxu0 0.0
    %1288 = vmatpush1.xpose.msra.mxu0 0.0
    %1289 = vmatprep.subr.mxu0 0.0
    %1290 = vmatpush1.xpose.msra.mxu0 0.0
    %1291 = vmatprep.subr.mxu0 0.0
    %1292 = vmatpush1.xpose.msra.mxu0 0.0
    %1293 = vmatprep.subr.mxu0 0.0
    %1294 = vmatpush1.xpose.msra.mxu0 0.0
    %1295 = vmatprep.subr.mxu0 0.0
    %1296 = vmatpush1.xpose.msra.mxu0 0.0
    %1297 = vmatprep.subr.mxu0 0.0
    %1298 = vmatpush1.xpose.msra.mxu0 0.0
    %1299 = vmatprep.subr.mxu0 0.0
    %1300 = vmatpush1.xpose.msra.mxu0 0.0
    %1301 = vmatprep.subr.mxu0 0.0
    %1302 = vmatpush1.xpose.msra.mxu0 0.0
    %1303 = vmatprep.subr.mxu0 0.0
    %1304 = vmatpush1.xpose.msra.mxu0 0.0
    %1305 = vmatprep.subr.mxu0 0.0
    %1306 = vmatpush1.xpose.msra.mxu0 0.0
    %1307 = vmatprep.subr.mxu0 0.0
    %1308 = vmatpush1.xpose.msra.mxu0 0.0
    %1309 = vmatprep.subr.mxu0 0.0
    %1310 = vmatpush1.xpose.msra.mxu0 0.0
    %1311 = vmatprep.subr.mxu0 0.0
    %1312 = vmatpush1.xpose.msra.mxu0 0.0
    %1313 = vmatprep.subr.mxu0 0.0
    %1314 = vmatpush1.xpose.msra.mxu0 0.0
    %1315 = vmatprep.mubr.f32.mxu0 0.0
    %1316 = vmatmul.mubr.f32.gmra.mrb[0].mxu0 %v1243
    %v1317 = vpop.f32.mrb[0].mxu0
    %v1318 = vadd.f32 0.0, %v1317
    %v1319 = vpop.f32.mrb[0].mxu0
    %1320 = vmatprep.mubr.f32.mxu0 0.0
    %1321 = vmatmul.mubr.f32.gmra.mrb[0].mxu0 %v1245
    %v1322 = vpop.f32.mrb[0].mxu0
    %v1323 = vadd.f32 0.0, %v1322
    %v1324 = vpop.f32.mrb[0].mxu0
    %1325 = vdwg.mxu0
    %v1326 = vsel %vm62, %v1227, -1e+30
    %v1327 = vsel %vm63, %v1232, -1e+30
    %v1328 = vsel %vm62, %v1318, -1e+30
    %v1329 = vsel %vm63, %v1323, -1e+30
    %v1330 = vsel %vm400, %v1326, -inf
    %1331 = vmax.xlane.f32.xlu0 %v1330
    %v1332 = vpop.xlane.xlu0 %1331
    %v1333 = vsel %vm400, %v1327, -inf
    %1334 = vmax.xlane.f32.xlu0 %v1333
    %v1335 = vpop.xlane.xlu0 %1334
    %v1336 = vsel %vm400, %v1328, -inf
    %1337 = vmax.xlane.f32.xlu0 %v1336
    %v1338 = vpop.xlane.xlu0 %1337
    %v1339 = vsel %vm400, %v1329, -inf
    %1340 = vmax.xlane.f32.xlu0 %v1339
    %v1341 = vpop.xlane.xlu0 %1340
    %v1342 = vsub.f32 %v1326, %v1332
    %v1343 = vsub.f32 %v1327, %v1335
    %v1344 = vsub.f32 %v1328, %v1338
    %v1345 = vsub.f32 %v1329, %v1341
    %v1346 = vmul.f32 %v1342, 1.442695
    %v1347 = vpow.pop %v1346
    %v1348 = vmul.f32 %v1343, 1.442695
    %v1349 = vpow.pop %v1348
    %v1350 = vmul.f32 %v1344, 1.442695
    %v1351 = vpow.pop %v1350
    %v1352 = vmul.f32 %v1345, 1.442695
    %v1353 = vpow.pop %v1352
    %v1354 = vsel %vm400, %v1347, 0.0
    %1355 = vadd.xlane.f32.xlu0 %v1354
    %v1356 = vpop.xlane.xlu0 %1355
    %v1357 = vsel %vm400, %v1349, 0.0
    %1358 = vadd.xlane.f32.xlu0 %v1357
    %v1359 = vpop.xlane.xlu0 %1358
    %v1360 = vsel %vm400, %v1351, 0.0
    %1361 = vadd.xlane.f32.xlu0 %v1360
    %v1362 = vpop.xlane.xlu0 %1361
    %v1363 = vsel %vm400, %v1353, 0.0
    %1364 = vadd.xlane.f32.xlu0 %v1363
    %v1365 = vpop.xlane.xlu0 %1364
    %v1366 = vrcp.pop %v1356
    %v1367 = vrcp.pop %v1359
    %v1368 = vrcp.pop %v1362
    %v1369 = vrcp.pop %v1365
    %v1370 = vmul.f32 %v1347, %v1366
    %v1371 = vmul.f32 %v1349, %v1367
    %v1372 = vmul.f32 %v1351, %v1368
    %v1373 = vmul.f32 %v1353, %v1369
    %1374 = vrot.lane.b32.xlu0 %v199, 48
    %v1375 = vpop.permute.xlu0 %1374
    %1376 = vrot.lane.b32.xlu0 %v202, 48
    %v1377 = vpop.permute.xlu0 %1376
    %v1381 = vsel %vm400, %v1370, 0
    %v1384 = vsel %vm400, %v1371, 0
    %1386 = vmatprep.subr.mxu0 0.0
    %1387 = vmatpush1.msra.mxu0 %v1375
    %1388 = vmatprep.subr.mxu0 0.0
    %1389 = vmatpush1.msra.mxu0 %v1377
    %1390 = vmatprep.subr.mxu0 0.0
    %1391 = vmatpush1.msra.mxu0 0.0
    %1392 = vmatprep.subr.mxu0 0.0
    %1393 = vmatpush1.msra.mxu0 0.0
    %1394 = vmatprep.subr.mxu0 0.0
    %1395 = vmatpush1.msra.mxu0 0.0
    %1396 = vmatprep.subr.mxu0 0.0
    %1397 = vmatpush1.msra.mxu0 0.0
    %1398 = vmatprep.subr.mxu0 0.0
    %1399 = vmatpush1.msra.mxu0 0.0
    %1400 = vmatprep.subr.mxu0 0.0
    %1401 = vmatpush1.msra.mxu0 0.0
    %1402 = vmatprep.subr.mxu0 0.0
    %1403 = vmatpush1.msra.mxu0 0.0
    %1404 = vmatprep.subr.mxu0 0.0
    %1405 = vmatpush1.msra.mxu0 0.0
    %1406 = vmatprep.subr.mxu0 0.0
    %1407 = vmatpush1.msra.mxu0 0.0
    %1408 = vmatprep.subr.mxu0 0.0
    %1409 = vmatpush1.msra.mxu0 0.0
    %1410 = vmatprep.subr.mxu0 0.0
    %1411 = vmatpush1.msra.mxu0 0.0
    %1412 = vmatprep.subr.mxu0 0.0
    %1413 = vmatpush1.msra.mxu0 0.0
    %1414 = vmatprep.subr.mxu0 0.0
    %1415 = vmatpush1.msra.mxu0 0.0
    %1416 = vmatprep.subr.mxu0 0.0
    %1417 = vmatpush1.msra.mxu0 0.0
    %1418 = vmatprep.subr.mxu0 0.0
    %1419 = vmatpush1.msra.mxu0 0.0
    %1420 = vmatprep.subr.mxu0 0.0
    %1421 = vmatpush1.msra.mxu0 0.0
    %1422 = vmatprep.subr.mxu0 0.0
    %1423 = vmatpush1.msra.mxu0 0.0
    %1424 = vmatprep.subr.mxu0 0.0
    %1425 = vmatpush1.msra.mxu0 0.0
    %1426 = vmatprep.subr.mxu0 0.0
    %1427 = vmatpush1.msra.mxu0 0.0
    %1428 = vmatprep.subr.mxu0 0.0
    %1429 = vmatpush1.msra.mxu0 0.0
    %1430 = vmatprep.subr.mxu0 0.0
    %1431 = vmatpush1.msra.mxu0 0.0
    %1432 = vmatprep.subr.mxu0 0.0
    %1433 = vmatpush1.msra.mxu0 0.0
    %1434 = vmatprep.subr.mxu0 0.0
    %1435 = vmatpush1.msra.mxu0 0.0
    %1436 = vmatprep.subr.mxu0 0.0
    %1437 = vmatpush1.msra.mxu0 0.0
    %1438 = vmatprep.subr.mxu0 0.0
    %1439 = vmatpush1.msra.mxu0 0.0
    %1440 = vmatprep.subr.mxu0 0.0
    %1441 = vmatpush1.msra.mxu0 0.0
    %1442 = vmatprep.subr.mxu0 0.0
    %1443 = vmatpush1.msra.mxu0 0.0
    %1444 = vmatprep.subr.mxu0 0.0
    %1445 = vmatpush1.msra.mxu0 0.0
    %1446 = vmatprep.subr.mxu0 0.0
    %1447 = vmatpush1.msra.mxu0 0.0
    %1448 = vmatprep.subr.mxu0 0.0
    %1449 = vmatpush1.msra.mxu0 0.0
    %1450 = vmatprep.mubr.f32.mxu0 0.0
    %1451 = vmatmul.mubr.f32.gmra.mrb[0].mxu0 %v1381
    %v1452 = vpop.f32.mrb[0].mxu0
    %v1453 = vadd.f32 0.0, %v1452
    %v1454 = vpop.f32.mrb[0].mxu0
    %1455 = vmatprep.mubr.f32.mxu0 0.0
    %1456 = vmatmul.mubr.f32.gmra.mrb[0].mxu0 %v1384
    %v1457 = vpop.f32.mrb[0].mxu0
    %v1458 = vadd.f32 0.0, %v1457
    %v1459 = vpop.f32.mrb[0].mxu0
    %1460 = vdwg.mxu0
    %1461 = vrot.lane.b32.xlu0 %v207, 48
    %v1462 = vpop.permute.xlu0 %1461
    %1463 = vrot.lane.b32.xlu0 %v210, 48
    %v1464 = vpop.permute.xlu0 %1463
    %v1468 = vsel %vm400, %v1372, 0
    %v1471 = vsel %vm400, %v1373, 0
    %1473 = vmatprep.subr.mxu0 0.0
    %1474 = vmatpush1.msra.mxu0 %v1462
    %1475 = vmatprep.subr.mxu0 0.0
    %1476 = vmatpush1.msra.mxu0 %v1464
    %1477 = vmatprep.subr.mxu0 0.0
    %1478 = vmatpush1.msra.mxu0 0.0
    %1479 = vmatprep.subr.mxu0 0.0
    %1480 = vmatpush1.msra.mxu0 0.0
    %1481 = vmatprep.subr.mxu0 0.0
    %1482 = vmatpush1.msra.mxu0 0.0
    %1483 = vmatprep.subr.mxu0 0.0
    %1484 = vmatpush1.msra.mxu0 0.0
    %1485 = vmatprep.subr.mxu0 0.0
    %1486 = vmatpush1.msra.mxu0 0.0
    %1487 = vmatprep.subr.mxu0 0.0
    %1488 = vmatpush1.msra.mxu0 0.0
    %1489 = vmatprep.subr.mxu0 0.0
    %1490 = vmatpush1.msra.mxu0 0.0
    %1491 = vmatprep.subr.mxu0 0.0
    %1492 = vmatpush1.msra.mxu0 0.0
    %1493 = vmatprep.subr.mxu0 0.0
    %1494 = vmatpush1.msra.mxu0 0.0
    %1495 = vmatprep.subr.mxu0 0.0
    %1496 = vmatpush1.msra.mxu0 0.0
    %1497 = vmatprep.subr.mxu0 0.0
    %1498 = vmatpush1.msra.mxu0 0.0
    %1499 = vmatprep.subr.mxu0 0.0
    %1500 = vmatpush1.msra.mxu0 0.0
    %1501 = vmatprep.subr.mxu0 0.0
    %1502 = vmatpush1.msra.mxu0 0.0
    %1503 = vmatprep.subr.mxu0 0.0
    %1504 = vmatpush1.msra.mxu0 0.0
    %1505 = vmatprep.subr.mxu0 0.0
    %1506 = vmatpush1.msra.mxu0 0.0
    %1507 = vmatprep.subr.mxu0 0.0
    %1508 = vmatpush1.msra.mxu0 0.0
    %1509 = vmatprep.subr.mxu0 0.0
    %1510 = vmatpush1.msra.mxu0 0.0
    %1511 = vmatprep.subr.mxu0 0.0
    %1512 = vmatpush1.msra.mxu0 0.0
    %1513 = vmatprep.subr.mxu0 0.0
    %1514 = vmatpush1.msra.mxu0 0.0
    %1515 = vmatprep.subr.mxu0 0.0
    %1516 = vmatpush1.msra.mxu0 0.0
    %1517 = vmatprep.subr.mxu0 0.0
    %1518 = vmatpush1.msra.mxu0 0.0
    %1519 = vmatprep.subr.mxu0 0.0
    %1520 = vmatpush1.msra.mxu0 0.0
    %1521 = vmatprep.subr.mxu0 0.0
    %1522 = vmatpush1.msra.mxu0 0.0
    %1523 = vmatprep.subr.mxu0 0.0
    %1524 = vmatpush1.msra.mxu0 0.0
    %1525 = vmatprep.subr.mxu0 0.0
    %1526 = vmatpush1.msra.mxu0 0.0
    %1527 = vmatprep.subr.mxu0 0.0
    %1528 = vmatpush1.msra.mxu0 0.0
    %1529 = vmatprep.subr.mxu0 0.0
    %1530 = vmatpush1.msra.mxu0 0.0
    %1531 = vmatprep.subr.mxu0 0.0
    %1532 = vmatpush1.msra.mxu0 0.0
    %1533 = vmatprep.subr.mxu0 0.0
    %1534 = vmatpush1.msra.mxu0 0.0
    %1535 = vmatprep.subr.mxu0 0.0
    %1536 = vmatpush1.msra.mxu0 0.0
    %1537 = vmatprep.mubr.f32.mxu0 0.0
    %1538 = vmatmul.mubr.f32.gmra.mrb[0].mxu0 %v1468
    %v1539 = vpop.f32.mrb[0].mxu0
    %v1540 = vadd.f32 0.0, %v1539
    %v1541 = vpop.f32.mrb[0].mxu0
    %1542 = vmatprep.mubr.f32.mxu0 0.0
    %1543 = vmatmul.mubr.f32.gmra.mrb[0].mxu0 %v1471
    %v1544 = vpop.f32.mrb[0].mxu0
    %v1545 = vadd.f32 0.0, %v1544
    %v1546 = vpop.f32.mrb[0].mxu0
    %1547 = vdwg.mxu0
    %v1548 = vpack.c.bf16 %v1458, %v1453
    %v1549 = vpack.c.bf16 %v1545, %v1540
    %v1551 = vsel %vm223, %v1548, 0
    %v1554 = vsel %vm223, %v1549, 0
    %v1557 = vsel %vm1033, %v215, 0
    %1559 = vmatprep.subr.bf16.mxu0 0
    %1560 = vmatpush1.bf16.msra.mxu0 %v1557
    %1561 = vmatprep.subr.bf16.mxu0 0
    %1562 = vmatpush1.bf16.msra.mxu0 0
    %1563 = vmatprep.subr.bf16.mxu0 0
    %1564 = vmatpush1.bf16.msra.mxu0 0
    %1565 = vmatprep.subr.bf16.mxu0 0
    %1566 = vmatpush1.bf16.msra.mxu0 0
    %1567 = vmatprep.subr.bf16.mxu0 0
    %1568 = vmatpush1.bf16.msra.mxu0 0
    %1569 = vmatprep.subr.bf16.mxu0 0
    %1570 = vmatpush1.bf16.msra.mxu0 0
    %1571 = vmatprep.subr.bf16.mxu0 0
    %1572 = vmatpush1.bf16.msra.mxu0 0
    %1573 = vmatprep.subr.bf16.mxu0 0
    %1574 = vmatpush1.bf16.msra.mxu0 0
    %1575 = vmatprep.subr.bf16.mxu0 0
    %1576 = vmatpush1.bf16.msra.mxu0 0
    %1577 = vmatprep.subr.bf16.mxu0 0
    %1578 = vmatpush1.bf16.msra.mxu0 0
    %1579 = vmatprep.subr.bf16.mxu0 0
    %1580 = vmatpush1.bf16.msra.mxu0 0
    %1581 = vmatprep.subr.bf16.mxu0 0
    %1582 = vmatpush1.bf16.msra.mxu0 0
    %1583 = vmatprep.subr.bf16.mxu0 0
    %1584 = vmatpush1.bf16.msra.mxu0 0
    %1585 = vmatprep.subr.bf16.mxu0 0
    %1586 = vmatpush1.bf16.msra.mxu0 0
    %1587 = vmatprep.subr.bf16.mxu0 0
    %1588 = vmatpush1.bf16.msra.mxu0 0
    %1589 = vmatprep.subr.bf16.mxu0 0
    %1590 = vmatpush1.bf16.msra.mxu0 0
    %1591 = vmatprep.mubr.bf16.mxu0 0
    %1592 = vmatmul.mubr.bf16.gmra.mrb[0].mxu0 %v1551
    %v1593 = vpop.f32.mrb[0].mxu0
    %v1594 = vadd.f32 0.0, %v1593
    %v1595 = vpop.f32.mrb[0].mxu0
    %v1596 = vpop.f32.mrb[0].mxu0
    %v1597 = vadd.f32 0.0, %v1596
    %v1598 = vpop.f32.mrb[0].mxu0
    %1599 = vmatprep.mubr.bf16.mxu0 0
    %1600 = vmatmul.mubr.bf16.gmra.mrb[0].mxu0 %v1554
    %v1601 = vpop.f32.mrb[0].mxu0
    %v1602 = vadd.f32 0.0, %v1601
    %v1603 = vpop.f32.mrb[0].mxu0
    %v1604 = vpop.f32.mrb[0].mxu0
    %v1605 = vadd.f32 0.0, %v1604
    %v1606 = vpop.f32.mrb[0].mxu0
    %1607 = vdwg.mxu0
    %v1608 = vadd.f32 %v1130, %v1594
    %v1609 = vadd.f32 %v1133, %v1597
    %v1610 = vadd.f32 %v1138, %v1602
    %v1611 = vadd.f32 %v1141, %v1605
    %1612 = vrot.lane.b32.xlu0 %v199, 104
    %v1613 = vpop.permute.xlu0 %1612
    %1614 = vrot.lane.b32.xlu0 %v202, 104
    %v1615 = vpop.permute.xlu0 %1614
    %1616 = vrot.lane.b32.xlu0 %v199, 72
    %v1617 = vpop.permute.xlu0 %1616
    %1618 = vrot.lane.b32.xlu0 %v202, 72
    %v1619 = vpop.permute.xlu0 %1618
    %v1620 = vsel %vm223, %v1613, 0
    %v1622 = vsel %vm223, %v1615, 0
    %v1624 = vsel %vm223, %v1617, 0
    %v1626 = vsel %vm223, %v1619, 0
    %1628 = vmatprep.subr.mxu0 0.0
    %1629 = vmatpush1.xpose.msra.mxu0 %v1624
    %1630 = vmatprep.subr.mxu0 0.0
    %1631 = vmatpush1.xpose.msra.mxu0 %v1626
    %1632 = vmatprep.subr.mxu0 0.0
    %1633 = vmatpush1.xpose.msra.mxu0 0.0
    %1634 = vmatprep.subr.mxu0 0.0
    %1635 = vmatpush1.xpose.msra.mxu0 0.0
    %1636 = vmatprep.subr.mxu0 0.0
    %1637 = vmatpush1.xpose.msra.mxu0 0.0
    %1638 = vmatprep.subr.mxu0 0.0
    %1639 = vmatpush1.xpose.msra.mxu0 0.0
    %1640 = vmatprep.subr.mxu0 0.0
    %1641 = vmatpush1.xpose.msra.mxu0 0.0
    %1642 = vmatprep.subr.mxu0 0.0
    %1643 = vmatpush1.xpose.msra.mxu0 0.0
    %1644 = vmatprep.subr.mxu0 0.0
    %1645 = vmatpush1.xpose.msra.mxu0 0.0
    %1646 = vmatprep.subr.mxu0 0.0
    %1647 = vmatpush1.xpose.msra.mxu0 0.0
    %1648 = vmatprep.subr.mxu0 0.0
    %1649 = vmatpush1.xpose.msra.mxu0 0.0
    %1650 = vmatprep.subr.mxu0 0.0
    %1651 = vmatpush1.xpose.msra.mxu0 0.0
    %1652 = vmatprep.subr.mxu0 0.0
    %1653 = vmatpush1.xpose.msra.mxu0 0.0
    %1654 = vmatprep.subr.mxu0 0.0
    %1655 = vmatpush1.xpose.msra.mxu0 0.0
    %1656 = vmatprep.subr.mxu0 0.0
    %1657 = vmatpush1.xpose.msra.mxu0 0.0
    %1658 = vmatprep.subr.mxu0 0.0
    %1659 = vmatpush1.xpose.msra.mxu0 0.0
    %1660 = vmatprep.subr.mxu0 0.0
    %1661 = vmatpush1.xpose.msra.mxu0 0.0
    %1662 = vmatprep.subr.mxu0 0.0
    %1663 = vmatpush1.xpose.msra.mxu0 0.0
    %1664 = vmatprep.subr.mxu0 0.0
    %1665 = vmatpush1.xpose.msra.mxu0 0.0
    %1666 = vmatprep.subr.mxu0 0.0
    %1667 = vmatpush1.xpose.msra.mxu0 0.0
    %1668 = vmatprep.subr.mxu0 0.0
    %1669 = vmatpush1.xpose.msra.mxu0 0.0
    %1670 = vmatprep.subr.mxu0 0.0
    %1671 = vmatpush1.xpose.msra.mxu0 0.0
    %1672 = vmatprep.subr.mxu0 0.0
    %1673 = vmatpush1.xpose.msra.mxu0 0.0
    %1674 = vmatprep.subr.mxu0 0.0
    %1675 = vmatpush1.xpose.msra.mxu0 0.0
    %1676 = vmatprep.subr.mxu0 0.0
    %1677 = vmatpush1.xpose.msra.mxu0 0.0
    %1678 = vmatprep.subr.mxu0 0.0
    %1679 = vmatpush1.xpose.msra.mxu0 0.0
    %1680 = vmatprep.subr.mxu0 0.0
    %1681 = vmatpush1.xpose.msra.mxu0 0.0
    %1682 = vmatprep.subr.mxu0 0.0
    %1683 = vmatpush1.xpose.msra.mxu0 0.0
    %1684 = vmatprep.subr.mxu0 0.0
    %1685 = vmatpush1.xpose.msra.mxu0 0.0
    %1686 = vmatprep.subr.mxu0 0.0
    %1687 = vmatpush1.xpose.msra.mxu0 0.0
    %1688 = vmatprep.subr.mxu0 0.0
    %1689 = vmatpush1.xpose.msra.mxu0 0.0
    %1690 = vmatprep.subr.mxu0 0.0
    %1691 = vmatpush1.xpose.msra.mxu0 0.0
    %1692 = vmatprep.mubr.f32.mxu0 0.0
    %1693 = vmatmul.mubr.f32.gmra.mrb[0].mxu0 %v1620
    %v1694 = vpop.f32.mrb[0].mxu0
    %v1695 = vadd.f32 0.0, %v1694
    %v1696 = vpop.f32.mrb[0].mxu0
    %1697 = vmatprep.mubr.f32.mxu0 0.0
    %1698 = vmatmul.mubr.f32.gmra.mrb[0].mxu0 %v1622
    %v1699 = vpop.f32.mrb[0].mxu0
    %v1700 = vadd.f32 0.0, %v1699
    %v1701 = vpop.f32.mrb[0].mxu0
    %1702 = vdwg.mxu0
    %1703 = vrot.lane.b32.xlu0 %v207, 104
    %v1704 = vpop.permute.xlu0 %1703
    %1705 = vrot.lane.b32.xlu0 %v210, 104
    %v1706 = vpop.permute.xlu0 %1705
    %1707 = vrot.lane.b32.xlu0 %v207, 72
    %v1708 = vpop.permute.xlu0 %1707
    %1709 = vrot.lane.b32.xlu0 %v210, 72
    %v1710 = vpop.permute.xlu0 %1709
    %v1711 = vsel %vm223, %v1704, 0
    %v1713 = vsel %vm223, %v1706, 0
    %v1715 = vsel %vm223, %v1708, 0
    %v1717 = vsel %vm223, %v1710, 0
    %1719 = vmatprep.subr.mxu0 0.0
    %1720 = vmatpush1.xpose.msra.mxu0 %v1715
    %1721 = vmatprep.subr.mxu0 0.0
    %1722 = vmatpush1.xpose.msra.mxu0 %v1717
    %1723 = vmatprep.subr.mxu0 0.0
    %1724 = vmatpush1.xpose.msra.mxu0 0.0
    %1725 = vmatprep.subr.mxu0 0.0
    %1726 = vmatpush1.xpose.msra.mxu0 0.0
    %1727 = vmatprep.subr.mxu0 0.0
    %1728 = vmatpush1.xpose.msra.mxu0 0.0
    %1729 = vmatprep.subr.mxu0 0.0
    %1730 = vmatpush1.xpose.msra.mxu0 0.0
    %1731 = vmatprep.subr.mxu0 0.0
    %1732 = vmatpush1.xpose.msra.mxu0 0.0
    %1733 = vmatprep.subr.mxu0 0.0
    %1734 = vmatpush1.xpose.msra.mxu0 0.0
    %1735 = vmatprep.subr.mxu0 0.0
    %1736 = vmatpush1.xpose.msra.mxu0 0.0
    %1737 = vmatprep.subr.mxu0 0.0
    %1738 = vmatpush1.xpose.msra.mxu0 0.0
    %1739 = vmatprep.subr.mxu0 0.0
    %1740 = vmatpush1.xpose.msra.mxu0 0.0
    %1741 = vmatprep.subr.mxu0 0.0
    %1742 = vmatpush1.xpose.msra.mxu0 0.0
    %1743 = vmatprep.subr.mxu0 0.0
    %1744 = vmatpush1.xpose.msra.mxu0 0.0
    %1745 = vmatprep.subr.mxu0 0.0
    %1746 = vmatpush1.xpose.msra.mxu0 0.0
    %1747 = vmatprep.subr.mxu0 0.0
    %1748 = vmatpush1.xpose.msra.mxu0 0.0
    %1749 = vmatprep.subr.mxu0 0.0
    %1750 = vmatpush1.xpose.msra.mxu0 0.0
    %1751 = vmatprep.subr.mxu0 0.0
    %1752 = vmatpush1.xpose.msra.mxu0 0.0
    %1753 = vmatprep.subr.mxu0 0.0
    %1754 = vmatpush1.xpose.msra.mxu0 0.0
    %1755 = vmatprep.subr.mxu0 0.0
    %1756 = vmatpush1.xpose.msra.mxu0 0.0
    %1757 = vmatprep.subr.mxu0 0.0
    %1758 = vmatpush1.xpose.msra.mxu0 0.0
    %1759 = vmatprep.subr.mxu0 0.0
    %1760 = vmatpush1.xpose.msra.mxu0 0.0
    %1761 = vmatprep.subr.mxu0 0.0
    %1762 = vmatpush1.xpose.msra.mxu0 0.0
    %1763 = vmatprep.subr.mxu0 0.0
    %1764 = vmatpush1.xpose.msra.mxu0 0.0
    %1765 = vmatprep.subr.mxu0 0.0
    %1766 = vmatpush1.xpose.msra.mxu0 0.0
    %1767 = vmatprep.subr.mxu0 0.0
    %1768 = vmatpush1.xpose.msra.mxu0 0.0
    %1769 = vmatprep.subr.mxu0 0.0
    %1770 = vmatpush1.xpose.msra.mxu0 0.0
    %1771 = vmatprep.subr.mxu0 0.0
    %1772 = vmatpush1.xpose.msra.mxu0 0.0
    %1773 = vmatprep.subr.mxu0 0.0
    %1774 = vmatpush1.xpose.msra.mxu0 0.0
    %1775 = vmatprep.subr.mxu0 0.0
    %1776 = vmatpush1.xpose.msra.mxu0 0.0
    %1777 = vmatprep.subr.mxu0 0.0
    %1778 = vmatpush1.xpose.msra.mxu0 0.0
    %1779 = vmatprep.subr.mxu0 0.0
    %1780 = vmatpush1.xpose.msra.mxu0 0.0
    %1781 = vmatprep.subr.mxu0 0.0
    %1782 = vmatpush1.xpose.msra.mxu0 0.0
    %1783 = vmatprep.mubr.f32.mxu0 0.0
    %1784 = vmatmul.mubr.f32.gmra.mrb[0].mxu0 %v1711
    %v1785 = vpop.f32.mrb[0].mxu0
    %v1786 = vadd.f32 0.0, %v1785
    %v1787 = vpop.f32.mrb[0].mxu0
    %1788 = vmatprep.mubr.f32.mxu0 0.0
    %1789 = vmatmul.mubr.f32.gmra.mrb[0].mxu0 %v1713
    %v1790 = vpop.f32.mrb[0].mxu0
    %v1791 = vadd.f32 0.0, %v1790
    %v1792 = vpop.f32.mrb[0].mxu0
    %1793 = vdwg.mxu0
    %v1794 = vsel %vm62, %v1695, -1e+30
    %v1795 = vsel %vm63, %v1700, -1e+30
    %v1796 = vsel %vm62, %v1786, -1e+30
    %v1797 = vsel %vm63, %v1791, -1e+30
    %v1798 = vsel %vm400, %v1794, -inf
    %1799 = vmax.xlane.f32.xlu0 %v1798
    %v1800 = vpop.xlane.xlu0 %1799
    %v1801 = vsel %vm400, %v1795, -inf
    %1802 = vmax.xlane.f32.xlu0 %v1801
    %v1803 = vpop.xlane.xlu0 %1802
    %v1804 = vsel %vm400, %v1796, -inf
    %1805 = vmax.xlane.f32.xlu0 %v1804
    %v1806 = vpop.xlane.xlu0 %1805
    %v1807 = vsel %vm400, %v1797, -inf
    %1808 = vmax.xlane.f32.xlu0 %v1807
    %v1809 = vpop.xlane.xlu0 %1808
    %v1810 = vsub.f32 %v1794, %v1800
    %v1811 = vsub.f32 %v1795, %v1803
    %v1812 = vsub.f32 %v1796, %v1806
    %v1813 = vsub.f32 %v1797, %v1809
    %v1814 = vmul.f32 %v1810, 1.442695
    %v1815 = vpow.pop %v1814
    %v1816 = vmul.f32 %v1811, 1.442695
    %v1817 = vpow.pop %v1816
    %v1818 = vmul.f32 %v1812, 1.442695
    %v1819 = vpow.pop %v1818
    %v1820 = vmul.f32 %v1813, 1.442695
    %v1821 = vpow.pop %v1820
    %v1822 = vsel %vm400, %v1815, 0.0
    %1823 = vadd.xlane.f32.xlu0 %v1822
    %v1824 = vpop.xlane.xlu0 %1823
    %v1825 = vsel %vm400, %v1817, 0.0
    %1826 = vadd.xlane.f32.xlu0 %v1825
    %v1827 = vpop.xlane.xlu0 %1826
    %v1828 = vsel %vm400, %v1819, 0.0
    %1829 = vadd.xlane.f32.xlu0 %v1828
    %v1830 = vpop.xlane.xlu0 %1829
    %v1831 = vsel %vm400, %v1821, 0.0
    %1832 = vadd.xlane.f32.xlu0 %v1831
    %v1833 = vpop.xlane.xlu0 %1832
    %v1834 = vrcp.pop %v1824
    %v1835 = vrcp.pop %v1827
    %v1836 = vrcp.pop %v1830
    %v1837 = vrcp.pop %v1833
    %v1838 = vmul.f32 %v1815, %v1834
    %v1839 = vmul.f32 %v1817, %v1835
    %v1840 = vmul.f32 %v1819, %v1836
    %v1841 = vmul.f32 %v1821, %v1837
    %1842 = vrot.lane.b32.xlu0 %v199, 40
    %v1843 = vpop.permute.xlu0 %1842
    %1844 = vrot.lane.b32.xlu0 %v202, 40
    %v1845 = vpop.permute.xlu0 %1844
    %v1849 = vsel %vm400, %v1838, 0
    %v1852 = vsel %vm400, %v1839, 0
    %1854 = vmatprep.subr.mxu0 0.0
    %1855 = vmatpush1.msra.mxu0 %v1843
    %1856 = vmatprep.subr.mxu0 0.0
    %1857 = vmatpush1.msra.mxu0 %v1845
    %1858 = vmatprep.subr.mxu0 0.0
    %1859 = vmatpush1.msra.mxu0 0.0
    %1860 = vmatprep.subr.mxu0 0.0
    %1861 = vmatpush1.msra.mxu0 0.0
    %1862 = vmatprep.subr.mxu0 0.0
    %1863 = vmatpush1.msra.mxu0 0.0
    %1864 = vmatprep.subr.mxu0 0.0
    %1865 = vmatpush1.msra.mxu0 0.0
    %1866 = vmatprep.subr.mxu0 0.0
    %1867 = vmatpush1.msra.mxu0 0.0
    %1868 = vmatprep.subr.mxu0 0.0
    %1869 = vmatpush1.msra.mxu0 0.0
    %1870 = vmatprep.subr.mxu0 0.0
    %1871 = vmatpush1.msra.mxu0 0.0
    %1872 = vmatprep.subr.mxu0 0.0
    %1873 = vmatpush1.msra.mxu0 0.0
    %1874 = vmatprep.subr.mxu0 0.0
    %1875 = vmatpush1.msra.mxu0 0.0
    %1876 = vmatprep.subr.mxu0 0.0
    %1877 = vmatpush1.msra.mxu0 0.0
    %1878 = vmatprep.subr.mxu0 0.0
    %1879 = vmatpush1.msra.mxu0 0.0
    %1880 = vmatprep.subr.mxu0 0.0
    %1881 = vmatpush1.msra.mxu0 0.0
    %1882 = vmatprep.subr.mxu0 0.0
    %1883 = vmatpush1.msra.mxu0 0.0
    %1884 = vmatprep.subr.mxu0 0.0
    %1885 = vmatpush1.msra.mxu0 0.0
    %1886 = vmatprep.subr.mxu0 0.0
    %1887 = vmatpush1.msra.mxu0 0.0
    %1888 = vmatprep.subr.mxu0 0.0
    %1889 = vmatpush1.msra.mxu0 0.0
    %1890 = vmatprep.subr.mxu0 0.0
    %1891 = vmatpush1.msra.mxu0 0.0
    %1892 = vmatprep.subr.mxu0 0.0
    %1893 = vmatpush1.msra.mxu0 0.0
    %1894 = vmatprep.subr.mxu0 0.0
    %1895 = vmatpush1.msra.mxu0 0.0
    %1896 = vmatprep.subr.mxu0 0.0
    %1897 = vmatpush1.msra.mxu0 0.0
    %1898 = vmatprep.subr.mxu0 0.0
    %1899 = vmatpush1.msra.mxu0 0.0
    %1900 = vmatprep.subr.mxu0 0.0
    %1901 = vmatpush1.msra.mxu0 0.0
    %1902 = vmatprep.subr.mxu0 0.0
    %1903 = vmatpush1.msra.mxu0 0.0
    %1904 = vmatprep.subr.mxu0 0.0
    %1905 = vmatpush1.msra.mxu0 0.0
    %1906 = vmatprep.subr.mxu0 0.0
    %1907 = vmatpush1.msra.mxu0 0.0
    %1908 = vmatprep.subr.mxu0 0.0
    %1909 = vmatpush1.msra.mxu0 0.0
    %1910 = vmatprep.subr.mxu0 0.0
    %1911 = vmatpush1.msra.mxu0 0.0
    %1912 = vmatprep.subr.mxu0 0.0
    %1913 = vmatpush1.msra.mxu0 0.0
    %1914 = vmatprep.subr.mxu0 0.0
    %1915 = vmatpush1.msra.mxu0 0.0
    %1916 = vmatprep.subr.mxu0 0.0
    %1917 = vmatpush1.msra.mxu0 0.0
    %1918 = vmatprep.mubr.f32.mxu0 0.0
    %1919 = vmatmul.mubr.f32.gmra.mrb[0].mxu0 %v1849
    %v1920 = vpop.f32.mrb[0].mxu0
    %v1921 = vadd.f32 0.0, %v1920
    %v1922 = vpop.f32.mrb[0].mxu0
    %1923 = vmatprep.mubr.f32.mxu0 0.0
    %1924 = vmatmul.mubr.f32.gmra.mrb[0].mxu0 %v1852
    %v1925 = vpop.f32.mrb[0].mxu0
    %v1926 = vadd.f32 0.0, %v1925
    %v1927 = vpop.f32.mrb[0].mxu0
    %1928 = vdwg.mxu0
    %1929 = vrot.lane.b32.xlu0 %v207, 40
    %v1930 = vpop.permute.xlu0 %1929
    %1931 = vrot.lane.b32.xlu0 %v210, 40
    %v1932 = vpop.permute.xlu0 %1931
    %v1936 = vsel %vm400, %v1840, 0
    %v1939 = vsel %vm400, %v1841, 0
    %1941 = vmatprep.subr.mxu0 0.0
    %1942 = vmatpush1.msra.mxu0 %v1930
    %1943 = vmatprep.subr.mxu0 0.0
    %1944 = vmatpush1.msra.mxu0 %v1932
    %1945 = vmatprep.subr.mxu0 0.0
    %1946 = vmatpush1.msra.mxu0 0.0
    %1947 = vmatprep.subr.mxu0 0.0
    %1948 = vmatpush1.msra.mxu0 0.0
    %1949 = vmatprep.subr.mxu0 0.0
    %1950 = vmatpush1.msra.mxu0 0.0
    %1951 = vmatprep.subr.mxu0 0.0
    %1952 = vmatpush1.msra.mxu0 0.0
    %1953 = vmatprep.subr.mxu0 0.0
    %1954 = vmatpush1.msra.mxu0 0.0
    %1955 = vmatprep.subr.mxu0 0.0
    %1956 = vmatpush1.msra.mxu0 0.0
    %1957 = vmatprep.subr.mxu0 0.0
    %1958 = vmatpush1.msra.mxu0 0.0
    %1959 = vmatprep.subr.mxu0 0.0
    %1960 = vmatpush1.msra.mxu0 0.0
    %1961 = vmatprep.subr.mxu0 0.0
    %1962 = vmatpush1.msra.mxu0 0.0
    %1963 = vmatprep.subr.mxu0 0.0
    %1964 = vmatpush1.msra.mxu0 0.0
    %1965 = vmatprep.subr.mxu0 0.0
    %1966 = vmatpush1.msra.mxu0 0.0
    %1967 = vmatprep.subr.mxu0 0.0
    %1968 = vmatpush1.msra.mxu0 0.0
    %1969 = vmatprep.subr.mxu0 0.0
    %1970 = vmatpush1.msra.mxu0 0.0
    %1971 = vmatprep.subr.mxu0 0.0
    %1972 = vmatpush1.msra.mxu0 0.0
    %1973 = vmatprep.subr.mxu0 0.0
    %1974 = vmatpush1.msra.mxu0 0.0
    %1975 = vmatprep.subr.mxu0 0.0
    %1976 = vmatpush1.msra.mxu0 0.0
    %1977 = vmatprep.subr.mxu0 0.0
    %1978 = vmatpush1.msra.mxu0 0.0
    %1979 = vmatprep.subr.mxu0 0.0
    %1980 = vmatpush1.msra.mxu0 0.0
    %1981 = vmatprep.subr.mxu0 0.0
    %1982 = vmatpush1.msra.mxu0 0.0
    %1983 = vmatprep.subr.mxu0 0.0
    %1984 = vmatpush1.msra.mxu0 0.0
    %1985 = vmatprep.subr.mxu0 0.0
    %1986 = vmatpush1.msra.mxu0 0.0
    %1987 = vmatprep.subr.mxu0 0.0
    %1988 = vmatpush1.msra.mxu0 0.0
    %1989 = vmatprep.subr.mxu0 0.0
    %1990 = vmatpush1.msra.mxu0 0.0
    %1991 = vmatprep.subr.mxu0 0.0
    %1992 = vmatpush1.msra.mxu0 0.0
    %1993 = vmatprep.subr.mxu0 0.0
    %1994 = vmatpush1.msra.mxu0 0.0
    %1995 = vmatprep.subr.mxu0 0.0
    %1996 = vmatpush1.msra.mxu0 0.0
    %1997 = vmatprep.subr.mxu0 0.0
    %1998 = vmatpush1.msra.mxu0 0.0
    %1999 = vmatprep.subr.mxu0 0.0
    %2000 = vmatpush1.msra.mxu0 0.0
    %2001 = vmatprep.subr.mxu0 0.0
    %2002 = vmatpush1.msra.mxu0 0.0
    %2003 = vmatprep.subr.mxu0 0.0
    %2004 = vmatpush1.msra.mxu0 0.0
    %2005 = vmatprep.mubr.f32.mxu0 0.0
    %2006 = vmatmul.mubr.f32.gmra.mrb[0].mxu0 %v1936
    %v2007 = vpop.f32.mrb[0].mxu0
    %v2008 = vadd.f32 0.0, %v2007
    %v2009 = vpop.f32.mrb[0].mxu0
    %2010 = vmatprep.mubr.f32.mxu0 0.0
    %2011 = vmatmul.mubr.f32.gmra.mrb[0].mxu0 %v1939
    %v2012 = vpop.f32.mrb[0].mxu0
    %v2013 = vadd.f32 0.0, %v2012
    %v2014 = vpop.f32.mrb[0].mxu0
    %2015 = vdwg.mxu0
    %v2016 = vpack.c.bf16 %v1926, %v1921
    %v2017 = vpack.c.bf16 %v2013, %v2008
    %v2019 = vsel %vm223, %v2016, 0
    %v2022 = vsel %vm223, %v2017, 0
    %v2025 = vsel %vm1033, %v216, 0
    %2027 = vmatprep.subr.bf16.mxu0 0
    %2028 = vmatpush1.bf16.msra.mxu0 %v2025
    %2029 = vmatprep.subr.bf16.mxu0 0
    %2030 = vmatpush1.bf16.msra.mxu0 0
    %2031 = vmatprep.subr.bf16.mxu0 0
    %2032 = vmatpush1.bf16.msra.mxu0 0
    %2033 = vmatprep.subr.bf16.mxu0 0
    %2034 = vmatpush1.bf16.msra.mxu0 0
    %2035 = vmatprep.subr.bf16.mxu0 0
    %2036 = vmatpush1.bf16.msra.mxu0 0
    %2037 = vmatprep.subr.bf16.mxu0 0
    %2038 = vmatpush1.bf16.msra.mxu0 0
    %2039 = vmatprep.subr.bf16.mxu0 0
    %2040 = vmatpush1.bf16.msra.mxu0 0
    %2041 = vmatprep.subr.bf16.mxu0 0
    %2042 = vmatpush1.bf16.msra.mxu0 0
    %2043 = vmatprep.subr.bf16.mxu0 0
    %2044 = vmatpush1.bf16.msra.mxu0 0
    %2045 = vmatprep.subr.bf16.mxu0 0
    %2046 = vmatpush1.bf16.msra.mxu0 0
    %2047 = vmatprep.subr.bf16.mxu0 0
    %2048 = vmatpush1.bf16.msra.mxu0 0
    %2049 = vmatprep.subr.bf16.mxu0 0
    %2050 = vmatpush1.bf16.msra.mxu0 0
    %2051 = vmatprep.subr.bf16.mxu0 0
    %2052 = vmatpush1.bf16.msra.mxu0 0
    %2053 = vmatprep.subr.bf16.mxu0 0
    %2054 = vmatpush1.bf16.msra.mxu0 0
    %2055 = vmatprep.subr.bf16.mxu0 0
    %2056 = vmatpush1.bf16.msra.mxu0 0
    %2057 = vmatprep.subr.bf16.mxu0 0
    %2058 = vmatpush1.bf16.msra.mxu0 0
    %2059 = vmatprep.mubr.bf16.mxu0 0
    %2060 = vmatmul.mubr.bf16.gmra.mrb[0].mxu0 %v2019
    %v2061 = vpop.f32.mrb[0].mxu0
    %v2062 = vadd.f32 0.0, %v2061
    %v2063 = vpop.f32.mrb[0].mxu0
    %v2064 = vpop.f32.mrb[0].mxu0
    %v2065 = vadd.f32 0.0, %v2064
    %v2066 = vpop.f32.mrb[0].mxu0
    %2067 = vmatprep.mubr.bf16.mxu0 0
    %2068 = vmatmul.mubr.bf16.gmra.mrb[0].mxu0 %v2022
    %v2069 = vpop.f32.mrb[0].mxu0
    %v2070 = vadd.f32 0.0, %v2069
    %v2071 = vpop.f32.mrb[0].mxu0
    %v2072 = vpop.f32.mrb[0].mxu0
    %v2073 = vadd.f32 0.0, %v2072
    %v2074 = vpop.f32.mrb[0].mxu0
    %2075 = vdwg.mxu0
    %v2076 = vadd.f32 %v1608, %v2062
    %v2077 = vadd.f32 %v1609, %v2065
    %v2078 = vadd.f32 %v1610, %v2070
    %v2079 = vadd.f32 %v1611, %v2073
    %v2080 = vadd.f32 %v49, %v2076
    %v2081 = vadd.f32 %v50, %v2077
    %v2082 = vadd.f32 %v51, %v2078
    %v2083 = vadd.f32 %v52, %v2079
    %v2084 = vld [vmem:[%s5] sm:$0x1]
    %v2086 = vlaneseq
    %v2087 = vshrl.u32 %v2086, 7
    %v2088 = vsub.s32 0, %v2087
    %v2089 = vrot.slane %v2084, %v2088
    %v2091 = vadd.f32 %v2080, %v2089
    %v2092 = vadd.f32 %v2081, %v2089
    %v2093 = vadd.f32 %v2082, %v2089
    %v2094 = vadd.f32 %v2083, %v2089
    %v2095 = vld [vmem:[%s6] sm:$0x1]
    %v2096 = vld [vmem:[%s7] sm:$0x1]
    %v2097 = vsel %vm66, %v2091, 0.0
    %2098 = vadd.xlane.f32.xlu0 %v2097
    %v2099 = vpop.xlane.xlu0 %2098
    %v2100 = vsel %vm66, %v2092, 0.0
    %2101 = vadd.xlane.f32.xlu0 %v2100
    %v2102 = vpop.xlane.xlu0 %2101
    %v2103 = vsel %vm66, %v2093, 0.0
    %2104 = vadd.xlane.f32.xlu0 %v2103
    %v2105 = vpop.xlane.xlu0 %2104
    %v2106 = vsel %vm66, %v2094, 0.0
    %2107 = vadd.xlane.f32.xlu0 %v2106
    %v2108 = vpop.xlane.xlu0 %2107
    %v2109 = vmul.f32 %v2099, %v79
    %v2110 = vmul.f32 %v2102, %v79
    %v2111 = vmul.f32 %v2105, %v79
    %v2112 = vmul.f32 %v2108, %v79
    %v2113 = vsub.f32 %v2091, %v2109
    %v2114 = vsub.f32 %v2092, %v2110
    %v2115 = vsub.f32 %v2093, %v2111
    %v2116 = vsub.f32 %v2094, %v2112
    %v2117 = vmul.f32 %v2113, %v2113
    %v2118 = vmul.f32 %v2114, %v2114
    %v2119 = vmul.f32 %v2115, %v2115
    %v2120 = vmul.f32 %v2116, %v2116
    %v2121 = vsel %vm66, %v2117, 0.0
    %2122 = vadd.xlane.f32.xlu0 %v2121
    %v2123 = vpop.xlane.xlu0 %2122
    %v2124 = vsel %vm66, %v2118, 0.0
    %2125 = vadd.xlane.f32.xlu0 %v2124
    %v2126 = vpop.xlane.xlu0 %2125
    %v2127 = vsel %vm66, %v2119, 0.0
    %2128 = vadd.xlane.f32.xlu0 %v2127
    %v2129 = vpop.xlane.xlu0 %2128
    %v2130 = vsel %vm66, %v2120, 0.0
    %2131 = vadd.xlane.f32.xlu0 %v2130
    %v2132 = vpop.xlane.xlu0 %2131
    %v2133 = vmul.f32 %v2123, %v79
    %v2134 = vmul.f32 %v2126, %v79
    %v2135 = vmul.f32 %v2129, %v79
    %v2136 = vmul.f32 %v2132, %v79
    %v2137 = vadd.f32 %v2133, 1e-05
    %v2138 = vadd.f32 %v2134, 1e-05
    %v2139 = vadd.f32 %v2135, 1e-05
    %v2140 = vadd.f32 %v2136, 1e-05
    %v2141 = vrsqrt.pop %v2137
    %v2142 = vrsqrt.pop %v2138
    %v2143 = vrsqrt.pop %v2139
    %v2144 = vrsqrt.pop %v2140
    %v2145 = vmul.f32 %v2113, %v2141
    %v2146 = vmul.f32 %v2114, %v2142
    %v2147 = vmul.f32 %v2115, %v2143
    %v2148 = vmul.f32 %v2116, %v2144
    %v2150 = vlaneseq
    %v2151 = vshrl.u32 %v2150, 7
    %v2152 = vsub.s32 0, %v2151
    %v2153 = vrot.slane %v2095, %v2152
    %v2155 = vmul.f32 %v2145, %v2153
    %v2156 = vmul.f32 %v2146, %v2153
    %v2157 = vmul.f32 %v2147, %v2153
    %v2158 = vmul.f32 %v2148, %v2153
    %v2160 = vlaneseq
    %v2161 = vshrl.u32 %v2160, 7
    %v2162 = vsub.s32 0, %v2161
    %v2163 = vrot.slane %v2096, %v2162
    %v2165 = vadd.f32 %v2155, %v2163
    %v2166 = vadd.f32 %v2156, %v2163
    %v2167 = vadd.f32 %v2157, %v2163
    %v2168 = vadd.f32 %v2158, %v2163
    %v2169 = vld [vmem:[%s8] sm:$0xf]
    %v2170 = vld [vmem:[%s8 + $0x4] sm:$0xf]
    %v2171 = vld [vmem:[%s8 + $0x8] sm:$0xf]
    %v2172 = vld [vmem:[%s8 + $0xc] sm:$0xf]
    %v2173 = vpack.c.bf16 %v2166, %v2165
    %v2174 = vpack.c.bf16 %v2168, %v2167
    %v2175 = vld [vmem:[%s9] sm:$0x1]
    %v2177 = vlaneseq
    %v2178 = vshrl.u32 %v2177, 7
    %v2179 = vsub.s32 0, %v2178
    %v2180 = vrot.slane %v2175, %v2179
    %v2186 = vunpack.c.l.b16 %v2169
    %v2187 = vunpack.c.l.b16 %v2170
    %v2188 = vunpack.c.l.b16 %v2171
    %v2189 = vunpack.c.l.b16 %v2172
    %v2190 = vpack.c.b16 %v2187, %v2186
    %v2191 = vpack.c.b16 %v2189, %v2188
    %v2195 = vsel %vm66, %v2173, 0
    %v2198 = vsel %vm66, %v2174, 0
    %2200 = vmatprep.subr.bf16.mxu0 0
    %2201 = vmatpush1.bf16.msra.mxu0 %v2190
    %2202 = vmatprep.subr.bf16.mxu0 0
    %2203 = vmatpush1.bf16.msra.mxu0 %v2191
    %2204 = vmatprep.subr.bf16.mxu0 0
    %2205 = vmatpush1.bf16.msra.mxu0 0
    %2206 = vmatprep.subr.bf16.mxu0 0
    %2207 = vmatpush1.bf16.msra.mxu0 0
    %2208 = vmatprep.subr.bf16.mxu0 0
    %2209 = vmatpush1.bf16.msra.mxu0 0
    %2210 = vmatprep.subr.bf16.mxu0 0
    %2211 = vmatpush1.bf16.msra.mxu0 0
    %2212 = vmatprep.subr.bf16.mxu0 0
    %2213 = vmatpush1.bf16.msra.mxu0 0
    %2214 = vmatprep.subr.bf16.mxu0 0
    %2215 = vmatpush1.bf16.msra.mxu0 0
    %2216 = vmatprep.subr.bf16.mxu0 0
    %2217 = vmatpush1.bf16.msra.mxu0 0
    %2218 = vmatprep.subr.bf16.mxu0 0
    %2219 = vmatpush1.bf16.msra.mxu0 0
    %2220 = vmatprep.subr.bf16.mxu0 0
    %2221 = vmatpush1.bf16.msra.mxu0 0
    %2222 = vmatprep.subr.bf16.mxu0 0
    %2223 = vmatpush1.bf16.msra.mxu0 0
    %2224 = vmatprep.subr.bf16.mxu0 0
    %2225 = vmatpush1.bf16.msra.mxu0 0
    %2226 = vmatprep.subr.bf16.mxu0 0
    %2227 = vmatpush1.bf16.msra.mxu0 0
    %2228 = vmatprep.subr.bf16.mxu0 0
    %2229 = vmatpush1.bf16.msra.mxu0 0
    %2230 = vmatprep.subr.bf16.mxu0 0
    %2231 = vmatpush1.bf16.msra.mxu0 0
    %2232 = vmatprep.mubr.bf16.mxu0 0
    %2233 = vmatmul.mubr.bf16.gmra.mrb[0].mxu0 %v2195
    %v2234 = vpop.f32.mrb[0].mxu0
    %v2235 = vadd.f32 %v2180, %v2234
    %v2236 = vpop.f32.mrb[0].mxu0
    %v2237 = vpop.f32.mrb[0].mxu0
    %v2238 = vadd.f32 %v2180, %v2237
    %v2239 = vpop.f32.mrb[0].mxu0
    %2240 = vmatprep.mubr.bf16.mxu0 0
    %2241 = vmatmul.mubr.bf16.gmra.mrb[0].mxu0 %v2198
    %v2242 = vpop.f32.mrb[0].mxu0
    %v2243 = vadd.f32 %v2180, %v2242
    %v2244 = vpop.f32.mrb[0].mxu0
    %v2245 = vpop.f32.mrb[0].mxu0
    %v2246 = vadd.f32 %v2180, %v2245
    %v2247 = vpop.f32.mrb[0].mxu0
    %2248 = vdwg.mxu0
    %v2249 = vmax.f32 %v2235, 0.0
    %v2250 = vmax.f32 %v2238, 0.0
    %v2251 = vmax.f32 %v2243, 0.0
    %v2252 = vmax.f32 %v2246, 0.0
    %v2253 = vld [vmem:[%s10] sm:$0xf]
    %v2254 = vld [vmem:[%s10 + $0x4] sm:$0xf]
    %v2255 = vld [vmem:[%s10 + $0x8] sm:$0xf]
    %v2256 = vld [vmem:[%s10 + $0xc] sm:$0xf]
    %v2257 = vld [vmem:[%s10 + $0x10] sm:$0xf]
    %v2258 = vld [vmem:[%s10 + $0x14] sm:$0xf]
    %v2259 = vld [vmem:[%s10 + $0x18] sm:$0xf]
    %v2260 = vld [vmem:[%s10 + $0x1c] sm:$0xf]
    %v2261 = vld [vmem:[%s10 + $0x20] sm:$0xf]
    %v2262 = vld [vmem:[%s10 + $0x24] sm:$0xf]
    %v2263 = vld [vmem:[%s10 + $0x28] sm:$0xf]
    %v2264 = vld [vmem:[%s10 + $0x2c] sm:$0xf]
    %v2265 = vld [vmem:[%s10 + $0x30] sm:$0xf]
    %v2266 = vld [vmem:[%s10 + $0x34] sm:$0xf]
    %v2267 = vld [vmem:[%s10 + $0x38] sm:$0xf]
    %v2268 = vld [vmem:[%s10 + $0x3c] sm:$0xf]
    %v2269 = vpack.c.bf16 %v2250, %v2249
    %v2270 = vpack.c.bf16 %v2252, %v2251
    %v2287 = vunpack.c.l.b16 %v2253
    %v2288 = vunpack.c.l.b16 %v2254
    %v2289 = vunpack.c.l.b16 %v2255
    %v2290 = vunpack.c.l.b16 %v2256
    %v2291 = vunpack.c.l.b16 %v2257
    %v2292 = vunpack.c.l.b16 %v2258
    %v2293 = vunpack.c.l.b16 %v2259
    %v2294 = vunpack.c.l.b16 %v2260
    %v2295 = vunpack.c.l.b16 %v2261
    %v2296 = vunpack.c.l.b16 %v2262
    %v2297 = vunpack.c.l.b16 %v2263
    %v2298 = vunpack.c.l.b16 %v2264
    %v2299 = vunpack.c.l.b16 %v2265
    %v2300 = vunpack.c.l.b16 %v2266
    %v2301 = vunpack.c.l.b16 %v2267
    %v2302 = vunpack.c.l.b16 %v2268
    %v2303 = vpack.c.b16 %v2288, %v2287
    %v2304 = vpack.c.b16 %v2290, %v2289
    %v2305 = vpack.c.b16 %v2292, %v2291
    %v2306 = vpack.c.b16 %v2294, %v2293
    %v2307 = vpack.c.b16 %v2296, %v2295
    %v2308 = vpack.c.b16 %v2298, %v2297
    %v2309 = vpack.c.b16 %v2300, %v2299
    %v2310 = vpack.c.b16 %v2302, %v2301
    %2319 = vmatprep.subr.bf16.mxu0 0
    %2320 = vmatpush1.bf16.msra.mxu0 %v2303
    %2321 = vmatprep.subr.bf16.mxu0 0
    %2322 = vmatpush1.bf16.msra.mxu0 %v2304
    %2323 = vmatprep.subr.bf16.mxu0 0
    %2324 = vmatpush1.bf16.msra.mxu0 %v2305
    %2325 = vmatprep.subr.bf16.mxu0 0
    %2326 = vmatpush1.bf16.msra.mxu0 %v2306
    %2327 = vmatprep.subr.bf16.mxu0 0
    %2328 = vmatpush1.bf16.msra.mxu0 %v2307
    %2329 = vmatprep.subr.bf16.mxu0 0
    %2330 = vmatpush1.bf16.msra.mxu0 %v2308
    %2331 = vmatprep.subr.bf16.mxu0 0
    %2332 = vmatpush1.bf16.msra.mxu0 %v2309
    %2333 = vmatprep.subr.bf16.mxu0 0
    %2334 = vmatpush1.bf16.msra.mxu0 %v2310
    %2335 = vmatprep.subr.bf16.mxu0 0
    %2336 = vmatpush1.bf16.msra.mxu0 0
    %2337 = vmatprep.subr.bf16.mxu0 0
    %2338 = vmatpush1.bf16.msra.mxu0 0
    %2339 = vmatprep.subr.bf16.mxu0 0
    %2340 = vmatpush1.bf16.msra.mxu0 0
    %2341 = vmatprep.subr.bf16.mxu0 0
    %2342 = vmatpush1.bf16.msra.mxu0 0
    %2343 = vmatprep.subr.bf16.mxu0 0
    %2344 = vmatpush1.bf16.msra.mxu0 0
    %2345 = vmatprep.subr.bf16.mxu0 0
    %2346 = vmatpush1.bf16.msra.mxu0 0
    %2347 = vmatprep.subr.bf16.mxu0 0
    %2348 = vmatpush1.bf16.msra.mxu0 0
    %2349 = vmatprep.subr.bf16.mxu0 0
    %2350 = vmatpush1.bf16.msra.mxu0 0
    %2351 = vmatprep.mubr.bf16.mxu0 0
    %2352 = vmatmul.mubr.bf16.gmra.mrb[0].mxu0 %v2269
    %v2353 = vpop.f32.mrb[0].mxu0
    %v2354 = vadd.f32 0.0, %v2353
    %v2355 = vpop.f32.mrb[0].mxu0
    %v2356 = vpop.f32.mrb[0].mxu0
    %v2357 = vadd.f32 0.0, %v2356
    %v2358 = vpop.f32.mrb[0].mxu0
    %2359 = vmatprep.mubr.bf16.mxu0 0
    %2360 = vmatmul.mubr.bf16.gmra.mrb[0].mxu0 %v2270
    %v2361 = vpop.f32.mrb[0].mxu0
    %v2362 = vadd.f32 0.0, %v2361
    %v2363 = vpop.f32.mrb[0].mxu0
    %v2364 = vpop.f32.mrb[0].mxu0
    %v2365 = vadd.f32 0.0, %v2364
    %v2366 = vpop.f32.mrb[0].mxu0
    %2367 = vdwg.mxu0
    %v2368 = vadd.f32 %v2091, %v2354
    %v2369 = vadd.f32 %v2092, %v2357
    %v2370 = vadd.f32 %v2093, %v2362
    %v2371 = vadd.f32 %v2094, %v2365
    %v2372 = vld [vmem:[%s11] sm:$0x1]
    %v2374 = vlaneseq
    %v2375 = vshrl.u32 %v2374, 7
    %v2376 = vsub.s32 0, %v2375
    %v2377 = vrot.slane %v2372, %v2376
    %v2379 = vadd.f32 %v2368, %v2377
    %v2380 = vadd.f32 %v2369, %v2377
    %v2381 = vadd.f32 %v2370, %v2377
    %v2382 = vadd.f32 %v2371, %v2377
    %s2383 = scalar_lea.vmem %s1, 1
    %v2384 = vld [vmem:[%s2383] sm:$0x1]
    %s2385 = scalar_lea.vmem %s2, 1
    %v2386 = vld [vmem:[%s2385] sm:$0x1]
    %v2387 = vsel %vm66, %v2379, 0.0
    %2388 = vadd.xlane.f32.xlu0 %v2387
    %v2389 = vpop.xlane.xlu0 %2388
    %v2390 = vsel %vm66, %v2380, 0.0
    %2391 = vadd.xlane.f32.xlu0 %v2390
    %v2392 = vpop.xlane.xlu0 %2391
    %v2393 = vsel %vm66, %v2381, 0.0
    %2394 = vadd.xlane.f32.xlu0 %v2393
    %v2395 = vpop.xlane.xlu0 %2394
    %v2396 = vsel %vm66, %v2382, 0.0
    %2397 = vadd.xlane.f32.xlu0 %v2396
    %v2398 = vpop.xlane.xlu0 %2397
    %v2399 = vmul.f32 %v2389, %v79
    %v2400 = vmul.f32 %v2392, %v79
    %v2401 = vmul.f32 %v2395, %v79
    %v2402 = vmul.f32 %v2398, %v79
    %v2403 = vsub.f32 %v2379, %v2399
    %v2404 = vsub.f32 %v2380, %v2400
    %v2405 = vsub.f32 %v2381, %v2401
    %v2406 = vsub.f32 %v2382, %v2402
    %v2407 = vmul.f32 %v2403, %v2403
    %v2408 = vmul.f32 %v2404, %v2404
    %v2409 = vmul.f32 %v2405, %v2405
    %v2410 = vmul.f32 %v2406, %v2406
    %v2411 = vsel %vm66, %v2407, 0.0
    %2412 = vadd.xlane.f32.xlu0 %v2411
    %v2413 = vpop.xlane.xlu0 %2412
    %v2414 = vsel %vm66, %v2408, 0.0
    %2415 = vadd.xlane.f32.xlu0 %v2414
    %v2416 = vpop.xlane.xlu0 %2415
    %v2417 = vsel %vm66, %v2409, 0.0
    %2418 = vadd.xlane.f32.xlu0 %v2417
    %v2419 = vpop.xlane.xlu0 %2418
    %v2420 = vsel %vm66, %v2410, 0.0
    %2421 = vadd.xlane.f32.xlu0 %v2420
    %v2422 = vpop.xlane.xlu0 %2421
    %v2423 = vmul.f32 %v2413, %v79
    %v2424 = vmul.f32 %v2416, %v79
    %v2425 = vmul.f32 %v2419, %v79
    %v2426 = vmul.f32 %v2422, %v79
    %v2427 = vadd.f32 %v2423, 1e-05
    %v2428 = vadd.f32 %v2424, 1e-05
    %v2429 = vadd.f32 %v2425, 1e-05
    %v2430 = vadd.f32 %v2426, 1e-05
    %v2431 = vrsqrt.pop %v2427
    %v2432 = vrsqrt.pop %v2428
    %v2433 = vrsqrt.pop %v2429
    %v2434 = vrsqrt.pop %v2430
    %v2435 = vmul.f32 %v2403, %v2431
    %v2436 = vmul.f32 %v2404, %v2432
    %v2437 = vmul.f32 %v2405, %v2433
    %v2438 = vmul.f32 %v2406, %v2434
    %v2440 = vlaneseq
    %v2441 = vshrl.u32 %v2440, 7
    %v2442 = vsub.s32 0, %v2441
    %v2443 = vrot.slane %v2384, %v2442
    %v2445 = vmul.f32 %v2435, %v2443
    %v2446 = vmul.f32 %v2436, %v2443
    %v2447 = vmul.f32 %v2437, %v2443
    %v2448 = vmul.f32 %v2438, %v2443
    %v2450 = vlaneseq
    %v2451 = vshrl.u32 %v2450, 7
    %v2452 = vsub.s32 0, %v2451
    %v2453 = vrot.slane %v2386, %v2452
    %v2455 = vadd.f32 %v2445, %v2453
    %v2456 = vadd.f32 %v2446, %v2453
    %v2457 = vadd.f32 %v2447, %v2453
    %v2458 = vadd.f32 %v2448, %v2453
    %s2459 = scalar_lea.vmem %s3, 16
    %v2460 = vld [vmem:[%s2459] sm:$0xf]
    %v2461 = vld [vmem:[%s2459 + $0x4] sm:$0xf]
    %v2462 = vld [vmem:[%s2459 + $0x8] sm:$0xf]
    %v2463 = vld [vmem:[%s2459 + $0xc] sm:$0xf]
    %v2464 = vpack.c.bf16 %v2456, %v2455
    %v2465 = vpack.c.bf16 %v2458, %v2457
    %v2470 = vunpack.c.l.b16 %v2460
    %v2471 = vunpack.c.l.b16 %v2461
    %v2472 = vunpack.c.l.b16 %v2462
    %v2473 = vunpack.c.l.b16 %v2463
    %v2474 = vpack.c.b16 %v2471, %v2470
    %v2475 = vpack.c.b16 %v2473, %v2472
    %v2479 = vsel %vm66, %v2464, 0
    %v2482 = vsel %vm66, %v2465, 0
    %2484 = vmatprep.subr.bf16.mxu0 0
    %2485 = vmatpush1.bf16.msra.mxu0 %v2474
    %2486 = vmatprep.subr.bf16.mxu0 0
    %2487 = vmatpush1.bf16.msra.mxu0 %v2475
    %2488 = vmatprep.subr.bf16.mxu0 0
    %2489 = vmatpush1.bf16.msra.mxu0 0
    %2490 = vmatprep.subr.bf16.mxu0 0
    %2491 = vmatpush1.bf16.msra.mxu0 0
    %2492 = vmatprep.subr.bf16.mxu0 0
    %2493 = vmatpush1.bf16.msra.mxu0 0
    %2494 = vmatprep.subr.bf16.mxu0 0
    %2495 = vmatpush1.bf16.msra.mxu0 0
    %2496 = vmatprep.subr.bf16.mxu0 0
    %2497 = vmatpush1.bf16.msra.mxu0 0
    %2498 = vmatprep.subr.bf16.mxu0 0
    %2499 = vmatpush1.bf16.msra.mxu0 0
    %2500 = vmatprep.subr.bf16.mxu0 0
    %2501 = vmatpush1.bf16.msra.mxu0 0
    %2502 = vmatprep.subr.bf16.mxu0 0
    %2503 = vmatpush1.bf16.msra.mxu0 0
    %2504 = vmatprep.subr.bf16.mxu0 0
    %2505 = vmatpush1.bf16.msra.mxu0 0
    %2506 = vmatprep.subr.bf16.mxu0 0
    %2507 = vmatpush1.bf16.msra.mxu0 0
    %2508 = vmatprep.subr.bf16.mxu0 0
    %2509 = vmatpush1.bf16.msra.mxu0 0
    %2510 = vmatprep.subr.bf16.mxu0 0
    %2511 = vmatpush1.bf16.msra.mxu0 0
    %2512 = vmatprep.subr.bf16.mxu0 0
    %2513 = vmatpush1.bf16.msra.mxu0 0
    %2514 = vmatprep.subr.bf16.mxu0 0
    %2515 = vmatpush1.bf16.msra.mxu0 0
    %2516 = vmatprep.mubr.bf16.mxu0 0
    %2517 = vmatmul.mubr.bf16.gmra.mrb[0].mxu0 %v2479
    %v2518 = vpop.f32.mrb[0].mxu0
    %v2519 = vadd.f32 0.0, %v2518
    %v2520 = vpop.f32.mrb[0].mxu0
    %v2521 = vpop.f32.mrb[0].mxu0
    %v2522 = vadd.f32 0.0, %v2521
    %v2523 = vpop.f32.mrb[0].mxu0
    %2524 = vmatprep.mubr.bf16.mxu0 0
    %2525 = vmatmul.mubr.bf16.gmra.mrb[0].mxu0 %v2482
    %v2526 = vpop.f32.mrb[0].mxu0
    %v2527 = vadd.f32 0.0, %v2526
    %v2528 = vpop.f32.mrb[0].mxu0
    %v2529 = vpop.f32.mrb[0].mxu0
    %v2530 = vadd.f32 0.0, %v2529
    %v2531 = vpop.f32.mrb[0].mxu0
    %2532 = vdwg.mxu0
    %s2533 = scalar_lea.vmem %s4, 16
    %v2534 = vld [vmem:[%s2533] sm:$0xf]
    %v2535 = vld [vmem:[%s2533 + $0x4] sm:$0xf]
    %v2536 = vld [vmem:[%s2533 + $0x8] sm:$0xf]
    %v2537 = vld [vmem:[%s2533 + $0xc] sm:$0xf]
    %2540 = vrot.lane.b32.xlu0 %v2519, 96
    %v2541 = vpop.permute.xlu0 %2540
    %2542 = vrot.lane.b32.xlu0 %v2522, 96
    %v2543 = vpop.permute.xlu0 %2542
    %v2544 = vsel %vm223, %v2519, 0
    %v2546 = vsel %vm223, %v2522, 0
    %v2548 = vsel %vm223, %v2541, 0
    %v2550 = vsel %vm223, %v2543, 0
    %2552 = vmatprep.subr.mxu0 0.0
    %2553 = vmatpush1.xpose.msra.mxu0 %v2548
    %2554 = vmatprep.subr.mxu0 0.0
    %2555 = vmatpush1.xpose.msra.mxu0 %v2550
    %2556 = vmatprep.subr.mxu0 0.0
    %2557 = vmatpush1.xpose.msra.mxu0 0.0
    %2558 = vmatprep.subr.mxu0 0.0
    %2559 = vmatpush1.xpose.msra.mxu0 0.0
    %2560 = vmatprep.subr.mxu0 0.0
    %2561 = vmatpush1.xpose.msra.mxu0 0.0
    %2562 = vmatprep.subr.mxu0 0.0
    %2563 = vmatpush1.xpose.msra.mxu0 0.0
    %2564 = vmatprep.subr.mxu0 0.0
    %2565 = vmatpush1.xpose.msra.mxu0 0.0
    %2566 = vmatprep.subr.mxu0 0.0
    %2567 = vmatpush1.xpose.msra.mxu0 0.0
    %2568 = vmatprep.subr.mxu0 0.0
    %2569 = vmatpush1.xpose.msra.mxu0 0.0
    %2570 = vmatprep.subr.mxu0 0.0
    %2571 = vmatpush1.xpose.msra.mxu0 0.0
    %2572 = vmatprep.subr.mxu0 0.0
    %2573 = vmatpush1.xpose.msra.mxu0 0.0
    %2574 = vmatprep.subr.mxu0 0.0
    %2575 = vmatpush1.xpose.msra.mxu0 0.0
    %2576 = vmatprep.subr.mxu0 0.0
    %2577 = vmatpush1.xpose.msra.mxu0 0.0
    %2578 = vmatprep.subr.mxu0 0.0
    %2579 = vmatpush1.xpose.msra.mxu0 0.0
    %2580 = vmatprep.subr.mxu0 0.0
    %2581 = vmatpush1.xpose.msra.mxu0 0.0
    %2582 = vmatprep.subr.mxu0 0.0
    %2583 = vmatpush1.xpose.msra.mxu0 0.0
    %2584 = vmatprep.subr.mxu0 0.0
    %2585 = vmatpush1.xpose.msra.mxu0 0.0
    %2586 = vmatprep.subr.mxu0 0.0
    %2587 = vmatpush1.xpose.msra.mxu0 0.0
    %2588 = vmatprep.subr.mxu0 0.0
    %2589 = vmatpush1.xpose.msra.mxu0 0.0
    %2590 = vmatprep.subr.mxu0 0.0
    %2591 = vmatpush1.xpose.msra.mxu0 0.0
    %2592 = vmatprep.subr.mxu0 0.0
    %2593 = vmatpush1.xpose.msra.mxu0 0.0
    %2594 = vmatprep.subr.mxu0 0.0
    %2595 = vmatpush1.xpose.msra.mxu0 0.0
    %2596 = vmatprep.subr.mxu0 0.0
    %2597 = vmatpush1.xpose.msra.mxu0 0.0
    %2598 = vmatprep.subr.mxu0 0.0
    %2599 = vmatpush1.xpose.msra.mxu0 0.0
    %2600 = vmatprep.subr.mxu0 0.0
    %2601 = vmatpush1.xpose.msra.mxu0 0.0
    %2602 = vmatprep.subr.mxu0 0.0
    %2603 = vmatpush1.xpose.msra.mxu0 0.0
    %2604 = vmatprep.subr.mxu0 0.0
    %2605 = vmatpush1.xpose.msra.mxu0 0.0
    %2606 = vmatprep.subr.mxu0 0.0
    %2607 = vmatpush1.xpose.msra.mxu0 0.0
    %2608 = vmatprep.subr.mxu0 0.0
    %2609 = vmatpush1.xpose.msra.mxu0 0.0
    %2610 = vmatprep.subr.mxu0 0.0
    %2611 = vmatpush1.xpose.msra.mxu0 0.0
    %2612 = vmatprep.subr.mxu0 0.0
    %2613 = vmatpush1.xpose.msra.mxu0 0.0
    %2614 = vmatprep.subr.mxu0 0.0
    %2615 = vmatpush1.xpose.msra.mxu0 0.0
    %2616 = vmatprep.mubr.f32.mxu0 0.0
    %2617 = vmatmul.mubr.f32.gmra.mrb[0].mxu0 %v2544
    %v2618 = vpop.f32.mrb[0].mxu0
    %v2619 = vadd.f32 0.0, %v2618
    %v2620 = vpop.f32.mrb[0].mxu0
    %2621 = vmatprep.mubr.f32.mxu0 0.0
    %2622 = vmatmul.mubr.f32.gmra.mrb[0].mxu0 %v2546
    %v2623 = vpop.f32.mrb[0].mxu0
    %v2624 = vadd.f32 0.0, %v2623
    %v2625 = vpop.f32.mrb[0].mxu0
    %2626 = vdwg.mxu0
    %2629 = vrot.lane.b32.xlu0 %v2527, 96
    %v2630 = vpop.permute.xlu0 %2629
    %2631 = vrot.lane.b32.xlu0 %v2530, 96
    %v2632 = vpop.permute.xlu0 %2631
    %v2633 = vsel %vm223, %v2527, 0
    %v2635 = vsel %vm223, %v2530, 0
    %v2637 = vsel %vm223, %v2630, 0
    %v2639 = vsel %vm223, %v2632, 0
    %2641 = vmatprep.subr.mxu0 0.0
    %2642 = vmatpush1.xpose.msra.mxu0 %v2637
    %2643 = vmatprep.subr.mxu0 0.0
    %2644 = vmatpush1.xpose.msra.mxu0 %v2639
    %2645 = vmatprep.subr.mxu0 0.0
    %2646 = vmatpush1.xpose.msra.mxu0 0.0
    %2647 = vmatprep.subr.mxu0 0.0
    %2648 = vmatpush1.xpose.msra.mxu0 0.0
    %2649 = vmatprep.subr.mxu0 0.0
    %2650 = vmatpush1.xpose.msra.mxu0 0.0
    %2651 = vmatprep.subr.mxu0 0.0
    %2652 = vmatpush1.xpose.msra.mxu0 0.0
    %2653 = vmatprep.subr.mxu0 0.0
    %2654 = vmatpush1.xpose.msra.mxu0 0.0
    %2655 = vmatprep.subr.mxu0 0.0
    %2656 = vmatpush1.xpose.msra.mxu0 0.0
    %2657 = vmatprep.subr.mxu0 0.0
    %2658 = vmatpush1.xpose.msra.mxu0 0.0
    %2659 = vmatprep.subr.mxu0 0.0
    %2660 = vmatpush1.xpose.msra.mxu0 0.0
    %2661 = vmatprep.subr.mxu0 0.0
    %2662 = vmatpush1.xpose.msra.mxu0 0.0
    %2663 = vmatprep.subr.mxu0 0.0
    %2664 = vmatpush1.xpose.msra.mxu0 0.0
    %2665 = vmatprep.subr.mxu0 0.0
    %2666 = vmatpush1.xpose.msra.mxu0 0.0
    %2667 = vmatprep.subr.mxu0 0.0
    %2668 = vmatpush1.xpose.msra.mxu0 0.0
    %2669 = vmatprep.subr.mxu0 0.0
    %2670 = vmatpush1.xpose.msra.mxu0 0.0
    %2671 = vmatprep.subr.mxu0 0.0
    %2672 = vmatpush1.xpose.msra.mxu0 0.0
    %2673 = vmatprep.subr.mxu0 0.0
    %2674 = vmatpush1.xpose.msra.mxu0 0.0
    %2675 = vmatprep.subr.mxu0 0.0
    %2676 = vmatpush1.xpose.msra.mxu0 0.0
    %2677 = vmatprep.subr.mxu0 0.0
    %2678 = vmatpush1.xpose.msra.mxu0 0.0
    %2679 = vmatprep.subr.mxu0 0.0
    %2680 = vmatpush1.xpose.msra.mxu0 0.0
    %2681 = vmatprep.subr.mxu0 0.0
    %2682 = vmatpush1.xpose.msra.mxu0 0.0
    %2683 = vmatprep.subr.mxu0 0.0
    %2684 = vmatpush1.xpose.msra.mxu0 0.0
    %2685 = vmatprep.subr.mxu0 0.0
    %2686 = vmatpush1.xpose.msra.mxu0 0.0
    %2687 = vmatprep.subr.mxu0 0.0
    %2688 = vmatpush1.xpose.msra.mxu0 0.0
    %2689 = vmatprep.subr.mxu0 0.0
    %2690 = vmatpush1.xpose.msra.mxu0 0.0
    %2691 = vmatprep.subr.mxu0 0.0
    %2692 = vmatpush1.xpose.msra.mxu0 0.0
    %2693 = vmatprep.subr.mxu0 0.0
    %2694 = vmatpush1.xpose.msra.mxu0 0.0
    %2695 = vmatprep.subr.mxu0 0.0
    %2696 = vmatpush1.xpose.msra.mxu0 0.0
    %2697 = vmatprep.subr.mxu0 0.0
    %2698 = vmatpush1.xpose.msra.mxu0 0.0
    %2699 = vmatprep.subr.mxu0 0.0
    %2700 = vmatpush1.xpose.msra.mxu0 0.0
    %2701 = vmatprep.subr.mxu0 0.0
    %2702 = vmatpush1.xpose.msra.mxu0 0.0
    %2703 = vmatprep.subr.mxu0 0.0
    %2704 = vmatpush1.xpose.msra.mxu0 0.0
    %2705 = vmatprep.mubr.f32.mxu0 0.0
    %2706 = vmatmul.mubr.f32.gmra.mrb[0].mxu0 %v2633
    %v2707 = vpop.f32.mrb[0].mxu0
    %v2708 = vadd.f32 0.0, %v2707
    %v2709 = vpop.f32.mrb[0].mxu0
    %2710 = vmatprep.mubr.f32.mxu0 0.0
    %2711 = vmatmul.mubr.f32.gmra.mrb[0].mxu0 %v2635
    %v2712 = vpop.f32.mrb[0].mxu0
    %v2713 = vadd.f32 0.0, %v2712
    %v2714 = vpop.f32.mrb[0].mxu0
    %2715 = vdwg.mxu0
    %v2716 = vsel %vm62, %v2619, -1e+30
    %v2717 = vsel %vm63, %v2624, -1e+30
    %v2718 = vsel %vm62, %v2708, -1e+30
    %v2719 = vsel %vm63, %v2713, -1e+30
    %v2720 = vsel %vm400, %v2716, -inf
    %2721 = vmax.xlane.f32.xlu0 %v2720
    %v2722 = vpop.xlane.xlu0 %2721
    %v2723 = vsel %vm400, %v2717, -inf
    %2724 = vmax.xlane.f32.xlu0 %v2723
    %v2725 = vpop.xlane.xlu0 %2724
    %v2726 = vsel %vm400, %v2718, -inf
    %2727 = vmax.xlane.f32.xlu0 %v2726
    %v2728 = vpop.xlane.xlu0 %2727
    %v2729 = vsel %vm400, %v2719, -inf
    %2730 = vmax.xlane.f32.xlu0 %v2729
    %v2731 = vpop.xlane.xlu0 %2730
    %v2732 = vsub.f32 %v2716, %v2722
    %v2733 = vsub.f32 %v2717, %v2725
    %v2734 = vsub.f32 %v2718, %v2728
    %v2735 = vsub.f32 %v2719, %v2731
    %v2736 = vmul.f32 %v2732, 1.442695
    %v2737 = vpow.pop %v2736
    %v2738 = vmul.f32 %v2733, 1.442695
    %v2739 = vpow.pop %v2738
    %v2740 = vmul.f32 %v2734, 1.442695
    %v2741 = vpow.pop %v2740
    %v2742 = vmul.f32 %v2735, 1.442695
    %v2743 = vpow.pop %v2742
    %v2744 = vsel %vm400, %v2737, 0.0
    %2745 = vadd.xlane.f32.xlu0 %v2744
    %v2746 = vpop.xlane.xlu0 %2745
    %v2747 = vsel %vm400, %v2739, 0.0
    %2748 = vadd.xlane.f32.xlu0 %v2747
    %v2749 = vpop.xlane.xlu0 %2748
    %v2750 = vsel %vm400, %v2741, 0.0
    %2751 = vadd.xlane.f32.xlu0 %v2750
    %v2752 = vpop.xlane.xlu0 %2751
    %v2753 = vsel %vm400, %v2743, 0.0
    %2754 = vadd.xlane.f32.xlu0 %v2753
    %v2755 = vpop.xlane.xlu0 %2754
    %v2756 = vrcp.pop %v2746
    %v2757 = vrcp.pop %v2749
    %v2758 = vrcp.pop %v2752
    %v2759 = vrcp.pop %v2755
    %v2760 = vmul.f32 %v2737, %v2756
    %v2761 = vmul.f32 %v2739, %v2757
    %v2762 = vmul.f32 %v2741, %v2758
    %v2763 = vmul.f32 %v2743, %v2759
    %2764 = vrot.lane.b32.xlu0 %v2519, 64
    %v2765 = vpop.permute.xlu0 %2764
    %2766 = vrot.lane.b32.xlu0 %v2522, 64
    %v2767 = vpop.permute.xlu0 %2766
    %v2771 = vsel %vm400, %v2760, 0
    %v2774 = vsel %vm400, %v2761, 0
    %2776 = vmatprep.subr.mxu0 0.0
    %2777 = vmatpush1.msra.mxu0 %v2765
    %2778 = vmatprep.subr.mxu0 0.0
    %2779 = vmatpush1.msra.mxu0 %v2767
    %2780 = vmatprep.subr.mxu0 0.0
    %2781 = vmatpush1.msra.mxu0 0.0
    %2782 = vmatprep.subr.mxu0 0.0
    %2783 = vmatpush1.msra.mxu0 0.0
    %2784 = vmatprep.subr.mxu0 0.0
    %2785 = vmatpush1.msra.mxu0 0.0
    %2786 = vmatprep.subr.mxu0 0.0
    %2787 = vmatpush1.msra.mxu0 0.0
    %2788 = vmatprep.subr.mxu0 0.0
    %2789 = vmatpush1.msra.mxu0 0.0
    %2790 = vmatprep.subr.mxu0 0.0
    %2791 = vmatpush1.msra.mxu0 0.0
    %2792 = vmatprep.subr.mxu0 0.0
    %2793 = vmatpush1.msra.mxu0 0.0
    %2794 = vmatprep.subr.mxu0 0.0
    %2795 = vmatpush1.msra.mxu0 0.0
    %2796 = vmatprep.subr.mxu0 0.0
    %2797 = vmatpush1.msra.mxu0 0.0
    %2798 = vmatprep.subr.mxu0 0.0
    %2799 = vmatpush1.msra.mxu0 0.0
    %2800 = vmatprep.subr.mxu0 0.0
    %2801 = vmatpush1.msra.mxu0 0.0
    %2802 = vmatprep.subr.mxu0 0.0
    %2803 = vmatpush1.msra.mxu0 0.0
    %2804 = vmatprep.subr.mxu0 0.0
    %2805 = vmatpush1.msra.mxu0 0.0
    %2806 = vmatprep.subr.mxu0 0.0
    %2807 = vmatpush1.msra.mxu0 0.0
    %2808 = vmatprep.subr.mxu0 0.0
    %2809 = vmatpush1.msra.mxu0 0.0
    %2810 = vmatprep.subr.mxu0 0.0
    %2811 = vmatpush1.msra.mxu0 0.0
    %2812 = vmatprep.subr.mxu0 0.0
    %2813 = vmatpush1.msra.mxu0 0.0
    %2814 = vmatprep.subr.mxu0 0.0
    %2815 = vmatpush1.msra.mxu0 0.0
    %2816 = vmatprep.subr.mxu0 0.0
    %2817 = vmatpush1.msra.mxu0 0.0
    %2818 = vmatprep.subr.mxu0 0.0
    %2819 = vmatpush1.msra.mxu0 0.0
    %2820 = vmatprep.subr.mxu0 0.0
    %2821 = vmatpush1.msra.mxu0 0.0
    %2822 = vmatprep.subr.mxu0 0.0
    %2823 = vmatpush1.msra.mxu0 0.0
    %2824 = vmatprep.subr.mxu0 0.0
    %2825 = vmatpush1.msra.mxu0 0.0
    %2826 = vmatprep.subr.mxu0 0.0
    %2827 = vmatpush1.msra.mxu0 0.0
    %2828 = vmatprep.subr.mxu0 0.0
    %2829 = vmatpush1.msra.mxu0 0.0
    %2830 = vmatprep.subr.mxu0 0.0
    %2831 = vmatpush1.msra.mxu0 0.0
    %2832 = vmatprep.subr.mxu0 0.0
    %2833 = vmatpush1.msra.mxu0 0.0
    %2834 = vmatprep.subr.mxu0 0.0
    %2835 = vmatpush1.msra.mxu0 0.0
    %2836 = vmatprep.subr.mxu0 0.0
    %2837 = vmatpush1.msra.mxu0 0.0
    %2838 = vmatprep.subr.mxu0 0.0
    %2839 = vmatpush1.msra.mxu0 0.0
    %2840 = vmatprep.mubr.f32.mxu0 0.0
    %2841 = vmatmul.mubr.f32.gmra.mrb[0].mxu0 %v2771
    %v2842 = vpop.f32.mrb[0].mxu0
    %v2843 = vadd.f32 0.0, %v2842
    %v2844 = vpop.f32.mrb[0].mxu0
    %2845 = vmatprep.mubr.f32.mxu0 0.0
    %2846 = vmatmul.mubr.f32.gmra.mrb[0].mxu0 %v2774
    %v2847 = vpop.f32.mrb[0].mxu0
    %v2848 = vadd.f32 0.0, %v2847
    %v2849 = vpop.f32.mrb[0].mxu0
    %2850 = vdwg.mxu0
    %2851 = vrot.lane.b32.xlu0 %v2527, 64
    %v2852 = vpop.permute.xlu0 %2851
    %2853 = vrot.lane.b32.xlu0 %v2530, 64
    %v2854 = vpop.permute.xlu0 %2853
    %v2858 = vsel %vm400, %v2762, 0
    %v2861 = vsel %vm400, %v2763, 0
    %2863 = vmatprep.subr.mxu0 0.0
    %2864 = vmatpush1.msra.mxu0 %v2852
    %2865 = vmatprep.subr.mxu0 0.0
    %2866 = vmatpush1.msra.mxu0 %v2854
    %2867 = vmatprep.subr.mxu0 0.0
    %2868 = vmatpush1.msra.mxu0 0.0
    %2869 = vmatprep.subr.mxu0 0.0
    %2870 = vmatpush1.msra.mxu0 0.0
    %2871 = vmatprep.subr.mxu0 0.0
    %2872 = vmatpush1.msra.mxu0 0.0
    %2873 = vmatprep.subr.mxu0 0.0
    %2874 = vmatpush1.msra.mxu0 0.0
    %2875 = vmatprep.subr.mxu0 0.0
    %2876 = vmatpush1.msra.mxu0 0.0
    %2877 = vmatprep.subr.mxu0 0.0
    %2878 = vmatpush1.msra.mxu0 0.0
    %2879 = vmatprep.subr.mxu0 0.0
    %2880 = vmatpush1.msra.mxu0 0.0
    %2881 = vmatprep.subr.mxu0 0.0
    %2882 = vmatpush1.msra.mxu0 0.0
    %2883 = vmatprep.subr.mxu0 0.0
    %2884 = vmatpush1.msra.mxu0 0.0
    %2885 = vmatprep.subr.mxu0 0.0
    %2886 = vmatpush1.msra.mxu0 0.0
    %2887 = vmatprep.subr.mxu0 0.0
    %2888 = vmatpush1.msra.mxu0 0.0
    %2889 = vmatprep.subr.mxu0 0.0
    %2890 = vmatpush1.msra.mxu0 0.0
    %2891 = vmatprep.subr.mxu0 0.0
    %2892 = vmatpush1.msra.mxu0 0.0
    %2893 = vmatprep.subr.mxu0 0.0
    %2894 = vmatpush1.msra.mxu0 0.0
    %2895 = vmatprep.subr.mxu0 0.0
    %2896 = vmatpush1.msra.mxu0 0.0
    %2897 = vmatprep.subr.mxu0 0.0
    %2898 = vmatpush1.msra.mxu0 0.0
    %2899 = vmatprep.subr.mxu0 0.0
    %2900 = vmatpush1.msra.mxu0 0.0
    %2901 = vmatprep.subr.mxu0 0.0
    %2902 = vmatpush1.msra.mxu0 0.0
    %2903 = vmatprep.subr.mxu0 0.0
    %2904 = vmatpush1.msra.mxu0 0.0
    %2905 = vmatprep.subr.mxu0 0.0
    %2906 = vmatpush1.msra.mxu0 0.0
    %2907 = vmatprep.subr.mxu0 0.0
    %2908 = vmatpush1.msra.mxu0 0.0
    %2909 = vmatprep.subr.mxu0 0.0
    %2910 = vmatpush1.msra.mxu0 0.0
    %2911 = vmatprep.subr.mxu0 0.0
    %2912 = vmatpush1.msra.mxu0 0.0
    %2913 = vmatprep.subr.mxu0 0.0
    %2914 = vmatpush1.msra.mxu0 0.0
    %2915 = vmatprep.subr.mxu0 0.0
    %2916 = vmatpush1.msra.mxu0 0.0
    %2917 = vmatprep.subr.mxu0 0.0
    %2918 = vmatpush1.msra.mxu0 0.0
    %2919 = vmatprep.subr.mxu0 0.0
    %2920 = vmatpush1.msra.mxu0 0.0
    %2921 = vmatprep.subr.mxu0 0.0
    %2922 = vmatpush1.msra.mxu0 0.0
    %2923 = vmatprep.subr.mxu0 0.0
    %2924 = vmatpush1.msra.mxu0 0.0
    %2925 = vmatprep.subr.mxu0 0.0
    %2926 = vmatpush1.msra.mxu0 0.0
    %2927 = vmatprep.mubr.f32.mxu0 0.0
    %2928 = vmatmul.mubr.f32.gmra.mrb[0].mxu0 %v2858
    %v2929 = vpop.f32.mrb[0].mxu0
    %v2930 = vadd.f32 0.0, %v2929
    %v2931 = vpop.f32.mrb[0].mxu0
    %2932 = vmatprep.mubr.f32.mxu0 0.0
    %2933 = vmatmul.mubr.f32.gmra.mrb[0].mxu0 %v2861
    %v2934 = vpop.f32.mrb[0].mxu0
    %v2935 = vadd.f32 0.0, %v2934
    %v2936 = vpop.f32.mrb[0].mxu0
    %2937 = vdwg.mxu0
    %v2938 = vpack.c.bf16 %v2848, %v2843
    %v2939 = vpack.c.bf16 %v2935, %v2930
    %2940 = vrot.lane.b32.xlu0 %v2519, 120
    %v2941 = vpop.permute.xlu0 %2940
    %2942 = vrot.lane.b32.xlu0 %v2522, 120
    %v2943 = vpop.permute.xlu0 %2942
    %2944 = vrot.lane.b32.xlu0 %v2519, 88
    %v2945 = vpop.permute.xlu0 %2944
    %2946 = vrot.lane.b32.xlu0 %v2522, 88
    %v2947 = vpop.permute.xlu0 %2946
    %v2948 = vsel %vm223, %v2941, 0
    %v2950 = vsel %vm223, %v2943, 0
    %v2952 = vsel %vm223, %v2945, 0
    %v2954 = vsel %vm223, %v2947, 0
    %2956 = vmatprep.subr.mxu0 0.0
    %2957 = vmatpush1.xpose.msra.mxu0 %v2952
    %2958 = vmatprep.subr.mxu0 0.0
    %2959 = vmatpush1.xpose.msra.mxu0 %v2954
    %2960 = vmatprep.subr.mxu0 0.0
    %2961 = vmatpush1.xpose.msra.mxu0 0.0
    %2962 = vmatprep.subr.mxu0 0.0
    %2963 = vmatpush1.xpose.msra.mxu0 0.0
    %2964 = vmatprep.subr.mxu0 0.0
    %2965 = vmatpush1.xpose.msra.mxu0 0.0
    %2966 = vmatprep.subr.mxu0 0.0
    %2967 = vmatpush1.xpose.msra.mxu0 0.0
    %2968 = vmatprep.subr.mxu0 0.0
    %2969 = vmatpush1.xpose.msra.mxu0 0.0
    %2970 = vmatprep.subr.mxu0 0.0
    %2971 = vmatpush1.xpose.msra.mxu0 0.0
    %2972 = vmatprep.subr.mxu0 0.0
    %2973 = vmatpush1.xpose.msra.mxu0 0.0
    %2974 = vmatprep.subr.mxu0 0.0
    %2975 = vmatpush1.xpose.msra.mxu0 0.0
    %2976 = vmatprep.subr.mxu0 0.0
    %2977 = vmatpush1.xpose.msra.mxu0 0.0
    %2978 = vmatprep.subr.mxu0 0.0
    %2979 = vmatpush1.xpose.msra.mxu0 0.0
    %2980 = vmatprep.subr.mxu0 0.0
    %2981 = vmatpush1.xpose.msra.mxu0 0.0
    %2982 = vmatprep.subr.mxu0 0.0
    %2983 = vmatpush1.xpose.msra.mxu0 0.0
    %2984 = vmatprep.subr.mxu0 0.0
    %2985 = vmatpush1.xpose.msra.mxu0 0.0
    %2986 = vmatprep.subr.mxu0 0.0
    %2987 = vmatpush1.xpose.msra.mxu0 0.0
    %2988 = vmatprep.subr.mxu0 0.0
    %2989 = vmatpush1.xpose.msra.mxu0 0.0
    %2990 = vmatprep.subr.mxu0 0.0
    %2991 = vmatpush1.xpose.msra.mxu0 0.0
    %2992 = vmatprep.subr.mxu0 0.0
    %2993 = vmatpush1.xpose.msra.mxu0 0.0
    %2994 = vmatprep.subr.mxu0 0.0
    %2995 = vmatpush1.xpose.msra.mxu0 0.0
    %2996 = vmatprep.subr.mxu0 0.0
    %2997 = vmatpush1.xpose.msra.mxu0 0.0
    %2998 = vmatprep.subr.mxu0 0.0
    %2999 = vmatpush1.xpose.msra.mxu0 0.0
    %3000 = vmatprep.subr.mxu0 0.0
    %3001 = vmatpush1.xpose.msra.mxu0 0.0
    %3002 = vmatprep.subr.mxu0 0.0
    %3003 = vmatpush1.xpose.msra.mxu0 0.0
    %3004 = vmatprep.subr.mxu0 0.0
    %3005 = vmatpush1.xpose.msra.mxu0 0.0
    %3006 = vmatprep.subr.mxu0 0.0
    %3007 = vmatpush1.xpose.msra.mxu0 0.0
    %3008 = vmatprep.subr.mxu0 0.0
    %3009 = vmatpush1.xpose.msra.mxu0 0.0
    %3010 = vmatprep.subr.mxu0 0.0
    %3011 = vmatpush1.xpose.msra.mxu0 0.0
    %3012 = vmatprep.subr.mxu0 0.0
    %3013 = vmatpush1.xpose.msra.mxu0 0.0
    %3014 = vmatprep.subr.mxu0 0.0
    %3015 = vmatpush1.xpose.msra.mxu0 0.0
    %3016 = vmatprep.subr.mxu0 0.0
    %3017 = vmatpush1.xpose.msra.mxu0 0.0
    %3018 = vmatprep.subr.mxu0 0.0
    %3019 = vmatpush1.xpose.msra.mxu0 0.0
    %3020 = vmatprep.mubr.f32.mxu0 0.0
    %3021 = vmatmul.mubr.f32.gmra.mrb[0].mxu0 %v2948
    %v3022 = vpop.f32.mrb[0].mxu0
    %v3023 = vadd.f32 0.0, %v3022
    %v3024 = vpop.f32.mrb[0].mxu0
    %3025 = vmatprep.mubr.f32.mxu0 0.0
    %3026 = vmatmul.mubr.f32.gmra.mrb[0].mxu0 %v2950
    %v3027 = vpop.f32.mrb[0].mxu0
    %v3028 = vadd.f32 0.0, %v3027
    %v3029 = vpop.f32.mrb[0].mxu0
    %3030 = vdwg.mxu0
    %3031 = vrot.lane.b32.xlu0 %v2527, 120
    %v3032 = vpop.permute.xlu0 %3031
    %3033 = vrot.lane.b32.xlu0 %v2530, 120
    %v3034 = vpop.permute.xlu0 %3033
    %3035 = vrot.lane.b32.xlu0 %v2527, 88
    %v3036 = vpop.permute.xlu0 %3035
    %3037 = vrot.lane.b32.xlu0 %v2530, 88
    %v3038 = vpop.permute.xlu0 %3037
    %v3039 = vsel %vm223, %v3032, 0
    %v3041 = vsel %vm223, %v3034, 0
    %v3043 = vsel %vm223, %v3036, 0
    %v3045 = vsel %vm223, %v3038, 0
    %3047 = vmatprep.subr.mxu0 0.0
    %3048 = vmatpush1.xpose.msra.mxu0 %v3043
    %3049 = vmatprep.subr.mxu0 0.0
    %3050 = vmatpush1.xpose.msra.mxu0 %v3045
    %3051 = vmatprep.subr.mxu0 0.0
    %3052 = vmatpush1.xpose.msra.mxu0 0.0
    %3053 = vmatprep.subr.mxu0 0.0
    %3054 = vmatpush1.xpose.msra.mxu0 0.0
    %3055 = vmatprep.subr.mxu0 0.0
    %3056 = vmatpush1.xpose.msra.mxu0 0.0
    %3057 = vmatprep.subr.mxu0 0.0
    %3058 = vmatpush1.xpose.msra.mxu0 0.0
    %3059 = vmatprep.subr.mxu0 0.0
    %3060 = vmatpush1.xpose.msra.mxu0 0.0
    %3061 = vmatprep.subr.mxu0 0.0
    %3062 = vmatpush1.xpose.msra.mxu0 0.0
    %3063 = vmatprep.subr.mxu0 0.0
    %3064 = vmatpush1.xpose.msra.mxu0 0.0
    %3065 = vmatprep.subr.mxu0 0.0
    %3066 = vmatpush1.xpose.msra.mxu0 0.0
    %3067 = vmatprep.subr.mxu0 0.0
    %3068 = vmatpush1.xpose.msra.mxu0 0.0
    %3069 = vmatprep.subr.mxu0 0.0
    %3070 = vmatpush1.xpose.msra.mxu0 0.0
    %3071 = vmatprep.subr.mxu0 0.0
    %3072 = vmatpush1.xpose.msra.mxu0 0.0
    %3073 = vmatprep.subr.mxu0 0.0
    %3074 = vmatpush1.xpose.msra.mxu0 0.0
    %3075 = vmatprep.subr.mxu0 0.0
    %3076 = vmatpush1.xpose.msra.mxu0 0.0
    %3077 = vmatprep.subr.mxu0 0.0
    %3078 = vmatpush1.xpose.msra.mxu0 0.0
    %3079 = vmatprep.subr.mxu0 0.0
    %3080 = vmatpush1.xpose.msra.mxu0 0.0
    %3081 = vmatprep.subr.mxu0 0.0
    %3082 = vmatpush1.xpose.msra.mxu0 0.0
    %3083 = vmatprep.subr.mxu0 0.0
    %3084 = vmatpush1.xpose.msra.mxu0 0.0
    %3085 = vmatprep.subr.mxu0 0.0
    %3086 = vmatpush1.xpose.msra.mxu0 0.0
    %3087 = vmatprep.subr.mxu0 0.0
    %3088 = vmatpush1.xpose.msra.mxu0 0.0
    %3089 = vmatprep.subr.mxu0 0.0
    %3090 = vmatpush1.xpose.msra.mxu0 0.0
    %3091 = vmatprep.subr.mxu0 0.0
    %3092 = vmatpush1.xpose.msra.mxu0 0.0
    %3093 = vmatprep.subr.mxu0 0.0
    %3094 = vmatpush1.xpose.msra.mxu0 0.0
    %3095 = vmatprep.subr.mxu0 0.0
    %3096 = vmatpush1.xpose.msra.mxu0 0.0
    %3097 = vmatprep.subr.mxu0 0.0
    %3098 = vmatpush1.xpose.msra.mxu0 0.0
    %3099 = vmatprep.subr.mxu0 0.0
    %3100 = vmatpush1.xpose.msra.mxu0 0.0
    %3101 = vmatprep.subr.mxu0 0.0
    %3102 = vmatpush1.xpose.msra.mxu0 0.0
    %3103 = vmatprep.subr.mxu0 0.0
    %3104 = vmatpush1.xpose.msra.mxu0 0.0
    %3105 = vmatprep.subr.mxu0 0.0
    %3106 = vmatpush1.xpose.msra.mxu0 0.0
    %3107 = vmatprep.subr.mxu0 0.0
    %3108 = vmatpush1.xpose.msra.mxu0 0.0
    %3109 = vmatprep.subr.mxu0 0.0
    %3110 = vmatpush1.xpose.msra.mxu0 0.0
    %3111 = vmatprep.mubr.f32.mxu0 0.0
    %3112 = vmatmul.mubr.f32.gmra.mrb[0].mxu0 %v3039
    %v3113 = vpop.f32.mrb[0].mxu0
    %v3114 = vadd.f32 0.0, %v3113
    %v3115 = vpop.f32.mrb[0].mxu0
    %3116 = vmatprep.mubr.f32.mxu0 0.0
    %3117 = vmatmul.mubr.f32.gmra.mrb[0].mxu0 %v3041
    %v3118 = vpop.f32.mrb[0].mxu0
    %v3119 = vadd.f32 0.0, %v3118
    %v3120 = vpop.f32.mrb[0].mxu0
    %3121 = vdwg.mxu0
    %v3122 = vsel %vm62, %v3023, -1e+30
    %v3123 = vsel %vm63, %v3028, -1e+30
    %v3124 = vsel %vm62, %v3114, -1e+30
    %v3125 = vsel %vm63, %v3119, -1e+30
    %v3126 = vsel %vm400, %v3122, -inf
    %3127 = vmax.xlane.f32.xlu0 %v3126
    %v3128 = vpop.xlane.xlu0 %3127
    %v3129 = vsel %vm400, %v3123, -inf
    %3130 = vmax.xlane.f32.xlu0 %v3129
    %v3131 = vpop.xlane.xlu0 %3130
    %v3132 = vsel %vm400, %v3124, -inf
    %3133 = vmax.xlane.f32.xlu0 %v3132
    %v3134 = vpop.xlane.xlu0 %3133
    %v3135 = vsel %vm400, %v3125, -inf
    %3136 = vmax.xlane.f32.xlu0 %v3135
    %v3137 = vpop.xlane.xlu0 %3136
    %v3138 = vsub.f32 %v3122, %v3128
    %v3139 = vsub.f32 %v3123, %v3131
    %v3140 = vsub.f32 %v3124, %v3134
    %v3141 = vsub.f32 %v3125, %v3137
    %v3142 = vmul.f32 %v3138, 1.442695
    %v3143 = vpow.pop %v3142
    %v3144 = vmul.f32 %v3139, 1.442695
    %v3145 = vpow.pop %v3144
    %v3146 = vmul.f32 %v3140, 1.442695
    %v3147 = vpow.pop %v3146
    %v3148 = vmul.f32 %v3141, 1.442695
    %v3149 = vpow.pop %v3148
    %v3150 = vsel %vm400, %v3143, 0.0
    %3151 = vadd.xlane.f32.xlu0 %v3150
    %v3152 = vpop.xlane.xlu0 %3151
    %v3153 = vsel %vm400, %v3145, 0.0
    %3154 = vadd.xlane.f32.xlu0 %v3153
    %v3155 = vpop.xlane.xlu0 %3154
    %v3156 = vsel %vm400, %v3147, 0.0
    %3157 = vadd.xlane.f32.xlu0 %v3156
    %v3158 = vpop.xlane.xlu0 %3157
    %v3159 = vsel %vm400, %v3149, 0.0
    %3160 = vadd.xlane.f32.xlu0 %v3159
    %v3161 = vpop.xlane.xlu0 %3160
    %v3162 = vrcp.pop %v3152
    %v3163 = vrcp.pop %v3155
    %v3164 = vrcp.pop %v3158
    %v3165 = vrcp.pop %v3161
    %v3166 = vmul.f32 %v3143, %v3162
    %v3167 = vmul.f32 %v3145, %v3163
    %v3168 = vmul.f32 %v3147, %v3164
    %v3169 = vmul.f32 %v3149, %v3165
    %3170 = vrot.lane.b32.xlu0 %v2519, 56
    %v3171 = vpop.permute.xlu0 %3170
    %3172 = vrot.lane.b32.xlu0 %v2522, 56
    %v3173 = vpop.permute.xlu0 %3172
    %v3177 = vsel %vm400, %v3166, 0
    %v3180 = vsel %vm400, %v3167, 0
    %3182 = vmatprep.subr.mxu0 0.0
    %3183 = vmatpush1.msra.mxu0 %v3171
    %3184 = vmatprep.subr.mxu0 0.0
    %3185 = vmatpush1.msra.mxu0 %v3173
    %3186 = vmatprep.subr.mxu0 0.0
    %3187 = vmatpush1.msra.mxu0 0.0
    %3188 = vmatprep.subr.mxu0 0.0
    %3189 = vmatpush1.msra.mxu0 0.0
    %3190 = vmatprep.subr.mxu0 0.0
    %3191 = vmatpush1.msra.mxu0 0.0
    %3192 = vmatprep.subr.mxu0 0.0
    %3193 = vmatpush1.msra.mxu0 0.0
    %3194 = vmatprep.subr.mxu0 0.0
    %3195 = vmatpush1.msra.mxu0 0.0
    %3196 = vmatprep.subr.mxu0 0.0
    %3197 = vmatpush1.msra.mxu0 0.0
    %3198 = vmatprep.subr.mxu0 0.0
    %3199 = vmatpush1.msra.mxu0 0.0
    %3200 = vmatprep.subr.mxu0 0.0
    %3201 = vmatpush1.msra.mxu0 0.0
    %3202 = vmatprep.subr.mxu0 0.0
    %3203 = vmatpush1.msra.mxu0 0.0
    %3204 = vmatprep.subr.mxu0 0.0
    %3205 = vmatpush1.msra.mxu0 0.0
    %3206 = vmatprep.subr.mxu0 0.0
    %3207 = vmatpush1.msra.mxu0 0.0
    %3208 = vmatprep.subr.mxu0 0.0
    %3209 = vmatpush1.msra.mxu0 0.0
    %3210 = vmatprep.subr.mxu0 0.0
    %3211 = vmatpush1.msra.mxu0 0.0
    %3212 = vmatprep.subr.mxu0 0.0
    %3213 = vmatpush1.msra.mxu0 0.0
    %3214 = vmatprep.subr.mxu0 0.0
    %3215 = vmatpush1.msra.mxu0 0.0
    %3216 = vmatprep.subr.mxu0 0.0
    %3217 = vmatpush1.msra.mxu0 0.0
    %3218 = vmatprep.subr.mxu0 0.0
    %3219 = vmatpush1.msra.mxu0 0.0
    %3220 = vmatprep.subr.mxu0 0.0
    %3221 = vmatpush1.msra.mxu0 0.0
    %3222 = vmatprep.subr.mxu0 0.0
    %3223 = vmatpush1.msra.mxu0 0.0
    %3224 = vmatprep.subr.mxu0 0.0
    %3225 = vmatpush1.msra.mxu0 0.0
    %3226 = vmatprep.subr.mxu0 0.0
    %3227 = vmatpush1.msra.mxu0 0.0
    %3228 = vmatprep.subr.mxu0 0.0
    %3229 = vmatpush1.msra.mxu0 0.0
    %3230 = vmatprep.subr.mxu0 0.0
    %3231 = vmatpush1.msra.mxu0 0.0
    %3232 = vmatprep.subr.mxu0 0.0
    %3233 = vmatpush1.msra.mxu0 0.0
    %3234 = vmatprep.subr.mxu0 0.0
    %3235 = vmatpush1.msra.mxu0 0.0
    %3236 = vmatprep.subr.mxu0 0.0
    %3237 = vmatpush1.msra.mxu0 0.0
    %3238 = vmatprep.subr.mxu0 0.0
    %3239 = vmatpush1.msra.mxu0 0.0
    %3240 = vmatprep.subr.mxu0 0.0
    %3241 = vmatpush1.msra.mxu0 0.0
    %3242 = vmatprep.subr.mxu0 0.0
    %3243 = vmatpush1.msra.mxu0 0.0
    %3244 = vmatprep.subr.mxu0 0.0
    %3245 = vmatpush1.msra.mxu0 0.0
    %3246 = vmatprep.mubr.f32.mxu0 0.0
    %3247 = vmatmul.mubr.f32.gmra.mrb[0].mxu0 %v3177
    %v3248 = vpop.f32.mrb[0].mxu0
    %v3249 = vadd.f32 0.0, %v3248
    %v3250 = vpop.f32.mrb[0].mxu0
    %3251 = vmatprep.mubr.f32.mxu0 0.0
    %3252 = vmatmul.mubr.f32.gmra.mrb[0].mxu0 %v3180
    %v3253 = vpop.f32.mrb[0].mxu0
    %v3254 = vadd.f32 0.0, %v3253
    %v3255 = vpop.f32.mrb[0].mxu0
    %3256 = vdwg.mxu0
    %3257 = vrot.lane.b32.xlu0 %v2527, 56
    %v3258 = vpop.permute.xlu0 %3257
    %3259 = vrot.lane.b32.xlu0 %v2530, 56
    %v3260 = vpop.permute.xlu0 %3259
    %v3264 = vsel %vm400, %v3168, 0
    %v3267 = vsel %vm400, %v3169, 0
    %3269 = vmatprep.subr.mxu0 0.0
    %3270 = vmatpush1.msra.mxu0 %v3258
    %3271 = vmatprep.subr.mxu0 0.0
    %3272 = vmatpush1.msra.mxu0 %v3260
    %3273 = vmatprep.subr.mxu0 0.0
    %3274 = vmatpush1.msra.mxu0 0.0
    %3275 = vmatprep.subr.mxu0 0.0
    %3276 = vmatpush1.msra.mxu0 0.0
    %3277 = vmatprep.subr.mxu0 0.0
    %3278 = vmatpush1.msra.mxu0 0.0
    %3279 = vmatprep.subr.mxu0 0.0
    %3280 = vmatpush1.msra.mxu0 0.0
    %3281 = vmatprep.subr.mxu0 0.0
    %3282 = vmatpush1.msra.mxu0 0.0
    %3283 = vmatprep.subr.mxu0 0.0
    %3284 = vmatpush1.msra.mxu0 0.0
    %3285 = vmatprep.subr.mxu0 0.0
    %3286 = vmatpush1.msra.mxu0 0.0
    %3287 = vmatprep.subr.mxu0 0.0
    %3288 = vmatpush1.msra.mxu0 0.0
    %3289 = vmatprep.subr.mxu0 0.0
    %3290 = vmatpush1.msra.mxu0 0.0
    %3291 = vmatprep.subr.mxu0 0.0
    %3292 = vmatpush1.msra.mxu0 0.0
    %3293 = vmatprep.subr.mxu0 0.0
    %3294 = vmatpush1.msra.mxu0 0.0
    %3295 = vmatprep.subr.mxu0 0.0
    %3296 = vmatpush1.msra.mxu0 0.0
    %3297 = vmatprep.subr.mxu0 0.0
    %3298 = vmatpush1.msra.mxu0 0.0
    %3299 = vmatprep.subr.mxu0 0.0
    %3300 = vmatpush1.msra.mxu0 0.0
    %3301 = vmatprep.subr.mxu0 0.0
    %3302 = vmatpush1.msra.mxu0 0.0
    %3303 = vmatprep.subr.mxu0 0.0
    %3304 = vmatpush1.msra.mxu0 0.0
    %3305 = vmatprep.subr.mxu0 0.0
    %3306 = vmatpush1.msra.mxu0 0.0
    %3307 = vmatprep.subr.mxu0 0.0
    %3308 = vmatpush1.msra.mxu0 0.0
    %3309 = vmatprep.subr.mxu0 0.0
    %3310 = vmatpush1.msra.mxu0 0.0
    %3311 = vmatprep.subr.mxu0 0.0
    %3312 = vmatpush1.msra.mxu0 0.0
    %3313 = vmatprep.subr.mxu0 0.0
    %3314 = vmatpush1.msra.mxu0 0.0
    %3315 = vmatprep.subr.mxu0 0.0
    %3316 = vmatpush1.msra.mxu0 0.0
    %3317 = vmatprep.subr.mxu0 0.0
    %3318 = vmatpush1.msra.mxu0 0.0
    %3319 = vmatprep.subr.mxu0 0.0
    %3320 = vmatpush1.msra.mxu0 0.0
    %3321 = vmatprep.subr.mxu0 0.0
    %3322 = vmatpush1.msra.mxu0 0.0
    %3323 = vmatprep.subr.mxu0 0.0
    %3324 = vmatpush1.msra.mxu0 0.0
    %3325 = vmatprep.subr.mxu0 0.0
    %3326 = vmatpush1.msra.mxu0 0.0
    %3327 = vmatprep.subr.mxu0 0.0
    %3328 = vmatpush1.msra.mxu0 0.0
    %3329 = vmatprep.subr.mxu0 0.0
    %3330 = vmatpush1.msra.mxu0 0.0
    %3331 = vmatprep.subr.mxu0 0.0
    %3332 = vmatpush1.msra.mxu0 0.0
    %3333 = vmatprep.mubr.f32.mxu0 0.0
    %3334 = vmatmul.mubr.f32.gmra.mrb[0].mxu0 %v3264
    %v3335 = vpop.f32.mrb[0].mxu0
    %v3336 = vadd.f32 0.0, %v3335
    %v3337 = vpop.f32.mrb[0].mxu0
    %3338 = vmatprep.mubr.f32.mxu0 0.0
    %3339 = vmatmul.mubr.f32.gmra.mrb[0].mxu0 %v3267
    %v3340 = vpop.f32.mrb[0].mxu0
    %v3341 = vadd.f32 0.0, %v3340
    %v3342 = vpop.f32.mrb[0].mxu0
    %3343 = vdwg.mxu0
    %v3344 = vpack.c.bf16 %v3254, %v3249
    %v3345 = vpack.c.bf16 %v3341, %v3336
    %v3347 = vsel %vm223, %v3344, 0
    %v3350 = vsel %vm223, %v3345, 0
    %v3353 = vsel %vm1033, %v2535, 0
    %3355 = vmatprep.subr.bf16.mxu0 0
    %3356 = vmatpush1.bf16.msra.mxu0 %v3353
    %3357 = vmatprep.subr.bf16.mxu0 0
    %3358 = vmatpush1.bf16.msra.mxu0 0
    %3359 = vmatprep.subr.bf16.mxu0 0
    %3360 = vmatpush1.bf16.msra.mxu0 0
    %3361 = vmatprep.subr.bf16.mxu0 0
    %3362 = vmatpush1.bf16.msra.mxu0 0
    %3363 = vmatprep.subr.bf16.mxu0 0
    %3364 = vmatpush1.bf16.msra.mxu0 0
    %3365 = vmatprep.subr.bf16.mxu0 0
    %3366 = vmatpush1.bf16.msra.mxu0 0
    %3367 = vmatprep.subr.bf16.mxu0 0
    %3368 = vmatpush1.bf16.msra.mxu0 0
    %3369 = vmatprep.subr.bf16.mxu0 0
    %3370 = vmatpush1.bf16.msra.mxu0 0
    %3371 = vmatprep.subr.bf16.mxu0 0
    %3372 = vmatpush1.bf16.msra.mxu0 0
    %3373 = vmatprep.subr.bf16.mxu0 0
    %3374 = vmatpush1.bf16.msra.mxu0 0
    %3375 = vmatprep.subr.bf16.mxu0 0
    %3376 = vmatpush1.bf16.msra.mxu0 0
    %3377 = vmatprep.subr.bf16.mxu0 0
    %3378 = vmatpush1.bf16.msra.mxu0 0
    %3379 = vmatprep.subr.bf16.mxu0 0
    %3380 = vmatpush1.bf16.msra.mxu0 0
    %3381 = vmatprep.subr.bf16.mxu0 0
    %3382 = vmatpush1.bf16.msra.mxu0 0
    %3383 = vmatprep.subr.bf16.mxu0 0
    %3384 = vmatpush1.bf16.msra.mxu0 0
    %3385 = vmatprep.subr.bf16.mxu0 0
    %3386 = vmatpush1.bf16.msra.mxu0 0
    %3387 = vmatprep.mubr.bf16.mxu0 0
    %3388 = vmatmul.mubr.bf16.gmra.mrb[0].mxu0 %v3347
    %v3389 = vpop.f32.mrb[0].mxu0
    %v3390 = vadd.f32 0.0, %v3389
    %v3391 = vpop.f32.mrb[0].mxu0
    %v3392 = vpop.f32.mrb[0].mxu0
    %v3393 = vadd.f32 0.0, %v3392
    %v3394 = vpop.f32.mrb[0].mxu0
    %3395 = vmatprep.mubr.bf16.mxu0 0
    %3396 = vmatmul.mubr.bf16.gmra.mrb[0].mxu0 %v3350
    %v3397 = vpop.f32.mrb[0].mxu0
    %v3398 = vadd.f32 0.0, %v3397
    %v3399 = vpop.f32.mrb[0].mxu0
    %v3400 = vpop.f32.mrb[0].mxu0
    %v3401 = vadd.f32 0.0, %v3400
    %v3402 = vpop.f32.mrb[0].mxu0
    %3403 = vdwg.mxu0
    %v3405 = vsel %vm223, %v2938, 0
    %v3408 = vsel %vm223, %v2939, 0
    %v3411 = vsel %vm1033, %v2534, 0
    %3413 = vmatprep.subr.bf16.mxu0 0
    %3414 = vmatpush1.bf16.msra.mxu0 %v3411
    %3415 = vmatprep.subr.bf16.mxu0 0
    %3416 = vmatpush1.bf16.msra.mxu0 0
    %3417 = vmatprep.subr.bf16.mxu0 0
    %3418 = vmatpush1.bf16.msra.mxu0 0
    %3419 = vmatprep.subr.bf16.mxu0 0
    %3420 = vmatpush1.bf16.msra.mxu0 0
    %3421 = vmatprep.subr.bf16.mxu0 0
    %3422 = vmatpush1.bf16.msra.mxu0 0
    %3423 = vmatprep.subr.bf16.mxu0 0
    %3424 = vmatpush1.bf16.msra.mxu0 0
    %3425 = vmatprep.subr.bf16.mxu0 0
    %3426 = vmatpush1.bf16.msra.mxu0 0
    %3427 = vmatprep.subr.bf16.mxu0 0
    %3428 = vmatpush1.bf16.msra.mxu0 0
    %3429 = vmatprep.subr.bf16.mxu0 0
    %3430 = vmatpush1.bf16.msra.mxu0 0
    %3431 = vmatprep.subr.bf16.mxu0 0
    %3432 = vmatpush1.bf16.msra.mxu0 0
    %3433 = vmatprep.subr.bf16.mxu0 0
    %3434 = vmatpush1.bf16.msra.mxu0 0
    %3435 = vmatprep.subr.bf16.mxu0 0
    %3436 = vmatpush1.bf16.msra.mxu0 0
    %3437 = vmatprep.subr.bf16.mxu0 0
    %3438 = vmatpush1.bf16.msra.mxu0 0
    %3439 = vmatprep.subr.bf16.mxu0 0
    %3440 = vmatpush1.bf16.msra.mxu0 0
    %3441 = vmatprep.subr.bf16.mxu0 0
    %3442 = vmatpush1.bf16.msra.mxu0 0
    %3443 = vmatprep.subr.bf16.mxu0 0
    %3444 = vmatpush1.bf16.msra.mxu0 0
    %3445 = vmatprep.mubr.bf16.mxu0 0
    %3446 = vmatmul.mubr.bf16.gmra.mrb[0].mxu0 %v3405
    %v3447 = vpop.f32.mrb[0].mxu0
    %v3448 = vadd.f32 %v3390, %v3447
    %v3449 = vpop.f32.mrb[0].mxu0
    %v3450 = vpop.f32.mrb[0].mxu0
    %v3451 = vadd.f32 %v3393, %v3450
    %v3452 = vpop.f32.mrb[0].mxu0
    %3453 = vmatprep.mubr.bf16.mxu0 0
    %3454 = vmatmul.mubr.bf16.gmra.mrb[0].mxu0 %v3408
    %v3455 = vpop.f32.mrb[0].mxu0
    %v3456 = vadd.f32 %v3398, %v3455
    %v3457 = vpop.f32.mrb[0].mxu0
    %v3458 = vpop.f32.mrb[0].mxu0
    %v3459 = vadd.f32 %v3401, %v3458
    %v3460 = vpop.f32.mrb[0].mxu0
    %3461 = vdwg.mxu0
    %3462 = vrot.lane.b32.xlu0 %v2519, 112
    %v3463 = vpop.permute.xlu0 %3462
    %3464 = vrot.lane.b32.xlu0 %v2522, 112
    %v3465 = vpop.permute.xlu0 %3464
    %3466 = vrot.lane.b32.xlu0 %v2519, 80
    %v3467 = vpop.permute.xlu0 %3466
    %3468 = vrot.lane.b32.xlu0 %v2522, 80
    %v3469 = vpop.permute.xlu0 %3468
    %v3470 = vsel %vm223, %v3463, 0
    %v3472 = vsel %vm223, %v3465, 0
    %v3474 = vsel %vm223, %v3467, 0
    %v3476 = vsel %vm223, %v3469, 0
    %3478 = vmatprep.subr.mxu0 0.0
    %3479 = vmatpush1.xpose.msra.mxu0 %v3474
    %3480 = vmatprep.subr.mxu0 0.0
    %3481 = vmatpush1.xpose.msra.mxu0 %v3476
    %3482 = vmatprep.subr.mxu0 0.0
    %3483 = vmatpush1.xpose.msra.mxu0 0.0
    %3484 = vmatprep.subr.mxu0 0.0
    %3485 = vmatpush1.xpose.msra.mxu0 0.0
    %3486 = vmatprep.subr.mxu0 0.0
    %3487 = vmatpush1.xpose.msra.mxu0 0.0
    %3488 = vmatprep.subr.mxu0 0.0
    %3489 = vmatpush1.xpose.msra.mxu0 0.0
    %3490 = vmatprep.subr.mxu0 0.0
    %3491 = vmatpush1.xpose.msra.mxu0 0.0
    %3492 = vmatprep.subr.mxu0 0.0
    %3493 = vmatpush1.xpose.msra.mxu0 0.0
    %3494 = vmatprep.subr.mxu0 0.0
    %3495 = vmatpush1.xpose.msra.mxu0 0.0
    %3496 = vmatprep.subr.mxu0 0.0
    %3497 = vmatpush1.xpose.msra.mxu0 0.0
    %3498 = vmatprep.subr.mxu0 0.0
    %3499 = vmatpush1.xpose.msra.mxu0 0.0
    %3500 = vmatprep.subr.mxu0 0.0
    %3501 = vmatpush1.xpose.msra.mxu0 0.0
    %3502 = vmatprep.subr.mxu0 0.0
    %3503 = vmatpush1.xpose.msra.mxu0 0.0
    %3504 = vmatprep.subr.mxu0 0.0
    %3505 = vmatpush1.xpose.msra.mxu0 0.0
    %3506 = vmatprep.subr.mxu0 0.0
    %3507 = vmatpush1.xpose.msra.mxu0 0.0
    %3508 = vmatprep.subr.mxu0 0.0
    %3509 = vmatpush1.xpose.msra.mxu0 0.0
    %3510 = vmatprep.subr.mxu0 0.0
    %3511 = vmatpush1.xpose.msra.mxu0 0.0
    %3512 = vmatprep.subr.mxu0 0.0
    %3513 = vmatpush1.xpose.msra.mxu0 0.0
    %3514 = vmatprep.subr.mxu0 0.0
    %3515 = vmatpush1.xpose.msra.mxu0 0.0
    %3516 = vmatprep.subr.mxu0 0.0
    %3517 = vmatpush1.xpose.msra.mxu0 0.0
    %3518 = vmatprep.subr.mxu0 0.0
    %3519 = vmatpush1.xpose.msra.mxu0 0.0
    %3520 = vmatprep.subr.mxu0 0.0
    %3521 = vmatpush1.xpose.msra.mxu0 0.0
    %3522 = vmatprep.subr.mxu0 0.0
    %3523 = vmatpush1.xpose.msra.mxu0 0.0
    %3524 = vmatprep.subr.mxu0 0.0
    %3525 = vmatpush1.xpose.msra.mxu0 0.0
    %3526 = vmatprep.subr.mxu0 0.0
    %3527 = vmatpush1.xpose.msra.mxu0 0.0
    %3528 = vmatprep.subr.mxu0 0.0
    %3529 = vmatpush1.xpose.msra.mxu0 0.0
    %3530 = vmatprep.subr.mxu0 0.0
    %3531 = vmatpush1.xpose.msra.mxu0 0.0
    %3532 = vmatprep.subr.mxu0 0.0
    %3533 = vmatpush1.xpose.msra.mxu0 0.0
    %3534 = vmatprep.subr.mxu0 0.0
    %3535 = vmatpush1.xpose.msra.mxu0 0.0
    %3536 = vmatprep.subr.mxu0 0.0
    %3537 = vmatpush1.xpose.msra.mxu0 0.0
    %3538 = vmatprep.subr.mxu0 0.0
    %3539 = vmatpush1.xpose.msra.mxu0 0.0
    %3540 = vmatprep.subr.mxu0 0.0
    %3541 = vmatpush1.xpose.msra.mxu0 0.0
    %3542 = vmatprep.mubr.f32.mxu0 0.0
    %3543 = vmatmul.mubr.f32.gmra.mrb[0].mxu0 %v3470
    %v3544 = vpop.f32.mrb[0].mxu0
    %v3545 = vadd.f32 0.0, %v3544
    %v3546 = vpop.f32.mrb[0].mxu0
    %3547 = vmatprep.mubr.f32.mxu0 0.0
    %3548 = vmatmul.mubr.f32.gmra.mrb[0].mxu0 %v3472
    %v3549 = vpop.f32.mrb[0].mxu0
    %v3550 = vadd.f32 0.0, %v3549
    %v3551 = vpop.f32.mrb[0].mxu0
    %3552 = vdwg.mxu0
    %3553 = vrot.lane.b32.xlu0 %v2527, 112
    %v3554 = vpop.permute.xlu0 %3553
    %3555 = vrot.lane.b32.xlu0 %v2530, 112
    %v3556 = vpop.permute.xlu0 %3555
    %3557 = vrot.lane.b32.xlu0 %v2527, 80
    %v3558 = vpop.permute.xlu0 %3557
    %3559 = vrot.lane.b32.xlu0 %v2530, 80
    %v3560 = vpop.permute.xlu0 %3559
    %v3561 = vsel %vm223, %v3554, 0
    %v3563 = vsel %vm223, %v3556, 0
    %v3565 = vsel %vm223, %v3558, 0
    %v3567 = vsel %vm223, %v3560, 0
    %3569 = vmatprep.subr.mxu0 0.0
    %3570 = vmatpush1.xpose.msra.mxu0 %v3565
    %3571 = vmatprep.subr.mxu0 0.0
    %3572 = vmatpush1.xpose.msra.mxu0 %v3567
    %3573 = vmatprep.subr.mxu0 0.0
    %3574 = vmatpush1.xpose.msra.mxu0 0.0
    %3575 = vmatprep.subr.mxu0 0.0
    %3576 = vmatpush1.xpose.msra.mxu0 0.0
    %3577 = vmatprep.subr.mxu0 0.0
    %3578 = vmatpush1.xpose.msra.mxu0 0.0
    %3579 = vmatprep.subr.mxu0 0.0
    %3580 = vmatpush1.xpose.msra.mxu0 0.0
    %3581 = vmatprep.subr.mxu0 0.0
    %3582 = vmatpush1.xpose.msra.mxu0 0.0
    %3583 = vmatprep.subr.mxu0 0.0
    %3584 = vmatpush1.xpose.msra.mxu0 0.0
    %3585 = vmatprep.subr.mxu0 0.0
    %3586 = vmatpush1.xpose.msra.mxu0 0.0
    %3587 = vmatprep.subr.mxu0 0.0
    %3588 = vmatpush1.xpose.msra.mxu0 0.0
    %3589 = vmatprep.subr.mxu0 0.0
    %3590 = vmatpush1.xpose.msra.mxu0 0.0
    %3591 = vmatprep.subr.mxu0 0.0
    %3592 = vmatpush1.xpose.msra.mxu0 0.0
    %3593 = vmatprep.subr.mxu0 0.0
    %3594 = vmatpush1.xpose.msra.mxu0 0.0
    %3595 = vmatprep.subr.mxu0 0.0
    %3596 = vmatpush1.xpose.msra.mxu0 0.0
    %3597 = vmatprep.subr.mxu0 0.0
    %3598 = vmatpush1.xpose.msra.mxu0 0.0
    %3599 = vmatprep.subr.mxu0 0.0
    %3600 = vmatpush1.xpose.msra.mxu0 0.0
    %3601 = vmatprep.subr.mxu0 0.0
    %3602 = vmatpush1.xpose.msra.mxu0 0.0
    %3603 = vmatprep.subr.mxu0 0.0
    %3604 = vmatpush1.xpose.msra.mxu0 0.0
    %3605 = vmatprep.subr.mxu0 0.0
    %3606 = vmatpush1.xpose.msra.mxu0 0.0
    %3607 = vmatprep.subr.mxu0 0.0
    %3608 = vmatpush1.xpose.msra.mxu0 0.0
    %3609 = vmatprep.subr.mxu0 0.0
    %3610 = vmatpush1.xpose.msra.mxu0 0.0
    %3611 = vmatprep.subr.mxu0 0.0
    %3612 = vmatpush1.xpose.msra.mxu0 0.0
    %3613 = vmatprep.subr.mxu0 0.0
    %3614 = vmatpush1.xpose.msra.mxu0 0.0
    %3615 = vmatprep.subr.mxu0 0.0
    %3616 = vmatpush1.xpose.msra.mxu0 0.0
    %3617 = vmatprep.subr.mxu0 0.0
    %3618 = vmatpush1.xpose.msra.mxu0 0.0
    %3619 = vmatprep.subr.mxu0 0.0
    %3620 = vmatpush1.xpose.msra.mxu0 0.0
    %3621 = vmatprep.subr.mxu0 0.0
    %3622 = vmatpush1.xpose.msra.mxu0 0.0
    %3623 = vmatprep.subr.mxu0 0.0
    %3624 = vmatpush1.xpose.msra.mxu0 0.0
    %3625 = vmatprep.subr.mxu0 0.0
    %3626 = vmatpush1.xpose.msra.mxu0 0.0
    %3627 = vmatprep.subr.mxu0 0.0
    %3628 = vmatpush1.xpose.msra.mxu0 0.0
    %3629 = vmatprep.subr.mxu0 0.0
    %3630 = vmatpush1.xpose.msra.mxu0 0.0
    %3631 = vmatprep.subr.mxu0 0.0
    %3632 = vmatpush1.xpose.msra.mxu0 0.0
    %3633 = vmatprep.mubr.f32.mxu0 0.0
    %3634 = vmatmul.mubr.f32.gmra.mrb[0].mxu0 %v3561
    %v3635 = vpop.f32.mrb[0].mxu0
    %v3636 = vadd.f32 0.0, %v3635
    %v3637 = vpop.f32.mrb[0].mxu0
    %3638 = vmatprep.mubr.f32.mxu0 0.0
    %3639 = vmatmul.mubr.f32.gmra.mrb[0].mxu0 %v3563
    %v3640 = vpop.f32.mrb[0].mxu0
    %v3641 = vadd.f32 0.0, %v3640
    %v3642 = vpop.f32.mrb[0].mxu0
    %3643 = vdwg.mxu0
    %v3644 = vsel %vm62, %v3545, -1e+30
    %v3645 = vsel %vm63, %v3550, -1e+30
    %v3646 = vsel %vm62, %v3636, -1e+30
    %v3647 = vsel %vm63, %v3641, -1e+30
    %v3648 = vsel %vm400, %v3644, -inf
    %3649 = vmax.xlane.f32.xlu0 %v3648
    %v3650 = vpop.xlane.xlu0 %3649
    %v3651 = vsel %vm400, %v3645, -inf
    %3652 = vmax.xlane.f32.xlu0 %v3651
    %v3653 = vpop.xlane.xlu0 %3652
    %v3654 = vsel %vm400, %v3646, -inf
    %3655 = vmax.xlane.f32.xlu0 %v3654
    %v3656 = vpop.xlane.xlu0 %3655
    %v3657 = vsel %vm400, %v3647, -inf
    %3658 = vmax.xlane.f32.xlu0 %v3657
    %v3659 = vpop.xlane.xlu0 %3658
    %v3660 = vsub.f32 %v3644, %v3650
    %v3661 = vsub.f32 %v3645, %v3653
    %v3662 = vsub.f32 %v3646, %v3656
    %v3663 = vsub.f32 %v3647, %v3659
    %v3664 = vmul.f32 %v3660, 1.442695
    %v3665 = vpow.pop %v3664
    %v3666 = vmul.f32 %v3661, 1.442695
    %v3667 = vpow.pop %v3666
    %v3668 = vmul.f32 %v3662, 1.442695
    %v3669 = vpow.pop %v3668
    %v3670 = vmul.f32 %v3663, 1.442695
    %v3671 = vpow.pop %v3670
    %v3672 = vsel %vm400, %v3665, 0.0
    %3673 = vadd.xlane.f32.xlu0 %v3672
    %v3674 = vpop.xlane.xlu0 %3673
    %v3675 = vsel %vm400, %v3667, 0.0
    %3676 = vadd.xlane.f32.xlu0 %v3675
    %v3677 = vpop.xlane.xlu0 %3676
    %v3678 = vsel %vm400, %v3669, 0.0
    %3679 = vadd.xlane.f32.xlu0 %v3678
    %v3680 = vpop.xlane.xlu0 %3679
    %v3681 = vsel %vm400, %v3671, 0.0
    %3682 = vadd.xlane.f32.xlu0 %v3681
    %v3683 = vpop.xlane.xlu0 %3682
    %v3684 = vrcp.pop %v3674
    %v3685 = vrcp.pop %v3677
    %v3686 = vrcp.pop %v3680
    %v3687 = vrcp.pop %v3683
    %v3688 = vmul.f32 %v3665, %v3684
    %v3689 = vmul.f32 %v3667, %v3685
    %v3690 = vmul.f32 %v3669, %v3686
    %v3691 = vmul.f32 %v3671, %v3687
    %3692 = vrot.lane.b32.xlu0 %v2519, 48
    %v3693 = vpop.permute.xlu0 %3692
    %3694 = vrot.lane.b32.xlu0 %v2522, 48
    %v3695 = vpop.permute.xlu0 %3694
    %v3699 = vsel %vm400, %v3688, 0
    %v3702 = vsel %vm400, %v3689, 0
    %3704 = vmatprep.subr.mxu0 0.0
    %3705 = vmatpush1.msra.mxu0 %v3693
    %3706 = vmatprep.subr.mxu0 0.0
    %3707 = vmatpush1.msra.mxu0 %v3695
    %3708 = vmatprep.subr.mxu0 0.0
    %3709 = vmatpush1.msra.mxu0 0.0
    %3710 = vmatprep.subr.mxu0 0.0
    %3711 = vmatpush1.msra.mxu0 0.0
    %3712 = vmatprep.subr.mxu0 0.0
    %3713 = vmatpush1.msra.mxu0 0.0
    %3714 = vmatprep.subr.mxu0 0.0
    %3715 = vmatpush1.msra.mxu0 0.0
    %3716 = vmatprep.subr.mxu0 0.0
    %3717 = vmatpush1.msra.mxu0 0.0
    %3718 = vmatprep.subr.mxu0 0.0
    %3719 = vmatpush1.msra.mxu0 0.0
    %3720 = vmatprep.subr.mxu0 0.0
    %3721 = vmatpush1.msra.mxu0 0.0
    %3722 = vmatprep.subr.mxu0 0.0
    %3723 = vmatpush1.msra.mxu0 0.0
    %3724 = vmatprep.subr.mxu0 0.0
    %3725 = vmatpush1.msra.mxu0 0.0
    %3726 = vmatprep.subr.mxu0 0.0
    %3727 = vmatpush1.msra.mxu0 0.0
    %3728 = vmatprep.subr.mxu0 0.0
    %3729 = vmatpush1.msra.mxu0 0.0
    %3730 = vmatprep.subr.mxu0 0.0
    %3731 = vmatpush1.msra.mxu0 0.0
    %3732 = vmatprep.subr.mxu0 0.0
    %3733 = vmatpush1.msra.mxu0 0.0
    %3734 = vmatprep.subr.mxu0 0.0
    %3735 = vmatpush1.msra.mxu0 0.0
    %3736 = vmatprep.subr.mxu0 0.0
    %3737 = vmatpush1.msra.mxu0 0.0
    %3738 = vmatprep.subr.mxu0 0.0
    %3739 = vmatpush1.msra.mxu0 0.0
    %3740 = vmatprep.subr.mxu0 0.0
    %3741 = vmatpush1.msra.mxu0 0.0
    %3742 = vmatprep.subr.mxu0 0.0
    %3743 = vmatpush1.msra.mxu0 0.0
    %3744 = vmatprep.subr.mxu0 0.0
    %3745 = vmatpush1.msra.mxu0 0.0
    %3746 = vmatprep.subr.mxu0 0.0
    %3747 = vmatpush1.msra.mxu0 0.0
    %3748 = vmatprep.subr.mxu0 0.0
    %3749 = vmatpush1.msra.mxu0 0.0
    %3750 = vmatprep.subr.mxu0 0.0
    %3751 = vmatpush1.msra.mxu0 0.0
    %3752 = vmatprep.subr.mxu0 0.0
    %3753 = vmatpush1.msra.mxu0 0.0
    %3754 = vmatprep.subr.mxu0 0.0
    %3755 = vmatpush1.msra.mxu0 0.0
    %3756 = vmatprep.subr.mxu0 0.0
    %3757 = vmatpush1.msra.mxu0 0.0
    %3758 = vmatprep.subr.mxu0 0.0
    %3759 = vmatpush1.msra.mxu0 0.0
    %3760 = vmatprep.subr.mxu0 0.0
    %3761 = vmatpush1.msra.mxu0 0.0
    %3762 = vmatprep.subr.mxu0 0.0
    %3763 = vmatpush1.msra.mxu0 0.0
    %3764 = vmatprep.subr.mxu0 0.0
    %3765 = vmatpush1.msra.mxu0 0.0
    %3766 = vmatprep.subr.mxu0 0.0
    %3767 = vmatpush1.msra.mxu0 0.0
    %3768 = vmatprep.mubr.f32.mxu0 0.0
    %3769 = vmatmul.mubr.f32.gmra.mrb[0].mxu0 %v3699
    %v3770 = vpop.f32.mrb[0].mxu0
    %v3771 = vadd.f32 0.0, %v3770
    %v3772 = vpop.f32.mrb[0].mxu0
    %3773 = vmatprep.mubr.f32.mxu0 0.0
    %3774 = vmatmul.mubr.f32.gmra.mrb[0].mxu0 %v3702
    %v3775 = vpop.f32.mrb[0].mxu0
    %v3776 = vadd.f32 0.0, %v3775
    %v3777 = vpop.f32.mrb[0].mxu0
    %3778 = vdwg.mxu0
    %3779 = vrot.lane.b32.xlu0 %v2527, 48
    %v3780 = vpop.permute.xlu0 %3779
    %3781 = vrot.lane.b32.xlu0 %v2530, 48
    %v3782 = vpop.permute.xlu0 %3781
    %v3786 = vsel %vm400, %v3690, 0
    %v3789 = vsel %vm400, %v3691, 0
    %3791 = vmatprep.subr.mxu0 0.0
    %3792 = vmatpush1.msra.mxu0 %v3780
    %3793 = vmatprep.subr.mxu0 0.0
    %3794 = vmatpush1.msra.mxu0 %v3782
    %3795 = vmatprep.subr.mxu0 0.0
    %3796 = vmatpush1.msra.mxu0 0.0
    %3797 = vmatprep.subr.mxu0 0.0
    %3798 = vmatpush1.msra.mxu0 0.0
    %3799 = vmatprep.subr.mxu0 0.0
    %3800 = vmatpush1.msra.mxu0 0.0
    %3801 = vmatprep.subr.mxu0 0.0
    %3802 = vmatpush1.msra.mxu0 0.0
    %3803 = vmatprep.subr.mxu0 0.0
    %3804 = vmatpush1.msra.mxu0 0.0
    %3805 = vmatprep.subr.mxu0 0.0
    %3806 = vmatpush1.msra.mxu0 0.0
    %3807 = vmatprep.subr.mxu0 0.0
    %3808 = vmatpush1.msra.mxu0 0.0
    %3809 = vmatprep.subr.mxu0 0.0
    %3810 = vmatpush1.msra.mxu0 0.0
    %3811 = vmatprep.subr.mxu0 0.0
    %3812 = vmatpush1.msra.mxu0 0.0
    %3813 = vmatprep.subr.mxu0 0.0
    %3814 = vmatpush1.msra.mxu0 0.0
    %3815 = vmatprep.subr.mxu0 0.0
    %3816 = vmatpush1.msra.mxu0 0.0
    %3817 = vmatprep.subr.mxu0 0.0
    %3818 = vmatpush1.msra.mxu0 0.0
    %3819 = vmatprep.subr.mxu0 0.0
    %3820 = vmatpush1.msra.mxu0 0.0
    %3821 = vmatprep.subr.mxu0 0.0
    %3822 = vmatpush1.msra.mxu0 0.0
    %3823 = vmatprep.subr.mxu0 0.0
    %3824 = vmatpush1.msra.mxu0 0.0
    %3825 = vmatprep.subr.mxu0 0.0
    %3826 = vmatpush1.msra.mxu0 0.0
    %3827 = vmatprep.subr.mxu0 0.0
    %3828 = vmatpush1.msra.mxu0 0.0
    %3829 = vmatprep.subr.mxu0 0.0
    %3830 = vmatpush1.msra.mxu0 0.0
    %3831 = vmatprep.subr.mxu0 0.0
    %3832 = vmatpush1.msra.mxu0 0.0
    %3833 = vmatprep.subr.mxu0 0.0
    %3834 = vmatpush1.msra.mxu0 0.0
    %3835 = vmatprep.subr.mxu0 0.0
    %3836 = vmatpush1.msra.mxu0 0.0
    %3837 = vmatprep.subr.mxu0 0.0
    %3838 = vmatpush1.msra.mxu0 0.0
    %3839 = vmatprep.subr.mxu0 0.0
    %3840 = vmatpush1.msra.mxu0 0.0
    %3841 = vmatprep.subr.mxu0 0.0
    %3842 = vmatpush1.msra.mxu0 0.0
    %3843 = vmatprep.subr.mxu0 0.0
    %3844 = vmatpush1.msra.mxu0 0.0
    %3845 = vmatprep.subr.mxu0 0.0
    %3846 = vmatpush1.msra.mxu0 0.0
    %3847 = vmatprep.subr.mxu0 0.0
    %3848 = vmatpush1.msra.mxu0 0.0
    %3849 = vmatprep.subr.mxu0 0.0
    %3850 = vmatpush1.msra.mxu0 0.0
    %3851 = vmatprep.subr.mxu0 0.0
    %3852 = vmatpush1.msra.mxu0 0.0
    %3853 = vmatprep.subr.mxu0 0.0
    %3854 = vmatpush1.msra.mxu0 0.0
    %3855 = vmatprep.mubr.f32.mxu0 0.0
    %3856 = vmatmul.mubr.f32.gmra.mrb[0].mxu0 %v3786
    %v3857 = vpop.f32.mrb[0].mxu0
    %v3858 = vadd.f32 0.0, %v3857
    %v3859 = vpop.f32.mrb[0].mxu0
    %3860 = vmatprep.mubr.f32.mxu0 0.0
    %3861 = vmatmul.mubr.f32.gmra.mrb[0].mxu0 %v3789
    %v3862 = vpop.f32.mrb[0].mxu0
    %v3863 = vadd.f32 0.0, %v3862
    %v3864 = vpop.f32.mrb[0].mxu0
    %3865 = vdwg.mxu0
    %v3866 = vpack.c.bf16 %v3776, %v3771
    %v3867 = vpack.c.bf16 %v3863, %v3858
    %v3869 = vsel %vm223, %v3866, 0
    %v3872 = vsel %vm223, %v3867, 0
    %v3875 = vsel %vm1033, %v2536, 0
    %3877 = vmatprep.subr.bf16.mxu0 0
    %3878 = vmatpush1.bf16.msra.mxu0 %v3875
    %3879 = vmatprep.subr.bf16.mxu0 0
    %3880 = vmatpush1.bf16.msra.mxu0 0
    %3881 = vmatprep.subr.bf16.mxu0 0
    %3882 = vmatpush1.bf16.msra.mxu0 0
    %3883 = vmatprep.subr.bf16.mxu0 0
    %3884 = vmatpush1.bf16.msra.mxu0 0
    %3885 = vmatprep.subr.bf16.mxu0 0
    %3886 = vmatpush1.bf16.msra.mxu0 0
    %3887 = vmatprep.subr.bf16.mxu0 0
    %3888 = vmatpush1.bf16.msra.mxu0 0
    %3889 = vmatprep.subr.bf16.mxu0 0
    %3890 = vmatpush1.bf16.msra.mxu0 0
    %3891 = vmatprep.subr.bf16.mxu0 0
    %3892 = vmatpush1.bf16.msra.mxu0 0
    %3893 = vmatprep.subr.bf16.mxu0 0
    %3894 = vmatpush1.bf16.msra.mxu0 0
    %3895 = vmatprep.subr.bf16.mxu0 0
    %3896 = vmatpush1.bf16.msra.mxu0 0
    %3897 = vmatprep.subr.bf16.mxu0 0
    %3898 = vmatpush1.bf16.msra.mxu0 0
    %3899 = vmatprep.subr.bf16.mxu0 0
    %3900 = vmatpush1.bf16.msra.mxu0 0
    %3901 = vmatprep.subr.bf16.mxu0 0
    %3902 = vmatpush1.bf16.msra.mxu0 0
    %3903 = vmatprep.subr.bf16.mxu0 0
    %3904 = vmatpush1.bf16.msra.mxu0 0
    %3905 = vmatprep.subr.bf16.mxu0 0
    %3906 = vmatpush1.bf16.msra.mxu0 0
    %3907 = vmatprep.subr.bf16.mxu0 0
    %3908 = vmatpush1.bf16.msra.mxu0 0
    %3909 = vmatprep.mubr.bf16.mxu0 0
    %3910 = vmatmul.mubr.bf16.gmra.mrb[0].mxu0 %v3869
    %v3911 = vpop.f32.mrb[0].mxu0
    %v3912 = vadd.f32 0.0, %v3911
    %v3913 = vpop.f32.mrb[0].mxu0
    %v3914 = vpop.f32.mrb[0].mxu0
    %v3915 = vadd.f32 0.0, %v3914
    %v3916 = vpop.f32.mrb[0].mxu0
    %3917 = vmatprep.mubr.bf16.mxu0 0
    %3918 = vmatmul.mubr.bf16.gmra.mrb[0].mxu0 %v3872
    %v3919 = vpop.f32.mrb[0].mxu0
    %v3920 = vadd.f32 0.0, %v3919
    %v3921 = vpop.f32.mrb[0].mxu0
    %v3922 = vpop.f32.mrb[0].mxu0
    %v3923 = vadd.f32 0.0, %v3922
    %v3924 = vpop.f32.mrb[0].mxu0
    %3925 = vdwg.mxu0
    %v3926 = vadd.f32 %v3448, %v3912
    %v3927 = vadd.f32 %v3451, %v3915
    %v3928 = vadd.f32 %v3456, %v3920
    %v3929 = vadd.f32 %v3459, %v3923
    %3930 = vrot.lane.b32.xlu0 %v2519, 104
    %v3931 = vpop.permute.xlu0 %3930
    %3932 = vrot.lane.b32.xlu0 %v2522, 104
    %v3933 = vpop.permute.xlu0 %3932
    %3934 = vrot.lane.b32.xlu0 %v2519, 72
    %v3935 = vpop.permute.xlu0 %3934
    %3936 = vrot.lane.b32.xlu0 %v2522, 72
    %v3937 = vpop.permute.xlu0 %3936
    %v3938 = vsel %vm223, %v3931, 0
    %v3940 = vsel %vm223, %v3933, 0
    %v3942 = vsel %vm223, %v3935, 0
    %v3944 = vsel %vm223, %v3937, 0
    %3946 = vmatprep.subr.mxu0 0.0
    %3947 = vmatpush1.xpose.msra.mxu0 %v3942
    %3948 = vmatprep.subr.mxu0 0.0
    %3949 = vmatpush1.xpose.msra.mxu0 %v3944
    %3950 = vmatprep.subr.mxu0 0.0
    %3951 = vmatpush1.xpose.msra.mxu0 0.0
    %3952 = vmatprep.subr.mxu0 0.0
    %3953 = vmatpush1.xpose.msra.mxu0 0.0
    %3954 = vmatprep.subr.mxu0 0.0
    %3955 = vmatpush1.xpose.msra.mxu0 0.0
    %3956 = vmatprep.subr.mxu0 0.0
    %3957 = vmatpush1.xpose.msra.mxu0 0.0
    %3958 = vmatprep.subr.mxu0 0.0
    %3959 = vmatpush1.xpose.msra.mxu0 0.0
    %3960 = vmatprep.subr.mxu0 0.0
    %3961 = vmatpush1.xpose.msra.mxu0 0.0
    %3962 = vmatprep.subr.mxu0 0.0
    %3963 = vmatpush1.xpose.msra.mxu0 0.0
    %3964 = vmatprep.subr.mxu0 0.0
    %3965 = vmatpush1.xpose.msra.mxu0 0.0
    %3966 = vmatprep.subr.mxu0 0.0
    %3967 = vmatpush1.xpose.msra.mxu0 0.0
    %3968 = vmatprep.subr.mxu0 0.0
    %3969 = vmatpush1.xpose.msra.mxu0 0.0
    %3970 = vmatprep.subr.mxu0 0.0
    %3971 = vmatpush1.xpose.msra.mxu0 0.0
    %3972 = vmatprep.subr.mxu0 0.0
    %3973 = vmatpush1.xpose.msra.mxu0 0.0
    %3974 = vmatprep.subr.mxu0 0.0
    %3975 = vmatpush1.xpose.msra.mxu0 0.0
    %3976 = vmatprep.subr.mxu0 0.0
    %3977 = vmatpush1.xpose.msra.mxu0 0.0
    %3978 = vmatprep.subr.mxu0 0.0
    %3979 = vmatpush1.xpose.msra.mxu0 0.0
    %3980 = vmatprep.subr.mxu0 0.0
    %3981 = vmatpush1.xpose.msra.mxu0 0.0
    %3982 = vmatprep.subr.mxu0 0.0
    %3983 = vmatpush1.xpose.msra.mxu0 0.0
    %3984 = vmatprep.subr.mxu0 0.0
    %3985 = vmatpush1.xpose.msra.mxu0 0.0
    %3986 = vmatprep.subr.mxu0 0.0
    %3987 = vmatpush1.xpose.msra.mxu0 0.0
    %3988 = vmatprep.subr.mxu0 0.0
    %3989 = vmatpush1.xpose.msra.mxu0 0.0
    %3990 = vmatprep.subr.mxu0 0.0
    %3991 = vmatpush1.xpose.msra.mxu0 0.0
    %3992 = vmatprep.subr.mxu0 0.0
    %3993 = vmatpush1.xpose.msra.mxu0 0.0
    %3994 = vmatprep.subr.mxu0 0.0
    %3995 = vmatpush1.xpose.msra.mxu0 0.0
    %3996 = vmatprep.subr.mxu0 0.0
    %3997 = vmatpush1.xpose.msra.mxu0 0.0
    %3998 = vmatprep.subr.mxu0 0.0
    %3999 = vmatpush1.xpose.msra.mxu0 0.0
    %4000 = vmatprep.subr.mxu0 0.0
    %4001 = vmatpush1.xpose.msra.mxu0 0.0
    %4002 = vmatprep.subr.mxu0 0.0
    %4003 = vmatpush1.xpose.msra.mxu0 0.0
    %4004 = vmatprep.subr.mxu0 0.0
    %4005 = vmatpush1.xpose.msra.mxu0 0.0
    %4006 = vmatprep.subr.mxu0 0.0
    %4007 = vmatpush1.xpose.msra.mxu0 0.0
    %4008 = vmatprep.subr.mxu0 0.0
    %4009 = vmatpush1.xpose.msra.mxu0 0.0
    %4010 = vmatprep.mubr.f32.mxu0 0.0
    %4011 = vmatmul.mubr.f32.gmra.mrb[0].mxu0 %v3938
    %v4012 = vpop.f32.mrb[0].mxu0
    %v4013 = vadd.f32 0.0, %v4012
    %v4014 = vpop.f32.mrb[0].mxu0
    %4015 = vmatprep.mubr.f32.mxu0 0.0
    %4016 = vmatmul.mubr.f32.gmra.mrb[0].mxu0 %v3940
    %v4017 = vpop.f32.mrb[0].mxu0
    %v4018 = vadd.f32 0.0, %v4017
    %v4019 = vpop.f32.mrb[0].mxu0
    %4020 = vdwg.mxu0
    %4021 = vrot.lane.b32.xlu0 %v2527, 104
    %v4022 = vpop.permute.xlu0 %4021
    %4023 = vrot.lane.b32.xlu0 %v2530, 104
    %v4024 = vpop.permute.xlu0 %4023
    %4025 = vrot.lane.b32.xlu0 %v2527, 72
    %v4026 = vpop.permute.xlu0 %4025
    %4027 = vrot.lane.b32.xlu0 %v2530, 72
    %v4028 = vpop.permute.xlu0 %4027
    %v4029 = vsel %vm223, %v4022, 0
    %v4031 = vsel %vm223, %v4024, 0
    %v4033 = vsel %vm223, %v4026, 0
    %v4035 = vsel %vm223, %v4028, 0
    %4037 = vmatprep.subr.mxu0 0.0
    %4038 = vmatpush1.xpose.msra.mxu0 %v4033
    %4039 = vmatprep.subr.mxu0 0.0
    %4040 = vmatpush1.xpose.msra.mxu0 %v4035
    %4041 = vmatprep.subr.mxu0 0.0
    %4042 = vmatpush1.xpose.msra.mxu0 0.0
    %4043 = vmatprep.subr.mxu0 0.0
    %4044 = vmatpush1.xpose.msra.mxu0 0.0
    %4045 = vmatprep.subr.mxu0 0.0
    %4046 = vmatpush1.xpose.msra.mxu0 0.0
    %4047 = vmatprep.subr.mxu0 0.0
    %4048 = vmatpush1.xpose.msra.mxu0 0.0
    %4049 = vmatprep.subr.mxu0 0.0
    %4050 = vmatpush1.xpose.msra.mxu0 0.0
    %4051 = vmatprep.subr.mxu0 0.0
    %4052 = vmatpush1.xpose.msra.mxu0 0.0
    %4053 = vmatprep.subr.mxu0 0.0
    %4054 = vmatpush1.xpose.msra.mxu0 0.0
    %4055 = vmatprep.subr.mxu0 0.0
    %4056 = vmatpush1.xpose.msra.mxu0 0.0
    %4057 = vmatprep.subr.mxu0 0.0
    %4058 = vmatpush1.xpose.msra.mxu0 0.0
    %4059 = vmatprep.subr.mxu0 0.0
    %4060 = vmatpush1.xpose.msra.mxu0 0.0
    %4061 = vmatprep.subr.mxu0 0.0
    %4062 = vmatpush1.xpose.msra.mxu0 0.0
    %4063 = vmatprep.subr.mxu0 0.0
    %4064 = vmatpush1.xpose.msra.mxu0 0.0
    %4065 = vmatprep.subr.mxu0 0.0
    %4066 = vmatpush1.xpose.msra.mxu0 0.0
    %4067 = vmatprep.subr.mxu0 0.0
    %4068 = vmatpush1.xpose.msra.mxu0 0.0
    %4069 = vmatprep.subr.mxu0 0.0
    %4070 = vmatpush1.xpose.msra.mxu0 0.0
    %4071 = vmatprep.subr.mxu0 0.0
    %4072 = vmatpush1.xpose.msra.mxu0 0.0
    %4073 = vmatprep.subr.mxu0 0.0
    %4074 = vmatpush1.xpose.msra.mxu0 0.0
    %4075 = vmatprep.subr.mxu0 0.0
    %4076 = vmatpush1.xpose.msra.mxu0 0.0
    %4077 = vmatprep.subr.mxu0 0.0
    %4078 = vmatpush1.xpose.msra.mxu0 0.0
    %4079 = vmatprep.subr.mxu0 0.0
    %4080 = vmatpush1.xpose.msra.mxu0 0.0
    %4081 = vmatprep.subr.mxu0 0.0
    %4082 = vmatpush1.xpose.msra.mxu0 0.0
    %4083 = vmatprep.subr.mxu0 0.0
    %4084 = vmatpush1.xpose.msra.mxu0 0.0
    %4085 = vmatprep.subr.mxu0 0.0
    %4086 = vmatpush1.xpose.msra.mxu0 0.0
    %4087 = vmatprep.subr.mxu0 0.0
    %4088 = vmatpush1.xpose.msra.mxu0 0.0
    %4089 = vmatprep.subr.mxu0 0.0
    %4090 = vmatpush1.xpose.msra.mxu0 0.0
    %4091 = vmatprep.subr.mxu0 0.0
    %4092 = vmatpush1.xpose.msra.mxu0 0.0
    %4093 = vmatprep.subr.mxu0 0.0
    %4094 = vmatpush1.xpose.msra.mxu0 0.0
    %4095 = vmatprep.subr.mxu0 0.0
    %4096 = vmatpush1.xpose.msra.mxu0 0.0
    %4097 = vmatprep.subr.mxu0 0.0
    %4098 = vmatpush1.xpose.msra.mxu0 0.0
    %4099 = vmatprep.subr.mxu0 0.0
    %4100 = vmatpush1.xpose.msra.mxu0 0.0
    %4101 = vmatprep.mubr.f32.mxu0 0.0
    %4102 = vmatmul.mubr.f32.gmra.mrb[0].mxu0 %v4029
    %v4103 = vpop.f32.mrb[0].mxu0
    %v4104 = vadd.f32 0.0, %v4103
    %v4105 = vpop.f32.mrb[0].mxu0
    %4106 = vmatprep.mubr.f32.mxu0 0.0
    %4107 = vmatmul.mubr.f32.gmra.mrb[0].mxu0 %v4031
    %v4108 = vpop.f32.mrb[0].mxu0
    %v4109 = vadd.f32 0.0, %v4108
    %v4110 = vpop.f32.mrb[0].mxu0
    %4111 = vdwg.mxu0
    %v4112 = vsel %vm62, %v4013, -1e+30
    %v4113 = vsel %vm63, %v4018, -1e+30
    %v4114 = vsel %vm62, %v4104, -1e+30
    %v4115 = vsel %vm63, %v4109, -1e+30
    %v4116 = vsel %vm400, %v4112, -inf
    %4117 = vmax.xlane.f32.xlu0 %v4116
    %v4118 = vpop.xlane.xlu0 %4117
    %v4119 = vsel %vm400, %v4113, -inf
    %4120 = vmax.xlane.f32.xlu0 %v4119
    %v4121 = vpop.xlane.xlu0 %4120
    %v4122 = vsel %vm400, %v4114, -inf
    %4123 = vmax.xlane.f32.xlu0 %v4122
    %v4124 = vpop.xlane.xlu0 %4123
    %v4125 = vsel %vm400, %v4115, -inf
    %4126 = vmax.xlane.f32.xlu0 %v4125
    %v4127 = vpop.xlane.xlu0 %4126
    %v4128 = vsub.f32 %v4112, %v4118
    %v4129 = vsub.f32 %v4113, %v4121
    %v4130 = vsub.f32 %v4114, %v4124
    %v4131 = vsub.f32 %v4115, %v4127
    %v4132 = vmul.f32 %v4128, 1.442695
    %v4133 = vpow.pop %v4132
    %v4134 = vmul.f32 %v4129, 1.442695
    %v4135 = vpow.pop %v4134
    %v4136 = vmul.f32 %v4130, 1.442695
    %v4137 = vpow.pop %v4136
    %v4138 = vmul.f32 %v4131, 1.442695
    %v4139 = vpow.pop %v4138
    %v4140 = vsel %vm400, %v4133, 0.0
    %4141 = vadd.xlane.f32.xlu0 %v4140
    %v4142 = vpop.xlane.xlu0 %4141
    %v4143 = vsel %vm400, %v4135, 0.0
    %4144 = vadd.xlane.f32.xlu0 %v4143
    %v4145 = vpop.xlane.xlu0 %4144
    %v4146 = vsel %vm400, %v4137, 0.0
    %4147 = vadd.xlane.f32.xlu0 %v4146
    %v4148 = vpop.xlane.xlu0 %4147
    %v4149 = vsel %vm400, %v4139, 0.0
    %4150 = vadd.xlane.f32.xlu0 %v4149
    %v4151 = vpop.xlane.xlu0 %4150
    %v4152 = vrcp.pop %v4142
    %v4153 = vrcp.pop %v4145
    %v4154 = vrcp.pop %v4148
    %v4155 = vrcp.pop %v4151
    %v4156 = vmul.f32 %v4133, %v4152
    %v4157 = vmul.f32 %v4135, %v4153
    %v4158 = vmul.f32 %v4137, %v4154
    %v4159 = vmul.f32 %v4139, %v4155
    %4160 = vrot.lane.b32.xlu0 %v2519, 40
    %v4161 = vpop.permute.xlu0 %4160
    %4162 = vrot.lane.b32.xlu0 %v2522, 40
    %v4163 = vpop.permute.xlu0 %4162
    %v4167 = vsel %vm400, %v4156, 0
    %v4170 = vsel %vm400, %v4157, 0
    %4172 = vmatprep.subr.mxu0 0.0
    %4173 = vmatpush1.msra.mxu0 %v4161
    %4174 = vmatprep.subr.mxu0 0.0
    %4175 = vmatpush1.msra.mxu0 %v4163
    %4176 = vmatprep.subr.mxu0 0.0
    %4177 = vmatpush1.msra.mxu0 0.0
    %4178 = vmatprep.subr.mxu0 0.0
    %4179 = vmatpush1.msra.mxu0 0.0
    %4180 = vmatprep.subr.mxu0 0.0
    %4181 = vmatpush1.msra.mxu0 0.0
    %4182 = vmatprep.subr.mxu0 0.0
    %4183 = vmatpush1.msra.mxu0 0.0
    %4184 = vmatprep.subr.mxu0 0.0
    %4185 = vmatpush1.msra.mxu0 0.0
    %4186 = vmatprep.subr.mxu0 0.0
    %4187 = vmatpush1.msra.mxu0 0.0
    %4188 = vmatprep.subr.mxu0 0.0
    %4189 = vmatpush1.msra.mxu0 0.0
    %4190 = vmatprep.subr.mxu0 0.0
    %4191 = vmatpush1.msra.mxu0 0.0
    %4192 = vmatprep.subr.mxu0 0.0
    %4193 = vmatpush1.msra.mxu0 0.0
    %4194 = vmatprep.subr.mxu0 0.0
    %4195 = vmatpush1.msra.mxu0 0.0
    %4196 = vmatprep.subr.mxu0 0.0
    %4197 = vmatpush1.msra.mxu0 0.0
    %4198 = vmatprep.subr.mxu0 0.0
    %4199 = vmatpush1.msra.mxu0 0.0
    %4200 = vmatprep.subr.mxu0 0.0
    %4201 = vmatpush1.msra.mxu0 0.0
    %4202 = vmatprep.subr.mxu0 0.0
    %4203 = vmatpush1.msra.mxu0 0.0
    %4204 = vmatprep.subr.mxu0 0.0
    %4205 = vmatpush1.msra.mxu0 0.0
    %4206 = vmatprep.subr.mxu0 0.0
    %4207 = vmatpush1.msra.mxu0 0.0
    %4208 = vmatprep.subr.mxu0 0.0
    %4209 = vmatpush1.msra.mxu0 0.0
    %4210 = vmatprep.subr.mxu0 0.0
    %4211 = vmatpush1.msra.mxu0 0.0
    %4212 = vmatprep.subr.mxu0 0.0
    %4213 = vmatpush1.msra.mxu0 0.0
    %4214 = vmatprep.subr.mxu0 0.0
    %4215 = vmatpush1.msra.mxu0 0.0
    %4216 = vmatprep.subr.mxu0 0.0
    %4217 = vmatpush1.msra.mxu0 0.0
    %4218 = vmatprep.subr.mxu0 0.0
    %4219 = vmatpush1.msra.mxu0 0.0
    %4220 = vmatprep.subr.mxu0 0.0
    %4221 = vmatpush1.msra.mxu0 0.0
    %4222 = vmatprep.subr.mxu0 0.0
    %4223 = vmatpush1.msra.mxu0 0.0
    %4224 = vmatprep.subr.mxu0 0.0
    %4225 = vmatpush1.msra.mxu0 0.0
    %4226 = vmatprep.subr.mxu0 0.0
    %4227 = vmatpush1.msra.mxu0 0.0
    %4228 = vmatprep.subr.mxu0 0.0
    %4229 = vmatpush1.msra.mxu0 0.0
    %4230 = vmatprep.subr.mxu0 0.0
    %4231 = vmatpush1.msra.mxu0 0.0
    %4232 = vmatprep.subr.mxu0 0.0
    %4233 = vmatpush1.msra.mxu0 0.0
    %4234 = vmatprep.subr.mxu0 0.0
    %4235 = vmatpush1.msra.mxu0 0.0
    %4236 = vmatprep.mubr.f32.mxu0 0.0
    %4237 = vmatmul.mubr.f32.gmra.mrb[0].mxu0 %v4167
    %v4238 = vpop.f32.mrb[0].mxu0
    %v4239 = vadd.f32 0.0, %v4238
    %v4240 = vpop.f32.mrb[0].mxu0
    %4241 = vmatprep.mubr.f32.mxu0 0.0
    %4242 = vmatmul.mubr.f32.gmra.mrb[0].mxu0 %v4170
    %v4243 = vpop.f32.mrb[0].mxu0
    %v4244 = vadd.f32 0.0, %v4243
    %v4245 = vpop.f32.mrb[0].mxu0
    %4246 = vdwg.mxu0
    %4247 = vrot.lane.b32.xlu0 %v2527, 40
    %v4248 = vpop.permute.xlu0 %4247
    %4249 = vrot.lane.b32.xlu0 %v2530, 40
    %v4250 = vpop.permute.xlu0 %4249
    %v4254 = vsel %vm400, %v4158, 0
    %v4257 = vsel %vm400, %v4159, 0
    %4259 = vmatprep.subr.mxu0 0.0
    %4260 = vmatpush1.msra.mxu0 %v4248
    %4261 = vmatprep.subr.mxu0 0.0
    %4262 = vmatpush1.msra.mxu0 %v4250
    %4263 = vmatprep.subr.mxu0 0.0
    %4264 = vmatpush1.msra.mxu0 0.0
    %4265 = vmatprep.subr.mxu0 0.0
    %4266 = vmatpush1.msra.mxu0 0.0
    %4267 = vmatprep.subr.mxu0 0.0
    %4268 = vmatpush1.msra.mxu0 0.0
    %4269 = vmatprep.subr.mxu0 0.0
    %4270 = vmatpush1.msra.mxu0 0.0
    %4271 = vmatprep.subr.mxu0 0.0
    %4272 = vmatpush1.msra.mxu0 0.0
    %4273 = vmatprep.subr.mxu0 0.0
    %4274 = vmatpush1.msra.mxu0 0.0
    %4275 = vmatprep.subr.mxu0 0.0
    %4276 = vmatpush1.msra.mxu0 0.0
    %4277 = vmatprep.subr.mxu0 0.0
    %4278 = vmatpush1.msra.mxu0 0.0
    %4279 = vmatprep.subr.mxu0 0.0
    %4280 = vmatpush1.msra.mxu0 0.0
    %4281 = vmatprep.subr.mxu0 0.0
    %4282 = vmatpush1.msra.mxu0 0.0
    %4283 = vmatprep.subr.mxu0 0.0
    %4284 = vmatpush1.msra.mxu0 0.0
    %4285 = vmatprep.subr.mxu0 0.0
    %4286 = vmatpush1.msra.mxu0 0.0
    %4287 = vmatprep.subr.mxu0 0.0
    %4288 = vmatpush1.msra.mxu0 0.0
    %4289 = vmatprep.subr.mxu0 0.0
    %4290 = vmatpush1.msra.mxu0 0.0
    %4291 = vmatprep.subr.mxu0 0.0
    %4292 = vmatpush1.msra.mxu0 0.0
    %4293 = vmatprep.subr.mxu0 0.0
    %4294 = vmatpush1.msra.mxu0 0.0
    %4295 = vmatprep.subr.mxu0 0.0
    %4296 = vmatpush1.msra.mxu0 0.0
    %4297 = vmatprep.subr.mxu0 0.0
    %4298 = vmatpush1.msra.mxu0 0.0
    %4299 = vmatprep.subr.mxu0 0.0
    %4300 = vmatpush1.msra.mxu0 0.0
    %4301 = vmatprep.subr.mxu0 0.0
    %4302 = vmatpush1.msra.mxu0 0.0
    %4303 = vmatprep.subr.mxu0 0.0
    %4304 = vmatpush1.msra.mxu0 0.0
    %4305 = vmatprep.subr.mxu0 0.0
    %4306 = vmatpush1.msra.mxu0 0.0
    %4307 = vmatprep.subr.mxu0 0.0
    %4308 = vmatpush1.msra.mxu0 0.0
    %4309 = vmatprep.subr.mxu0 0.0
    %4310 = vmatpush1.msra.mxu0 0.0
    %4311 = vmatprep.subr.mxu0 0.0
    %4312 = vmatpush1.msra.mxu0 0.0
    %4313 = vmatprep.subr.mxu0 0.0
    %4314 = vmatpush1.msra.mxu0 0.0
    %4315 = vmatprep.subr.mxu0 0.0
    %4316 = vmatpush1.msra.mxu0 0.0
    %4317 = vmatprep.subr.mxu0 0.0
    %4318 = vmatpush1.msra.mxu0 0.0
    %4319 = vmatprep.subr.mxu0 0.0
    %4320 = vmatpush1.msra.mxu0 0.0
    %4321 = vmatprep.subr.mxu0 0.0
    %4322 = vmatpush1.msra.mxu0 0.0
    %4323 = vmatprep.mubr.f32.mxu0 0.0
    %4324 = vmatmul.mubr.f32.gmra.mrb[0].mxu0 %v4254
    %v4325 = vpop.f32.mrb[0].mxu0
    %v4326 = vadd.f32 0.0, %v4325
    %v4327 = vpop.f32.mrb[0].mxu0
    %4328 = vmatprep.mubr.f32.mxu0 0.0
    %4329 = vmatmul.mubr.f32.gmra.mrb[0].mxu0 %v4257
    %v4330 = vpop.f32.mrb[0].mxu0
    %v4331 = vadd.f32 0.0, %v4330
    %v4332 = vpop.f32.mrb[0].mxu0
    %4333 = vdwg.mxu0
    %v4334 = vpack.c.bf16 %v4244, %v4239
    %v4335 = vpack.c.bf16 %v4331, %v4326
    %v4337 = vsel %vm223, %v4334, 0
    %v4340 = vsel %vm223, %v4335, 0
    %v4343 = vsel %vm1033, %v2537, 0
    %4345 = vmatprep.subr.bf16.mxu0 0
    %4346 = vmatpush1.bf16.msra.mxu0 %v4343
    %4347 = vmatprep.subr.bf16.mxu0 0
    %4348 = vmatpush1.bf16.msra.mxu0 0
    %4349 = vmatprep.subr.bf16.mxu0 0
    %4350 = vmatpush1.bf16.msra.mxu0 0
    %4351 = vmatprep.subr.bf16.mxu0 0
    %4352 = vmatpush1.bf16.msra.mxu0 0
    %4353 = vmatprep.subr.bf16.mxu0 0
    %4354 = vmatpush1.bf16.msra.mxu0 0
    %4355 = vmatprep.subr.bf16.mxu0 0
    %4356 = vmatpush1.bf16.msra.mxu0 0
    %4357 = vmatprep.subr.bf16.mxu0 0
    %4358 = vmatpush1.bf16.msra.mxu0 0
    %4359 = vmatprep.subr.bf16.mxu0 0
    %4360 = vmatpush1.bf16.msra.mxu0 0
    %4361 = vmatprep.subr.bf16.mxu0 0
    %4362 = vmatpush1.bf16.msra.mxu0 0
    %4363 = vmatprep.subr.bf16.mxu0 0
    %4364 = vmatpush1.bf16.msra.mxu0 0
    %4365 = vmatprep.subr.bf16.mxu0 0
    %4366 = vmatpush1.bf16.msra.mxu0 0
    %4367 = vmatprep.subr.bf16.mxu0 0
    %4368 = vmatpush1.bf16.msra.mxu0 0
    %4369 = vmatprep.subr.bf16.mxu0 0
    %4370 = vmatpush1.bf16.msra.mxu0 0
    %4371 = vmatprep.subr.bf16.mxu0 0
    %4372 = vmatpush1.bf16.msra.mxu0 0
    %4373 = vmatprep.subr.bf16.mxu0 0
    %4374 = vmatpush1.bf16.msra.mxu0 0
    %4375 = vmatprep.subr.bf16.mxu0 0
    %4376 = vmatpush1.bf16.msra.mxu0 0
    %4377 = vmatprep.mubr.bf16.mxu0 0
    %4378 = vmatmul.mubr.bf16.gmra.mrb[0].mxu0 %v4337
    %v4379 = vpop.f32.mrb[0].mxu0
    %v4380 = vadd.f32 0.0, %v4379
    %v4381 = vpop.f32.mrb[0].mxu0
    %v4382 = vpop.f32.mrb[0].mxu0
    %v4383 = vadd.f32 0.0, %v4382
    %v4384 = vpop.f32.mrb[0].mxu0
    %4385 = vmatprep.mubr.bf16.mxu0 0
    %4386 = vmatmul.mubr.bf16.gmra.mrb[0].mxu0 %v4340
    %v4387 = vpop.f32.mrb[0].mxu0
    %v4388 = vadd.f32 0.0, %v4387
    %v4389 = vpop.f32.mrb[0].mxu0
    %v4390 = vpop.f32.mrb[0].mxu0
    %v4391 = vadd.f32 0.0, %v4390
    %v4392 = vpop.f32.mrb[0].mxu0
    %4393 = vdwg.mxu0
    %v4394 = vadd.f32 %v3926, %v4380
    %v4395 = vadd.f32 %v3927, %v4383
    %v4396 = vadd.f32 %v3928, %v4388
    %v4397 = vadd.f32 %v3929, %v4391
    %v4398 = vadd.f32 %v2379, %v4394
    %v4399 = vadd.f32 %v2380, %v4395
    %v4400 = vadd.f32 %v2381, %v4396
    %v4401 = vadd.f32 %v2382, %v4397
    %s4402 = scalar_lea.vmem %s5, 1
    %v4403 = vld [vmem:[%s4402] sm:$0x1]
    %v4405 = vlaneseq
    %v4406 = vshrl.u32 %v4405, 7
    %v4407 = vsub.s32 0, %v4406
    %v4408 = vrot.slane %v4403, %v4407
    %v4410 = vadd.f32 %v4398, %v4408
    %v4411 = vadd.f32 %v4399, %v4408
    %v4412 = vadd.f32 %v4400, %v4408
    %v4413 = vadd.f32 %v4401, %v4408
    %s4414 = scalar_lea.vmem %s6, 1
    %v4415 = vld [vmem:[%s4414] sm:$0x1]
    %s4416 = scalar_lea.vmem %s7, 1
    %v4417 = vld [vmem:[%s4416] sm:$0x1]
    %v4418 = vsel %vm66, %v4410, 0.0
    %4419 = vadd.xlane.f32.xlu0 %v4418
    %v4420 = vpop.xlane.xlu0 %4419
    %v4421 = vsel %vm66, %v4411, 0.0
    %4422 = vadd.xlane.f32.xlu0 %v4421
    %v4423 = vpop.xlane.xlu0 %4422
    %v4424 = vsel %vm66, %v4412, 0.0
    %4425 = vadd.xlane.f32.xlu0 %v4424
    %v4426 = vpop.xlane.xlu0 %4425
    %v4427 = vsel %vm66, %v4413, 0.0
    %4428 = vadd.xlane.f32.xlu0 %v4427
    %v4429 = vpop.xlane.xlu0 %4428
    %v4430 = vmul.f32 %v4420, %v79
    %v4431 = vmul.f32 %v4423, %v79
    %v4432 = vmul.f32 %v4426, %v79
    %v4433 = vmul.f32 %v4429, %v79
    %v4434 = vsub.f32 %v4410, %v4430
    %v4435 = vsub.f32 %v4411, %v4431
    %v4436 = vsub.f32 %v4412, %v4432
    %v4437 = vsub.f32 %v4413, %v4433
    %v4438 = vmul.f32 %v4434, %v4434
    %v4439 = vmul.f32 %v4435, %v4435
    %v4440 = vmul.f32 %v4436, %v4436
    %v4441 = vmul.f32 %v4437, %v4437
    %v4442 = vsel %vm66, %v4438, 0.0
    %4443 = vadd.xlane.f32.xlu0 %v4442
    %v4444 = vpop.xlane.xlu0 %4443
    %v4445 = vsel %vm66, %v4439, 0.0
    %4446 = vadd.xlane.f32.xlu0 %v4445
    %v4447 = vpop.xlane.xlu0 %4446
    %v4448 = vsel %vm66, %v4440, 0.0
    %4449 = vadd.xlane.f32.xlu0 %v4448
    %v4450 = vpop.xlane.xlu0 %4449
    %v4451 = vsel %vm66, %v4441, 0.0
    %4452 = vadd.xlane.f32.xlu0 %v4451
    %v4453 = vpop.xlane.xlu0 %4452
    %v4454 = vmul.f32 %v4444, %v79
    %v4455 = vmul.f32 %v4447, %v79
    %v4456 = vmul.f32 %v4450, %v79
    %v4457 = vmul.f32 %v4453, %v79
    %v4458 = vadd.f32 %v4454, 1e-05
    %v4459 = vadd.f32 %v4455, 1e-05
    %v4460 = vadd.f32 %v4456, 1e-05
    %v4461 = vadd.f32 %v4457, 1e-05
    %v4462 = vrsqrt.pop %v4458
    %v4463 = vrsqrt.pop %v4459
    %v4464 = vrsqrt.pop %v4460
    %v4465 = vrsqrt.pop %v4461
    %v4466 = vmul.f32 %v4434, %v4462
    %v4467 = vmul.f32 %v4435, %v4463
    %v4468 = vmul.f32 %v4436, %v4464
    %v4469 = vmul.f32 %v4437, %v4465
    %v4471 = vlaneseq
    %v4472 = vshrl.u32 %v4471, 7
    %v4473 = vsub.s32 0, %v4472
    %v4474 = vrot.slane %v4415, %v4473
    %v4476 = vmul.f32 %v4466, %v4474
    %v4477 = vmul.f32 %v4467, %v4474
    %v4478 = vmul.f32 %v4468, %v4474
    %v4479 = vmul.f32 %v4469, %v4474
    %v4481 = vlaneseq
    %v4482 = vshrl.u32 %v4481, 7
    %v4483 = vsub.s32 0, %v4482
    %v4484 = vrot.slane %v4417, %v4483
    %v4486 = vadd.f32 %v4476, %v4484
    %v4487 = vadd.f32 %v4477, %v4484
    %v4488 = vadd.f32 %v4478, %v4484
    %v4489 = vadd.f32 %v4479, %v4484
    %s4490 = scalar_lea.vmem %s8, 16
    %v4491 = vld [vmem:[%s4490] sm:$0xf]
    %v4492 = vld [vmem:[%s4490 + $0x4] sm:$0xf]
    %v4493 = vld [vmem:[%s4490 + $0x8] sm:$0xf]
    %v4494 = vld [vmem:[%s4490 + $0xc] sm:$0xf]
    %v4495 = vpack.c.bf16 %v4487, %v4486
    %v4496 = vpack.c.bf16 %v4489, %v4488
    %s4497 = scalar_lea.vmem %s9, 1
    %v4498 = vld [vmem:[%s4497] sm:$0x1]
    %v4500 = vlaneseq
    %v4501 = vshrl.u32 %v4500, 7
    %v4502 = vsub.s32 0, %v4501
    %v4503 = vrot.slane %v4498, %v4502
    %v4509 = vunpack.c.l.b16 %v4491
    %v4510 = vunpack.c.l.b16 %v4492
    %v4511 = vunpack.c.l.b16 %v4493
    %v4512 = vunpack.c.l.b16 %v4494
    %v4513 = vpack.c.b16 %v4510, %v4509
    %v4514 = vpack.c.b16 %v4512, %v4511
    %v4518 = vsel %vm66, %v4495, 0
    %v4521 = vsel %vm66, %v4496, 0
    %4523 = vmatprep.subr.bf16.mxu0 0
    %4524 = vmatpush1.bf16.msra.mxu0 %v4513
    %4525 = vmatprep.subr.bf16.mxu0 0
    %4526 = vmatpush1.bf16.msra.mxu0 %v4514
    %4527 = vmatprep.subr.bf16.mxu0 0
    %4528 = vmatpush1.bf16.msra.mxu0 0
    %4529 = vmatprep.subr.bf16.mxu0 0
    %4530 = vmatpush1.bf16.msra.mxu0 0
    %4531 = vmatprep.subr.bf16.mxu0 0
    %4532 = vmatpush1.bf16.msra.mxu0 0
    %4533 = vmatprep.subr.bf16.mxu0 0
    %4534 = vmatpush1.bf16.msra.mxu0 0
    %4535 = vmatprep.subr.bf16.mxu0 0
    %4536 = vmatpush1.bf16.msra.mxu0 0
    %4537 = vmatprep.subr.bf16.mxu0 0
    %4538 = vmatpush1.bf16.msra.mxu0 0
    %4539 = vmatprep.subr.bf16.mxu0 0
    %4540 = vmatpush1.bf16.msra.mxu0 0
    %4541 = vmatprep.subr.bf16.mxu0 0
    %4542 = vmatpush1.bf16.msra.mxu0 0
    %4543 = vmatprep.subr.bf16.mxu0 0
    %4544 = vmatpush1.bf16.msra.mxu0 0
    %4545 = vmatprep.subr.bf16.mxu0 0
    %4546 = vmatpush1.bf16.msra.mxu0 0
    %4547 = vmatprep.subr.bf16.mxu0 0
    %4548 = vmatpush1.bf16.msra.mxu0 0
    %4549 = vmatprep.subr.bf16.mxu0 0
    %4550 = vmatpush1.bf16.msra.mxu0 0
    %4551 = vmatprep.subr.bf16.mxu0 0
    %4552 = vmatpush1.bf16.msra.mxu0 0
    %4553 = vmatprep.subr.bf16.mxu0 0
    %4554 = vmatpush1.bf16.msra.mxu0 0
    %4555 = vmatprep.mubr.bf16.mxu0 0
    %4556 = vmatmul.mubr.bf16.gmra.mrb[0].mxu0 %v4518
    %v4557 = vpop.f32.mrb[0].mxu0
    %v4558 = vadd.f32 %v4503, %v4557
    %v4559 = vpop.f32.mrb[0].mxu0
    %v4560 = vpop.f32.mrb[0].mxu0
    %v4561 = vadd.f32 %v4503, %v4560
    %v4562 = vpop.f32.mrb[0].mxu0
    %4563 = vmatprep.mubr.bf16.mxu0 0
    %4564 = vmatmul.mubr.bf16.gmra.mrb[0].mxu0 %v4521
    %v4565 = vpop.f32.mrb[0].mxu0
    %v4566 = vadd.f32 %v4503, %v4565
    %v4567 = vpop.f32.mrb[0].mxu0
    %v4568 = vpop.f32.mrb[0].mxu0
    %v4569 = vadd.f32 %v4503, %v4568
    %v4570 = vpop.f32.mrb[0].mxu0
    %4571 = vdwg.mxu0
    %v4572 = vmax.f32 %v4558, 0.0
    %v4573 = vmax.f32 %v4561, 0.0
    %v4574 = vmax.f32 %v4566, 0.0
    %v4575 = vmax.f32 %v4569, 0.0
    %s4576 = scalar_lea.vmem %s10, 64
    %v4577 = vld [vmem:[%s4576] sm:$0xf]
    %v4578 = vld [vmem:[%s4576 + $0x4] sm:$0xf]
    %v4579 = vld [vmem:[%s4576 + $0x8] sm:$0xf]
    %v4580 = vld [vmem:[%s4576 + $0xc] sm:$0xf]
    %v4581 = vld [vmem:[%s4576 + $0x10] sm:$0xf]
    %v4582 = vld [vmem:[%s4576 + $0x14] sm:$0xf]
    %v4583 = vld [vmem:[%s4576 + $0x18] sm:$0xf]
    %v4584 = vld [vmem:[%s4576 + $0x1c] sm:$0xf]
    %v4585 = vld [vmem:[%s4576 + $0x20] sm:$0xf]
    %v4586 = vld [vmem:[%s4576 + $0x24] sm:$0xf]
    %v4587 = vld [vmem:[%s4576 + $0x28] sm:$0xf]
    %v4588 = vld [vmem:[%s4576 + $0x2c] sm:$0xf]
    %v4589 = vld [vmem:[%s4576 + $0x30] sm:$0xf]
    %v4590 = vld [vmem:[%s4576 + $0x34] sm:$0xf]
    %v4591 = vld [vmem:[%s4576 + $0x38] sm:$0xf]
    %v4592 = vld [vmem:[%s4576 + $0x3c] sm:$0xf]
    %v4593 = vpack.c.bf16 %v4573, %v4572
    %v4594 = vpack.c.bf16 %v4575, %v4574
    %v4611 = vunpack.c.l.b16 %v4577
    %v4612 = vunpack.c.l.b16 %v4578
    %v4613 = vunpack.c.l.b16 %v4579
    %v4614 = vunpack.c.l.b16 %v4580
    %v4615 = vunpack.c.l.b16 %v4581
    %v4616 = vunpack.c.l.b16 %v4582
    %v4617 = vunpack.c.l.b16 %v4583
    %v4618 = vunpack.c.l.b16 %v4584
    %v4619 = vunpack.c.l.b16 %v4585
    %v4620 = vunpack.c.l.b16 %v4586
    %v4621 = vunpack.c.l.b16 %v4587
    %v4622 = vunpack.c.l.b16 %v4588
    %v4623 = vunpack.c.l.b16 %v4589
    %v4624 = vunpack.c.l.b16 %v4590
    %v4625 = vunpack.c.l.b16 %v4591
    %v4626 = vunpack.c.l.b16 %v4592
    %v4627 = vpack.c.b16 %v4612, %v4611
    %v4628 = vpack.c.b16 %v4614, %v4613
    %v4629 = vpack.c.b16 %v4616, %v4615
    %v4630 = vpack.c.b16 %v4618, %v4617
    %v4631 = vpack.c.b16 %v4620, %v4619
    %v4632 = vpack.c.b16 %v4622, %v4621
    %v4633 = vpack.c.b16 %v4624, %v4623
    %v4634 = vpack.c.b16 %v4626, %v4625
    %4643 = vmatprep.subr.bf16.mxu0 0
    %4644 = vmatpush1.bf16.msra.mxu0 %v4627
    %4645 = vmatprep.subr.bf16.mxu0 0
    %4646 = vmatpush1.bf16.msra.mxu0 %v4628
    %4647 = vmatprep.subr.bf16.mxu0 0
    %4648 = vmatpush1.bf16.msra.mxu0 %v4629
    %4649 = vmatprep.subr.bf16.mxu0 0
    %4650 = vmatpush1.bf16.msra.mxu0 %v4630
    %4651 = vmatprep.subr.bf16.mxu0 0
    %4652 = vmatpush1.bf16.msra.mxu0 %v4631
    %4653 = vmatprep.subr.bf16.mxu0 0
    %4654 = vmatpush1.bf16.msra.mxu0 %v4632
    %4655 = vmatprep.subr.bf16.mxu0 0
    %4656 = vmatpush1.bf16.msra.mxu0 %v4633
    %4657 = vmatprep.subr.bf16.mxu0 0
    %4658 = vmatpush1.bf16.msra.mxu0 %v4634
    %4659 = vmatprep.subr.bf16.mxu0 0
    %4660 = vmatpush1.bf16.msra.mxu0 0
    %4661 = vmatprep.subr.bf16.mxu0 0
    %4662 = vmatpush1.bf16.msra.mxu0 0
    %4663 = vmatprep.subr.bf16.mxu0 0
    %4664 = vmatpush1.bf16.msra.mxu0 0
    %4665 = vmatprep.subr.bf16.mxu0 0
    %4666 = vmatpush1.bf16.msra.mxu0 0
    %4667 = vmatprep.subr.bf16.mxu0 0
    %4668 = vmatpush1.bf16.msra.mxu0 0
    %4669 = vmatprep.subr.bf16.mxu0 0
    %4670 = vmatpush1.bf16.msra.mxu0 0
    %4671 = vmatprep.subr.bf16.mxu0 0
    %4672 = vmatpush1.bf16.msra.mxu0 0
    %4673 = vmatprep.subr.bf16.mxu0 0
    %4674 = vmatpush1.bf16.msra.mxu0 0
    %4675 = vmatprep.mubr.bf16.mxu0 0
    %4676 = vmatmul.mubr.bf16.gmra.mrb[0].mxu0 %v4593
    %v4677 = vpop.f32.mrb[0].mxu0
    %v4678 = vadd.f32 0.0, %v4677
    %v4679 = vpop.f32.mrb[0].mxu0
    %v4680 = vpop.f32.mrb[0].mxu0
    %v4681 = vadd.f32 0.0, %v4680
    %v4682 = vpop.f32.mrb[0].mxu0
    %4683 = vmatprep.mubr.bf16.mxu0 0
    %4684 = vmatmul.mubr.bf16.gmra.mrb[0].mxu0 %v4594
    %v4685 = vpop.f32.mrb[0].mxu0
    %v4686 = vadd.f32 0.0, %v4685
    %v4687 = vpop.f32.mrb[0].mxu0
    %v4688 = vpop.f32.mrb[0].mxu0
    %v4689 = vadd.f32 0.0, %v4688
    %v4690 = vpop.f32.mrb[0].mxu0
    %4691 = vdwg.mxu0
    %v4692 = vadd.f32 %v4410, %v4678
    %v4693 = vadd.f32 %v4411, %v4681
    %v4694 = vadd.f32 %v4412, %v4686
    %v4695 = vadd.f32 %v4413, %v4689
    %s4696 = scalar_lea.vmem %s11, 1
    %v4697 = vld [vmem:[%s4696] sm:$0x1]
    %v4699 = vlaneseq
    %v4700 = vshrl.u32 %v4699, 7
    %v4701 = vsub.s32 0, %v4700
    %v4702 = vrot.slane %v4697, %v4701
    %v4704 = vadd.f32 %v4692, %v4702
    %v4705 = vadd.f32 %v4693, %v4702
    %v4706 = vadd.f32 %v4694, %v4702
    %v4707 = vadd.f32 %v4695, %v4702
    %v4708 = vld [vmem:[%s12] sm:$0xf]
    %v4709 = vld [vmem:[%s12 + $0x4] sm:$0xf]
    %v4710 = vld [vmem:[%s12 + $0x8] sm:$0xf]
    %v4711 = vld [vmem:[%s12 + $0xc] sm:$0xf]
    %v4712 = vpack.c.bf16 %v4705, %v4704
    %v4713 = vpack.c.bf16 %v4707, %v4706
    %v4714 = vld [vmem:[%s13] sm:$0x1]
    %v4716 = vlaneseq
    %v4717 = vshrl.u32 %v4716, 7
    %v4718 = vsub.s32 0, %v4717
    %v4719 = vrot.slane %v4714, %v4718
    %v4725 = vunpack.c.l.b16 %v4708
    %v4726 = vunpack.c.l.b16 %v4709
    %v4727 = vunpack.c.l.b16 %v4710
    %v4728 = vunpack.c.l.b16 %v4711
    %v4729 = vpack.c.b16 %v4726, %v4725
    %v4730 = vpack.c.b16 %v4728, %v4727
    %v4734 = vsel %vm66, %v4712, 0
    %v4737 = vsel %vm66, %v4713, 0
    %4739 = vmatprep.subr.bf16.mxu0 0
    %4740 = vmatpush1.bf16.msra.mxu0 %v4729
    %4741 = vmatprep.subr.bf16.mxu0 0
    %4742 = vmatpush1.bf16.msra.mxu0 %v4730
    %4743 = vmatprep.subr.bf16.mxu0 0
    %4744 = vmatpush1.bf16.msra.mxu0 0
    %4745 = vmatprep.subr.bf16.mxu0 0
    %4746 = vmatpush1.bf16.msra.mxu0 0
    %4747 = vmatprep.subr.bf16.mxu0 0
    %4748 = vmatpush1.bf16.msra.mxu0 0
    %4749 = vmatprep.subr.bf16.mxu0 0
    %4750 = vmatpush1.bf16.msra.mxu0 0
    %4751 = vmatprep.subr.bf16.mxu0 0
    %4752 = vmatpush1.bf16.msra.mxu0 0
    %4753 = vmatprep.subr.bf16.mxu0 0
    %4754 = vmatpush1.bf16.msra.mxu0 0
    %4755 = vmatprep.subr.bf16.mxu0 0
    %4756 = vmatpush1.bf16.msra.mxu0 0
    %4757 = vmatprep.subr.bf16.mxu0 0
    %4758 = vmatpush1.bf16.msra.mxu0 0
    %4759 = vmatprep.subr.bf16.mxu0 0
    %4760 = vmatpush1.bf16.msra.mxu0 0
    %4761 = vmatprep.subr.bf16.mxu0 0
    %4762 = vmatpush1.bf16.msra.mxu0 0
    %4763 = vmatprep.subr.bf16.mxu0 0
    %4764 = vmatpush1.bf16.msra.mxu0 0
    %4765 = vmatprep.subr.bf16.mxu0 0
    %4766 = vmatpush1.bf16.msra.mxu0 0
    %4767 = vmatprep.subr.bf16.mxu0 0
    %4768 = vmatpush1.bf16.msra.mxu0 0
    %4769 = vmatprep.subr.bf16.mxu0 0
    %4770 = vmatpush1.bf16.msra.mxu0 0
    %4771 = vmatprep.mubr.bf16.mxu0 0
    %4772 = vmatmul.mubr.bf16.gmra.mrb[0].mxu0 %v4734
    %v4773 = vpop.f32.mrb[0].mxu0
    %v4774 = vadd.f32 %v4719, %v4773
    %v4775 = vpop.f32.mrb[0].mxu0
    %v4776 = vpop.f32.mrb[0].mxu0
    %v4777 = vadd.f32 %v4719, %v4776
    %v4778 = vpop.f32.mrb[0].mxu0
    %4779 = vmatprep.mubr.bf16.mxu0 0
    %4780 = vmatmul.mubr.bf16.gmra.mrb[0].mxu0 %v4737
    %v4781 = vpop.f32.mrb[0].mxu0
    %v4782 = vadd.f32 %v4719, %v4781
    %v4783 = vpop.f32.mrb[0].mxu0
    %v4784 = vpop.f32.mrb[0].mxu0
    %v4785 = vadd.f32 %v4719, %v4784
    %v4786 = vpop.f32.mrb[0].mxu0
    %4787 = vdwg.mxu0
    %4788 = vst [vmem:[#allocation2] sm:$0xff] %v4774
    %4789 = vst [vmem:[#allocation2 + $0x8] sm:$0xff] %v4777
    %4790 = vst [vmem:[#allocation2 + $0x10] sm:$0xff] %v4782
    %4791 = vst [vmem:[#allocation2 + $0x18] sm:$0xff] %v4785
    // Predicated region
    $region58: #{_bigram_lm_forward.1} parent=1 // pred_check
      _
    $region59: #{_bigram_lm_forward.1} parent=1 // pred_check_branch
      %4793 = sbr.rel (0) target = $region61
    $region60: #{_bigram_lm_forward.1} parent=1 // pred_region
      %s4795 = ssub.s32 512, 512
      %4796 = vsyncadd [#allocation3], %s4795
      %s4797 = sshll.u32 [#allocation2], 4
      %s4798 = int_to_ptr.vmem [resolvable:$true] %s4797
      %4803 = dma.vmem_to_hbm [thread:$0]  %s4798, 512, %s14, [#allocation3], 128, 128, 8
    $region61: #{_bigram_lm_forward.1} parent=1 // pred_fallthru
      _
    // Predicated region
    $region62: #{_bigram_lm_forward.1} parent=1 // pred_check
      _
    $region63: #{_bigram_lm_forward.1} parent=1 // pred_check_branch
      %4805 = sbr.rel (0) target = $region65
    $region64: #{_bigram_lm_forward.1} parent=1 // pred_region
      %4806 = dma.done [#allocation3], 512
    $region65: #{_bigram_lm_forward.1} parent=1 // pred_fallthru
      _
    %4807 = vsyncpa [#allocation3], 1

</llo_original>
